<compile_context>
chip_gen: v6e
topology: v6e:2x2x1
jax: 0.10.0
libtpu: 0.0.40
codegen_flags: <defaults>
</compile_context>

<pallas_src>
import math
import functools

import jax
import jax.numpy as jnp
from jax.experimental import pallas as pl
from jax.experimental.pallas import tpu as pltpu

CONFIG = dict(vocab_size=128, contex_size=16, n_embd=32, n_head=4, n_layer=2)

_PER_LAYER = 14  # (ln1w, ln1b, wq, bq, wk, bk, wv, bv, ln2w, ln2b, w1, b1, w2, b2)


def _full_spec(shape):
    """BlockSpec covering the whole (2-D) array under grid=(1,)."""
    nd = len(shape)
    return pl.BlockSpec(shape, lambda i, _nd=nd: (0,) * _nd)


def _layernorm(x, w, b, eps=1e-5):
    # One-pass LN: mean and mean-of-squares from a single sweep over the lane
    # axis; var = E[x^2] - mu^2.  Saves one full read + lane reduce per call.
    mu = jnp.mean(x, axis=-1, keepdims=True)
    ms = jnp.mean(x * x, axis=-1, keepdims=True)
    var = ms - mu * mu
    return (x - mu) * jax.lax.rsqrt(var + eps) * w + b


# ----------------------------------------------------------------------------
# One fused kernel: all blocks + lm head + mean cross entropy
# ----------------------------------------------------------------------------
def fused_forward_kernel(*refs, B, T, C, n_head, n_layer):
    # refs = [x, 14*n_layer block params, lm_w, targets, logits_out, loss_out]
    x_ref = refs[0]
    layer_refs = refs[1:1 + n_layer * _PER_LAYER]
    lm_w_ref = refs[1 + n_layer * _PER_LAYER]
    tgt_ref = refs[2 + n_layer * _PER_LAYER]
    logits_ref = refs[3 + n_layer * _PER_LAYER]
    loss_ref = refs[4 + n_layer * _PER_LAYER]

    BT = B * T
    hd = C // n_head
    bf16 = jnp.bfloat16
    f32 = jnp.float32

    # Masks / biases built ONCE, shared by every layer & head (hoisted; JAX does
    # not CSE broadcast_in_dim so nothing broadcast-y lives inside the loops).
    lane = jax.lax.broadcasted_iota(jnp.int32, (1, 1, C), 2)
    head_masks = [((lane >= h * hd) & (lane < (h + 1) * hd)).astype(f32)
                  for h in range(n_head)]
    row = jax.lax.broadcasted_iota(jnp.int32, (1, T, T), 1)
    col = jax.lax.broadcasted_iota(jnp.int32, (1, T, T), 2)
    # Additive causal bias: 0 on/below diagonal, -1e30 above.  One vadd per
    # head instead of compare+select.  (-1e30 is finite -> safe under max-sub.)
    causal_bias = jnp.where(row >= col, 0.0, -1e30).astype(f32)   # (1, T, T)

    x = x_ref[...]                                        # (BT, C) f32

    for l in range(n_layer):                              # static unroll
        (ln1w, ln1b, wq, bq, wk, bk, wv, bv,
         ln2w, ln2b, w1, b1, w2, b2) = layer_refs[l * _PER_LAYER:(l + 1) * _PER_LAYER]

        # ---- attention branch: x = x + attn(LN1(x)) ----------------------
        h1 = _layernorm(x, ln1w[...], ln1b[...])          # f32
        h1b = h1.astype(bf16)
        # Wq/bq carry the folded 1/sqrt(hd) attention scale (done at init).
        q = jnp.dot(h1b, wq[...], preferred_element_type=f32) + bq[...]
        k = jnp.dot(h1b, wk[...], preferred_element_type=f32) + bk[...]
        v = jnp.dot(h1b, wv[...], preferred_element_type=f32) + bv[...]
        q3 = q.reshape(B, T, C)                           # leading-dim split only
        k3b = k.reshape(B, T, C).astype(bf16)
        v3 = v.reshape(B, T, C)

        y = jnp.zeros((B, T, C), f32)
        for hm in head_masks:                             # hm: (1,1,C) 0/1 mask
            # (q * mask_h) . k over full C  ==  q_h . k_h  (no lane slicing)
            qm = (q3 * hm).astype(bf16)
            s = jnp.einsum('bqc,bkc->bqk', qm, k3b,
                           preferred_element_type=f32)
            s = s + causal_bias                           # additive causal mask
            s = s - jnp.max(s, axis=-1, keepdims=True)
            p = jnp.exp(s)
            p = p * pl.reciprocal(jnp.sum(p, axis=-1, keepdims=True), approx=True)
            # p_h @ (v * mask_h): result already sits in head h's lanes,
            # so a plain add replaces the lane-axis concatenate.
            vm = (v3 * hm).astype(bf16)
            y = y + jnp.einsum('bqk,bkc->bqc', p.astype(bf16), vm,
                               preferred_element_type=f32)
        x = x + y.reshape(BT, C)

        # ---- FFN branch: x = x + FFN(LN2(x)) ------------------------------
        h2 = _layernorm(x, ln2w[...], ln2b[...])
        m = jnp.dot(h2.astype(bf16), w1[...], preferred_element_type=f32) + b1[...]
        # exact (erf) GELU, matching torch.nn.GELU() default
        # TODO(synk): switch to tanh-approx GELU (EUP slot) only if VALU ever
        # binds at scale and reference parity permits.
        m = 0.5 * m * (1.0 + jax.lax.erf(m * (1.0 / math.sqrt(2.0))))
        ff = jnp.dot(m.astype(bf16), w2[...], preferred_element_type=f32) + b2[...]
        x = x + ff

    # ---- LM head + mean cross entropy (ln_f output discarded, as in ref) ----
    V = lm_w_ref.shape[1]
    logits = jnp.dot(x.astype(bf16), lm_w_ref[...],
                     preferred_element_type=f32)          # (BT, V), V=128 lane-dense
    logits_ref[...] = logits

    tgt = tgt_ref[...]                                    # (BT, 1) int32
    mx = jnp.max(logits, axis=-1, keepdims=True)
    lse = jnp.log(jnp.sum(jnp.exp(logits - mx), axis=-1, keepdims=True)) + mx
    vocab_col = jax.lax.broadcasted_iota(jnp.int32, (BT, V), 1)
    onehot = (vocab_col == tgt).astype(f32)
    tgt_logit = jnp.sum(logits * onehot, axis=-1, keepdims=True)
    losses = lse - tgt_logit                              # (BT, 1)
    loss_ref[...] = jnp.mean(losses) * jnp.ones((1, 1), f32)


# ----------------------------------------------------------------------------
# Parameter init (deterministic, mirrors shapes from miniGPT.__init__)
# ----------------------------------------------------------------------------
def init_params(key, cfg):
    C, V, P, L = cfg['n_embd'], cfg['vocab_size'], cfg['contex_size'], cfg['n_layer']
    H = cfg['n_head']
    assert C % H == 0
    scale = 1.0 / math.sqrt(L * 2)                        # same rescale as reference
    attn_scale = 1.0 / math.sqrt(C // H)                  # folded into Wq / bq
    keys = jax.random.split(key, 3 + L)
    params = {
        'wte': jax.random.normal(keys[0], (V, C), jnp.float32) * 0.02,
        'wpe': jax.random.normal(keys[1], (P, C), jnp.float32) * 0.02,
        # lm head stored (in, out); bf16 operand for the MXU, f32 accumulate
        'lm_w': (jax.random.normal(keys[2], (C, V), jnp.float32) * 0.02).astype(jnp.bfloat16),
        'blocks': [],
    }
    for l in range(L):
        lk = jax.random.split(keys[3 + l], 6)
        # fused qkv weight is split here (outside the kernel) into lane-contiguous
        # per-projection matrices; the 1/sqrt(head_dim) attention score scale is
        # folded into the q projection (weight AND bias) at init time.
        wqkv = jax.random.normal(lk[0], (C, 3 * C), jnp.float32) * 0.02 * scale
        bqkv = jax.random.normal(lk[1], (1, 3 * C), jnp.float32) * 0.02
        wq, wk, wv = wqkv[:, 0 * C:1 * C], wqkv[:, 1 * C:2 * C], wqkv[:, 2 * C:3 * C]
        bq, bk, bv = bqkv[:, 0 * C:1 * C], bqkv[:, 1 * C:2 * C], bqkv[:, 2 * C:3 * C]
        wq = wq * attn_scale
        bq = bq * attn_scale
        block = (
            jnp.ones((1, C), jnp.float32),                # ln1 weight
            jnp.zeros((1, C), jnp.float32),               # ln1 bias
            wq.astype(jnp.bfloat16), bq,
            wk.astype(jnp.bfloat16), bk,
            wv.astype(jnp.bfloat16), bv,
            jnp.ones((1, C), jnp.float32),                # ln2 weight
            jnp.zeros((1, C), jnp.float32),               # ln2 bias
            (jax.random.normal(lk[2], (C, 4 * C), jnp.float32) * 0.02 * scale).astype(jnp.bfloat16),
            jax.random.normal(lk[3], (1, 4 * C), jnp.float32) * 0.02,
            (jax.random.normal(lk[4], (4 * C, C), jnp.float32) * 0.02 * scale).astype(jnp.bfloat16),
            jax.random.normal(lk[5], (1, C), jnp.float32) * 0.02,
        )
        params['blocks'].append(block)
    return params


# ----------------------------------------------------------------------------
# Forward: embedding gather in plain JAX, everything else in ONE pallas_call
# ----------------------------------------------------------------------------
def minigpt_forward(params, tokens, targets, cfg):
    B, T = tokens.shape
    C, V = cfg['n_embd'], cfg['vocab_size']
    BT = B * T

    # Token/position embedding gather kept as plain-JAX glue feeding the kernel.
    # TODO(synk): could be fused via PrefetchScalarGridSpec + pl.Element row
    # gathers, but the win at this size is negligible.
    tok = params['wte'][tokens]                           # (B, T, C)
    pos = params['wpe'][jnp.arange(T)]                    # (T, C)
    x2d = (tok + pos[None, :, :]).astype(jnp.float32).reshape(BT, C)

    flat_layer_params = [p for blk in params['blocks'] for p in blk]
    tgt2d = targets.reshape(BT, 1).astype(jnp.int32)

    inputs = [x2d, *flat_layer_params, params['lm_w'], tgt2d]
    in_specs = [_full_spec(a.shape) for a in inputs]

    kernel = functools.partial(fused_forward_kernel, B=B, T=T, C=C,
                               n_head=cfg['n_head'], n_layer=cfg['n_layer'])

    logits2d, loss = pl.pallas_call(
        kernel,
        grid=(1,),
        in_specs=in_specs,
        out_specs=(_full_spec((BT, V)), _full_spec((1, 1))),
        out_shape=(jax.ShapeDtypeStruct((BT, V), jnp.float32),
                   jax.ShapeDtypeStruct((1, 1), jnp.float32)),
        compiler_params=pltpu.CompilerParams(dimension_semantics=("arbitrary",)),
    )(*inputs)
    return loss[0, 0], logits2d.reshape(B, T, V)


if __name__ == "__main__":
    cfg = CONFIG
    key = jax.random.PRNGKey(0)
    pk, xk, tk = jax.random.split(key, 3)
    params = init_params(pk, cfg)

    B, T = 2, 8
    tokens = jax.random.randint(xk, (B, T), 0, cfg['vocab_size'], dtype=jnp.int32)
    targets = jax.random.randint(tk, (B, T), 0, cfg['vocab_size'], dtype=jnp.int32)

    loss, logits = minigpt_forward(params, tokens, targets, cfg)
    jax.block_until_ready((loss, logits))
    print("KERNEL_OK")
</pallas_src>

<mosaic_0001>
module attributes {stable_mosaic.version = 11 : i64} {
  func.func @fused_forward_kernel(%arg0: i32, %arg1: memref<16x32xf32, #tpu.memory_space<vmem>>, %arg2: memref<1x32xf32, #tpu.memory_space<vmem>>, %arg3: memref<1x32xf32, #tpu.memory_space<vmem>>, %arg4: memref<32x32xbf16, #tpu.memory_space<vmem>>, %arg5: memref<1x32xf32, #tpu.memory_space<vmem>>, %arg6: memref<32x32xbf16, #tpu.memory_space<vmem>>, %arg7: memref<1x32xf32, #tpu.memory_space<vmem>>, %arg8: memref<32x32xbf16, #tpu.memory_space<vmem>>, %arg9: memref<1x32xf32, #tpu.memory_space<vmem>>, %arg10: memref<1x32xf32, #tpu.memory_space<vmem>>, %arg11: memref<1x32xf32, #tpu.memory_space<vmem>>, %arg12: memref<32x128xbf16, #tpu.memory_space<vmem>>, %arg13: memref<1x128xf32, #tpu.memory_space<vmem>>, %arg14: memref<128x32xbf16, #tpu.memory_space<vmem>>, %arg15: memref<1x32xf32, #tpu.memory_space<vmem>>, %arg16: memref<1x32xf32, #tpu.memory_space<vmem>>, %arg17: memref<1x32xf32, #tpu.memory_space<vmem>>, %arg18: memref<32x32xbf16, #tpu.memory_space<vmem>>, %arg19: memref<1x32xf32, #tpu.memory_space<vmem>>, %arg20: memref<32x32xbf16, #tpu.memory_space<vmem>>, %arg21: memref<1x32xf32, #tpu.memory_space<vmem>>, %arg22: memref<32x32xbf16, #tpu.memory_space<vmem>>, %arg23: memref<1x32xf32, #tpu.memory_space<vmem>>, %arg24: memref<1x32xf32, #tpu.memory_space<vmem>>, %arg25: memref<1x32xf32, #tpu.memory_space<vmem>>, %arg26: memref<32x128xbf16, #tpu.memory_space<vmem>>, %arg27: memref<1x128xf32, #tpu.memory_space<vmem>>, %arg28: memref<128x32xbf16, #tpu.memory_space<vmem>>, %arg29: memref<1x32xf32, #tpu.memory_space<vmem>>, %arg30: memref<32x128xbf16, #tpu.memory_space<vmem>>, %arg31: memref<16x1xi32, #tpu.memory_space<vmem>>, %arg32: memref<16x128xf32, #tpu.memory_space<vmem>>, %arg33: memref<1x1xf32, #tpu.memory_space<vmem>>) attributes {dimension_semantics = [#tpu.dimension_semantics<arbitrary>], iteration_bounds = array<i64: 1>, scalar_prefetch = 0 : i64, scratch_operands = 0 : i64, tpu.core_type = #tpu.core_type<tc>, window_params = [{pipeline_mode = #tpu.pipeline_mode<synchronous>, transform_indices = @transform_0, window_bounds = array<i64: 16, 32>}, {pipeline_mode = #tpu.pipeline_mode<synchronous>, transform_indices = @transform_1, window_bounds = array<i64: 1, 32>}, {pipeline_mode = #tpu.pipeline_mode<synchronous>, transform_indices = @transform_2, window_bounds = array<i64: 1, 32>}, {pipeline_mode = #tpu.pipeline_mode<synchronous>, transform_indices = @transform_3, window_bounds = array<i64: 32, 32>}, {pipeline_mode = #tpu.pipeline_mode<synchronous>, transform_indices = @transform_4, window_bounds = array<i64: 1, 32>}, {pipeline_mode = #tpu.pipeline_mode<synchronous>, transform_indices = @transform_5, window_bounds = array<i64: 32, 32>}, {pipeline_mode = #tpu.pipeline_mode<synchronous>, transform_indices = @transform_6, window_bounds = array<i64: 1, 32>}, {pipeline_mode = #tpu.pipeline_mode<synchronous>, transform_indices = @transform_7, window_bounds = array<i64: 32, 32>}, {pipeline_mode = #tpu.pipeline_mode<synchronous>, transform_indices = @transform_8, window_bounds = array<i64: 1, 32>}, {pipeline_mode = #tpu.pipeline_mode<synchronous>, transform_indices = @transform_9, window_bounds = array<i64: 1, 32>}, {pipeline_mode = #tpu.pipeline_mode<synchronous>, transform_indices = @transform_10, window_bounds = array<i64: 1, 32>}, {pipeline_mode = #tpu.pipeline_mode<synchronous>, transform_indices = @transform_11, window_bounds = array<i64: 32, 128>}, {pipeline_mode = #tpu.pipeline_mode<synchronous>, transform_indices = @transform_12, window_bounds = array<i64: 1, 128>}, {pipeline_mode = #tpu.pipeline_mode<synchronous>, transform_indices = @transform_13, window_bounds = array<i64: 128, 32>}, {pipeline_mode = #tpu.pipeline_mode<synchronous>, transform_indices = @transform_14, window_bounds = array<i64: 1, 32>}, {pipeline_mode = #tpu.pipeline_mode<synchronous>, transform_indices = @transform_15, window_bounds = array<i64: 1, 32>}, {pipeline_mode = #tpu.pipeline_mode<synchronous>, transform_indices = @transform_16, window_bounds = array<i64: 1, 32>}, {pipeline_mode = #tpu.pipeline_mode<synchronous>, transform_indices = @transform_17, window_bounds = array<i64: 32, 32>}, {pipeline_mode = #tpu.pipeline_mode<synchronous>, transform_indices = @transform_18, window_bounds = array<i64: 1, 32>}, {pipeline_mode = #tpu.pipeline_mode<synchronous>, transform_indices = @transform_19, window_bounds = array<i64: 32, 32>}, {pipeline_mode = #tpu.pipeline_mode<synchronous>, transform_indices = @transform_20, window_bounds = array<i64: 1, 32>}, {pipeline_mode = #tpu.pipeline_mode<synchronous>, transform_indices = @transform_21, window_bounds = array<i64: 32, 32>}, {pipeline_mode = #tpu.pipeline_mode<synchronous>, transform_indices = @transform_22, window_bounds = array<i64: 1, 32>}, {pipeline_mode = #tpu.pipeline_mode<synchronous>, transform_indices = @transform_23, window_bounds = array<i64: 1, 32>}, {pipeline_mode = #tpu.pipeline_mode<synchronous>, transform_indices = @transform_24, window_bounds = array<i64: 1, 32>}, {pipeline_mode = #tpu.pipeline_mode<synchronous>, transform_indices = @transform_25, window_bounds = array<i64: 32, 128>}, {pipeline_mode = #tpu.pipeline_mode<synchronous>, transform_indices = @transform_26, window_bounds = array<i64: 1, 128>}, {pipeline_mode = #tpu.pipeline_mode<synchronous>, transform_indices = @transform_27, window_bounds = array<i64: 128, 32>}, {pipeline_mode = #tpu.pipeline_mode<synchronous>, transform_indices = @transform_28, window_bounds = array<i64: 1, 32>}, {pipeline_mode = #tpu.pipeline_mode<synchronous>, transform_indices = @transform_29, window_bounds = array<i64: 32, 128>}, {pipeline_mode = #tpu.pipeline_mode<synchronous>, transform_indices = @transform_30, window_bounds = array<i64: 16, 1>}, {pipeline_mode = #tpu.pipeline_mode<synchronous>, transform_indices = @transform_31, window_bounds = array<i64: 16, 128>}, {pipeline_mode = #tpu.pipeline_mode<synchronous>, transform_indices = @transform_32, window_bounds = array<i64: 1, 1>}]} {
    %0 = tpu.iota {dimensions = array<i32: 2>} : vector<1x1x32xi32>
    %c0_i32 = arith.constant 0 : i32
    %1 = vector.broadcast %c0_i32 : i32 to vector<1x1x32xi32>
    %2 = arith.cmpi sge, %0, %1 : vector<1x1x32xi32>
    %c8_i32 = arith.constant 8 : i32
    %3 = vector.broadcast %c8_i32 : i32 to vector<1x1x32xi32>
    %4 = arith.cmpi slt, %0, %3 : vector<1x1x32xi32>
    %5 = arith.andi %2, %4 : vector<1x1x32xi1>
    %6 = arith.extui %5 : vector<1x1x32xi1> to vector<1x1x32xi32>
    %7 = arith.sitofp %6 : vector<1x1x32xi32> to vector<1x1x32xf32>
    %c8_i32_0 = arith.constant 8 : i32
    %8 = vector.broadcast %c8_i32_0 : i32 to vector<1x1x32xi32>
    %9 = arith.cmpi sge, %0, %8 : vector<1x1x32xi32>
    %c16_i32 = arith.constant 16 : i32
    %10 = vector.broadcast %c16_i32 : i32 to vector<1x1x32xi32>
    %11 = arith.cmpi slt, %0, %10 : vector<1x1x32xi32>
    %12 = arith.andi %9, %11 : vector<1x1x32xi1>
    %13 = arith.extui %12 : vector<1x1x32xi1> to vector<1x1x32xi32>
    %14 = arith.sitofp %13 : vector<1x1x32xi32> to vector<1x1x32xf32>
    %c16_i32_1 = arith.constant 16 : i32
    %15 = vector.broadcast %c16_i32_1 : i32 to vector<1x1x32xi32>
    %16 = arith.cmpi sge, %0, %15 : vector<1x1x32xi32>
    %c24_i32 = arith.constant 24 : i32
    %17 = vector.broadcast %c24_i32 : i32 to vector<1x1x32xi32>
    %18 = arith.cmpi slt, %0, %17 : vector<1x1x32xi32>
    %19 = arith.andi %16, %18 : vector<1x1x32xi1>
    %20 = arith.extui %19 : vector<1x1x32xi1> to vector<1x1x32xi32>
    %21 = arith.sitofp %20 : vector<1x1x32xi32> to vector<1x1x32xf32>
    %c24_i32_2 = arith.constant 24 : i32
    %22 = vector.broadcast %c24_i32_2 : i32 to vector<1x1x32xi32>
    %23 = arith.cmpi sge, %0, %22 : vector<1x1x32xi32>
    %c32_i32 = arith.constant 32 : i32
    %24 = vector.broadcast %c32_i32 : i32 to vector<1x1x32xi32>
    %25 = arith.cmpi slt, %0, %24 : vector<1x1x32xi32>
    %26 = arith.andi %23, %25 : vector<1x1x32xi1>
    %27 = arith.extui %26 : vector<1x1x32xi1> to vector<1x1x32xi32>
    %28 = arith.sitofp %27 : vector<1x1x32xi32> to vector<1x1x32xf32>
    %29 = tpu.iota {dimensions = array<i32: 1>} : vector<1x8x8xi32>
    %30 = tpu.iota {dimensions = array<i32: 2>} : vector<1x8x8xi32>
    %31 = arith.cmpi sge, %29, %30 : vector<1x8x8xi32>
    %cst = arith.constant 0.000000e+00 : f32
    %cst_3 = arith.constant -1.000000e+30 : f32
    %32 = vector.broadcast %cst : f32 to vector<1x8x8xf32>
    %33 = vector.broadcast %cst_3 : f32 to vector<1x8x8xf32>
    %34 = arith.select %31, %32, %33 : vector<1x8x8xi1>, vector<1x8x8xf32>
    %c0 = arith.constant 0 : index
    %c0_4 = arith.constant 0 : index
    %35 = vector.load %arg1[%c0, %c0_4] : memref<16x32xf32, #tpu.memory_space<vmem>>, vector<16x32xf32>
    %c0_5 = arith.constant 0 : index
    %c0_6 = arith.constant 0 : index
    %36 = vector.load %arg2[%c0_5, %c0_6] : memref<1x32xf32, #tpu.memory_space<vmem>>, vector<1x32xf32>
    %c0_7 = arith.constant 0 : index
    %c0_8 = arith.constant 0 : index
    %37 = vector.load %arg3[%c0_7, %c0_8] : memref<1x32xf32, #tpu.memory_space<vmem>>, vector<1x32xf32>
    %cst_9 = arith.constant dense<0.000000e+00> : vector<16xf32>
    %38 = vector.multi_reduction <add>, %35, %cst_9 [1] : vector<16x32xf32> to vector<16xf32>
    %39 = vector.shape_cast %38 : vector<16xf32> to vector<16x1xf32>
    %cst_10 = arith.constant 3.200000e+01 : f32
    %40 = vector.broadcast %cst_10 : f32 to vector<16x1xf32>
    %41 = arith.divf %39, %40 : vector<16x1xf32>
    %42 = arith.mulf %35, %35 : vector<16x32xf32>
    %cst_11 = arith.constant dense<0.000000e+00> : vector<16xf32>
    %43 = vector.multi_reduction <add>, %42, %cst_11 [1] : vector<16x32xf32> to vector<16xf32>
    %44 = vector.shape_cast %43 : vector<16xf32> to vector<16x1xf32>
    %cst_12 = arith.constant 3.200000e+01 : f32
    %45 = vector.broadcast %cst_12 : f32 to vector<16x1xf32>
    %46 = arith.divf %44, %45 : vector<16x1xf32>
    %47 = arith.mulf %41, %41 : vector<16x1xf32>
    %48 = arith.subf %46, %47 : vector<16x1xf32>
    %49 = vector.broadcast %41 : vector<16x1xf32> to vector<16x32xf32>
    %50 = arith.subf %35, %49 : vector<16x32xf32>
    %cst_13 = arith.constant 9.99999974E-6 : f32
    %51 = vector.broadcast %cst_13 : f32 to vector<16x1xf32>
    %52 = arith.addf %48, %51 : vector<16x1xf32>
    %53 = math.rsqrt %52 : vector<16x1xf32>
    %54 = vector.broadcast %53 : vector<16x1xf32> to vector<16x32xf32>
    %55 = arith.mulf %50, %54 : vector<16x32xf32>
    %56 = vector.broadcast %36 : vector<1x32xf32> to vector<16x32xf32>
    %57 = arith.mulf %55, %56 : vector<16x32xf32>
    %58 = vector.broadcast %37 : vector<1x32xf32> to vector<16x32xf32>
    %59 = arith.addf %57, %58 : vector<16x32xf32>
    %60 = arith.truncf %59 : vector<16x32xf32> to vector<16x32xbf16>
    %c0_14 = arith.constant 0 : index
    %c0_15 = arith.constant 0 : index
    %61 = vector.load %arg4[%c0_14, %c0_15] : memref<32x32xbf16, #tpu.memory_space<vmem>>, vector<32x32xbf16>
    %cst_16 = arith.constant dense<0.000000e+00> : vector<16x32xf32>
    %62 = tpu.matmul %60, %61, %cst_16 {dimension_numbers = #tpu.dot_dimension_numbers<[1], [0], [0], [1], [0, 0, 1, 1], [], []>} : vector<16x32xbf16>, vector<32x32xbf16>, vector<16x32xf32> -> vector<16x32xf32>
    %c0_17 = arith.constant 0 : index
    %c0_18 = arith.constant 0 : index
    %63 = vector.load %arg5[%c0_17, %c0_18] : memref<1x32xf32, #tpu.memory_space<vmem>>, vector<1x32xf32>
    %64 = vector.broadcast %63 : vector<1x32xf32> to vector<16x32xf32>
    %65 = arith.addf %62, %64 : vector<16x32xf32>
    %c0_19 = arith.constant 0 : index
    %c0_20 = arith.constant 0 : index
    %66 = vector.load %arg6[%c0_19, %c0_20] : memref<32x32xbf16, #tpu.memory_space<vmem>>, vector<32x32xbf16>
    %cst_21 = arith.constant dense<0.000000e+00> : vector<16x32xf32>
    %67 = tpu.matmul %60, %66, %cst_21 {dimension_numbers = #tpu.dot_dimension_numbers<[1], [0], [0], [1], [0, 0, 1, 1], [], []>} : vector<16x32xbf16>, vector<32x32xbf16>, vector<16x32xf32> -> vector<16x32xf32>
    %c0_22 = arith.constant 0 : index
    %c0_23 = arith.constant 0 : index
    %68 = vector.load %arg7[%c0_22, %c0_23] : memref<1x32xf32, #tpu.memory_space<vmem>>, vector<1x32xf32>
    %69 = vector.broadcast %68 : vector<1x32xf32> to vector<16x32xf32>
    %70 = arith.addf %67, %69 : vector<16x32xf32>
    %c0_24 = arith.constant 0 : index
    %c0_25 = arith.constant 0 : index
    %71 = vector.load %arg8[%c0_24, %c0_25] : memref<32x32xbf16, #tpu.memory_space<vmem>>, vector<32x32xbf16>
    %cst_26 = arith.constant dense<0.000000e+00> : vector<16x32xf32>
    %72 = tpu.matmul %60, %71, %cst_26 {dimension_numbers = #tpu.dot_dimension_numbers<[1], [0], [0], [1], [0, 0, 1, 1], [], []>} : vector<16x32xbf16>, vector<32x32xbf16>, vector<16x32xf32> -> vector<16x32xf32>
    %c0_27 = arith.constant 0 : index
    %c0_28 = arith.constant 0 : index
    %73 = vector.load %arg9[%c0_27, %c0_28] : memref<1x32xf32, #tpu.memory_space<vmem>>, vector<1x32xf32>
    %74 = vector.broadcast %73 : vector<1x32xf32> to vector<16x32xf32>
    %75 = arith.addf %72, %74 : vector<16x32xf32>
    %76 = vector.shape_cast %65 : vector<16x32xf32> to vector<2x8x32xf32>
    %77 = vector.shape_cast %70 : vector<16x32xf32> to vector<2x8x32xf32>
    %78 = arith.truncf %77 : vector<2x8x32xf32> to vector<2x8x32xbf16>
    %79 = vector.shape_cast %75 : vector<16x32xf32> to vector<2x8x32xf32>
    %cst_29 = arith.constant 0.000000e+00 : f32
    %80 = vector.broadcast %cst_29 : f32 to vector<2x8x32xf32>
    %81 = vector.broadcast %7 : vector<1x1x32xf32> to vector<2x8x32xf32>
    %82 = arith.mulf %76, %81 : vector<2x8x32xf32>
    %83 = arith.truncf %82 : vector<2x8x32xf32> to vector<2x8x32xbf16>
    "tpu.trace_start"() <{level = 10 : i32, message = "bqc,bkc->bqk"}> : () -> ()
    %cst_30 = arith.constant dense<0.000000e+00> : vector<2x8x8xf32>
    %84 = tpu.matmul %83, %78, %cst_30 {dimension_numbers = #tpu.dot_dimension_numbers<[2], [2], [1], [1], [0, 0, 0, 1, 1, 1], [0], [0]>} : vector<2x8x32xbf16>, vector<2x8x32xbf16>, vector<2x8x8xf32> -> vector<2x8x8xf32>
    "tpu.trace_stop"() : () -> ()
    %85 = vector.broadcast %34 : vector<1x8x8xf32> to vector<2x8x8xf32>
    %86 = arith.addf %84, %85 : vector<2x8x8xf32>
    %cst_31 = arith.constant dense<0xFF800000> : vector<2x8xf32>
    %87 = vector.multi_reduction <maximumf>, %86, %cst_31 [2] : vector<2x8x8xf32> to vector<2x8xf32>
    %88 = vector.shape_cast %87 : vector<2x8xf32> to vector<2x8x1xf32>
    %89 = vector.broadcast %88 : vector<2x8x1xf32> to vector<2x8x8xf32>
    %90 = arith.subf %86, %89 : vector<2x8x8xf32>
    %91 = math.exp %90 : vector<2x8x8xf32>
    %cst_32 = arith.constant dense<0.000000e+00> : vector<2x8xf32>
    %92 = vector.multi_reduction <add>, %91, %cst_32 [2] : vector<2x8x8xf32> to vector<2x8xf32>
    %93 = vector.shape_cast %92 : vector<2x8xf32> to vector<2x8x1xf32>
    %94 = tpu.reciprocal %93 {approx = true} : vector<2x8x1xf32> -> vector<2x8x1xf32>
    %95 = vector.broadcast %94 : vector<2x8x1xf32> to vector<2x8x8xf32>
    %96 = arith.mulf %91, %95 : vector<2x8x8xf32>
    %97 = vector.broadcast %7 : vector<1x1x32xf32> to vector<2x8x32xf32>
    %98 = arith.mulf %79, %97 : vector<2x8x32xf32>
    %99 = arith.truncf %98 : vector<2x8x32xf32> to vector<2x8x32xbf16>
    %100 = arith.truncf %96 : vector<2x8x8xf32> to vector<2x8x8xbf16>
    "tpu.trace_start"() <{level = 10 : i32, message = "bqk,bkc->bqc"}> : () -> ()
    %cst_33 = arith.constant dense<0.000000e+00> : vector<2x8x32xf32>
    %101 = tpu.matmul %100, %99, %cst_33 {dimension_numbers = #tpu.dot_dimension_numbers<[2], [1], [1], [2], [0, 0, 0, 1, 1, 2], [0], [0]>} : vector<2x8x8xbf16>, vector<2x8x32xbf16>, vector<2x8x32xf32> -> vector<2x8x32xf32>
    "tpu.trace_stop"() : () -> ()
    %102 = arith.addf %80, %101 : vector<2x8x32xf32>
    %103 = vector.broadcast %14 : vector<1x1x32xf32> to vector<2x8x32xf32>
    %104 = arith.mulf %76, %103 : vector<2x8x32xf32>
    %105 = arith.truncf %104 : vector<2x8x32xf32> to vector<2x8x32xbf16>
    "tpu.trace_start"() <{level = 10 : i32, message = "bqc,bkc->bqk"}> : () -> ()
    %cst_34 = arith.constant dense<0.000000e+00> : vector<2x8x8xf32>
    %106 = tpu.matmul %105, %78, %cst_34 {dimension_numbers = #tpu.dot_dimension_numbers<[2], [2], [1], [1], [0, 0, 0, 1, 1, 1], [0], [0]>} : vector<2x8x32xbf16>, vector<2x8x32xbf16>, vector<2x8x8xf32> -> vector<2x8x8xf32>
    "tpu.trace_stop"() : () -> ()
    %107 = vector.broadcast %34 : vector<1x8x8xf32> to vector<2x8x8xf32>
    %108 = arith.addf %106, %107 : vector<2x8x8xf32>
    %cst_35 = arith.constant dense<0xFF800000> : vector<2x8xf32>
    %109 = vector.multi_reduction <maximumf>, %108, %cst_35 [2] : vector<2x8x8xf32> to vector<2x8xf32>
    %110 = vector.shape_cast %109 : vector<2x8xf32> to vector<2x8x1xf32>
    %111 = vector.broadcast %110 : vector<2x8x1xf32> to vector<2x8x8xf32>
    %112 = arith.subf %108, %111 : vector<2x8x8xf32>
    %113 = math.exp %112 : vector<2x8x8xf32>
    %cst_36 = arith.constant dense<0.000000e+00> : vector<2x8xf32>
    %114 = vector.multi_reduction <add>, %113, %cst_36 [2] : vector<2x8x8xf32> to vector<2x8xf32>
    %115 = vector.shape_cast %114 : vector<2x8xf32> to vector<2x8x1xf32>
    %116 = tpu.reciprocal %115 {approx = true} : vector<2x8x1xf32> -> vector<2x8x1xf32>
    %117 = vector.broadcast %116 : vector<2x8x1xf32> to vector<2x8x8xf32>
    %118 = arith.mulf %113, %117 : vector<2x8x8xf32>
    %119 = vector.broadcast %14 : vector<1x1x32xf32> to vector<2x8x32xf32>
    %120 = arith.mulf %79, %119 : vector<2x8x32xf32>
    %121 = arith.truncf %120 : vector<2x8x32xf32> to vector<2x8x32xbf16>
    %122 = arith.truncf %118 : vector<2x8x8xf32> to vector<2x8x8xbf16>
    "tpu.trace_start"() <{level = 10 : i32, message = "bqk,bkc->bqc"}> : () -> ()
    %cst_37 = arith.constant dense<0.000000e+00> : vector<2x8x32xf32>
    %123 = tpu.matmul %122, %121, %cst_37 {dimension_numbers = #tpu.dot_dimension_numbers<[2], [1], [1], [2], [0, 0, 0, 1, 1, 2], [0], [0]>} : vector<2x8x8xbf16>, vector<2x8x32xbf16>, vector<2x8x32xf32> -> vector<2x8x32xf32>
    "tpu.trace_stop"() : () -> ()
    %124 = arith.addf %102, %123 : vector<2x8x32xf32>
    %125 = vector.broadcast %21 : vector<1x1x32xf32> to vector<2x8x32xf32>
    %126 = arith.mulf %76, %125 : vector<2x8x32xf32>
    %127 = arith.truncf %126 : vector<2x8x32xf32> to vector<2x8x32xbf16>
    "tpu.trace_start"() <{level = 10 : i32, message = "bqc,bkc->bqk"}> : () -> ()
    %cst_38 = arith.constant dense<0.000000e+00> : vector<2x8x8xf32>
    %128 = tpu.matmul %127, %78, %cst_38 {dimension_numbers = #tpu.dot_dimension_numbers<[2], [2], [1], [1], [0, 0, 0, 1, 1, 1], [0], [0]>} : vector<2x8x32xbf16>, vector<2x8x32xbf16>, vector<2x8x8xf32> -> vector<2x8x8xf32>
    "tpu.trace_stop"() : () -> ()
    %129 = vector.broadcast %34 : vector<1x8x8xf32> to vector<2x8x8xf32>
    %130 = arith.addf %128, %129 : vector<2x8x8xf32>
    %cst_39 = arith.constant dense<0xFF800000> : vector<2x8xf32>
    %131 = vector.multi_reduction <maximumf>, %130, %cst_39 [2] : vector<2x8x8xf32> to vector<2x8xf32>
    %132 = vector.shape_cast %131 : vector<2x8xf32> to vector<2x8x1xf32>
    %133 = vector.broadcast %132 : vector<2x8x1xf32> to vector<2x8x8xf32>
    %134 = arith.subf %130, %133 : vector<2x8x8xf32>
    %135 = math.exp %134 : vector<2x8x8xf32>
    %cst_40 = arith.constant dense<0.000000e+00> : vector<2x8xf32>
    %136 = vector.multi_reduction <add>, %135, %cst_40 [2] : vector<2x8x8xf32> to vector<2x8xf32>
    %137 = vector.shape_cast %136 : vector<2x8xf32> to vector<2x8x1xf32>
    %138 = tpu.reciprocal %137 {approx = true} : vector<2x8x1xf32> -> vector<2x8x1xf32>
    %139 = vector.broadcast %138 : vector<2x8x1xf32> to vector<2x8x8xf32>
    %140 = arith.mulf %135, %139 : vector<2x8x8xf32>
    %141 = vector.broadcast %21 : vector<1x1x32xf32> to vector<2x8x32xf32>
    %142 = arith.mulf %79, %141 : vector<2x8x32xf32>
    %143 = arith.truncf %142 : vector<2x8x32xf32> to vector<2x8x32xbf16>
    %144 = arith.truncf %140 : vector<2x8x8xf32> to vector<2x8x8xbf16>
    "tpu.trace_start"() <{level = 10 : i32, message = "bqk,bkc->bqc"}> : () -> ()
    %cst_41 = arith.constant dense<0.000000e+00> : vector<2x8x32xf32>
    %145 = tpu.matmul %144, %143, %cst_41 {dimension_numbers = #tpu.dot_dimension_numbers<[2], [1], [1], [2], [0, 0, 0, 1, 1, 2], [0], [0]>} : vector<2x8x8xbf16>, vector<2x8x32xbf16>, vector<2x8x32xf32> -> vector<2x8x32xf32>
    "tpu.trace_stop"() : () -> ()
    %146 = arith.addf %124, %145 : vector<2x8x32xf32>
    %147 = vector.broadcast %28 : vector<1x1x32xf32> to vector<2x8x32xf32>
    %148 = arith.mulf %76, %147 : vector<2x8x32xf32>
    %149 = arith.truncf %148 : vector<2x8x32xf32> to vector<2x8x32xbf16>
    "tpu.trace_start"() <{level = 10 : i32, message = "bqc,bkc->bqk"}> : () -> ()
    %cst_42 = arith.constant dense<0.000000e+00> : vector<2x8x8xf32>
    %150 = tpu.matmul %149, %78, %cst_42 {dimension_numbers = #tpu.dot_dimension_numbers<[2], [2], [1], [1], [0, 0, 0, 1, 1, 1], [0], [0]>} : vector<2x8x32xbf16>, vector<2x8x32xbf16>, vector<2x8x8xf32> -> vector<2x8x8xf32>
    "tpu.trace_stop"() : () -> ()
    %151 = vector.broadcast %34 : vector<1x8x8xf32> to vector<2x8x8xf32>
    %152 = arith.addf %150, %151 : vector<2x8x8xf32>
    %cst_43 = arith.constant dense<0xFF800000> : vector<2x8xf32>
    %153 = vector.multi_reduction <maximumf>, %152, %cst_43 [2] : vector<2x8x8xf32> to vector<2x8xf32>
    %154 = vector.shape_cast %153 : vector<2x8xf32> to vector<2x8x1xf32>
    %155 = vector.broadcast %154 : vector<2x8x1xf32> to vector<2x8x8xf32>
    %156 = arith.subf %152, %155 : vector<2x8x8xf32>
    %157 = math.exp %156 : vector<2x8x8xf32>
    %cst_44 = arith.constant dense<0.000000e+00> : vector<2x8xf32>
    %158 = vector.multi_reduction <add>, %157, %cst_44 [2] : vector<2x8x8xf32> to vector<2x8xf32>
    %159 = vector.shape_cast %158 : vector<2x8xf32> to vector<2x8x1xf32>
    %160 = tpu.reciprocal %159 {approx = true} : vector<2x8x1xf32> -> vector<2x8x1xf32>
    %161 = vector.broadcast %160 : vector<2x8x1xf32> to vector<2x8x8xf32>
    %162 = arith.mulf %157, %161 : vector<2x8x8xf32>
    %163 = vector.broadcast %28 : vector<1x1x32xf32> to vector<2x8x32xf32>
    %164 = arith.mulf %79, %163 : vector<2x8x32xf32>
    %165 = arith.truncf %164 : vector<2x8x32xf32> to vector<2x8x32xbf16>
    %166 = arith.truncf %162 : vector<2x8x8xf32> to vector<2x8x8xbf16>
    "tpu.trace_start"() <{level = 10 : i32, message = "bqk,bkc->bqc"}> : () -> ()
    %cst_45 = arith.constant dense<0.000000e+00> : vector<2x8x32xf32>
    %167 = tpu.matmul %166, %165, %cst_45 {dimension_numbers = #tpu.dot_dimension_numbers<[2], [1], [1], [2], [0, 0, 0, 1, 1, 2], [0], [0]>} : vector<2x8x8xbf16>, vector<2x8x32xbf16>, vector<2x8x32xf32> -> vector<2x8x32xf32>
    "tpu.trace_stop"() : () -> ()
    %168 = arith.addf %146, %167 : vector<2x8x32xf32>
    %169 = vector.shape_cast %168 : vector<2x8x32xf32> to vector<16x32xf32>
    %170 = arith.addf %35, %169 : vector<16x32xf32>
    %c0_46 = arith.constant 0 : index
    %c0_47 = arith.constant 0 : index
    %171 = vector.load %arg10[%c0_46, %c0_47] : memref<1x32xf32, #tpu.memory_space<vmem>>, vector<1x32xf32>
    %c0_48 = arith.constant 0 : index
    %c0_49 = arith.constant 0 : index
    %172 = vector.load %arg11[%c0_48, %c0_49] : memref<1x32xf32, #tpu.memory_space<vmem>>, vector<1x32xf32>
    %cst_50 = arith.constant dense<0.000000e+00> : vector<16xf32>
    %173 = vector.multi_reduction <add>, %170, %cst_50 [1] : vector<16x32xf32> to vector<16xf32>
    %174 = vector.shape_cast %173 : vector<16xf32> to vector<16x1xf32>
    %cst_51 = arith.constant 3.200000e+01 : f32
    %175 = vector.broadcast %cst_51 : f32 to vector<16x1xf32>
    %176 = arith.divf %174, %175 : vector<16x1xf32>
    %177 = arith.mulf %170, %170 : vector<16x32xf32>
    %cst_52 = arith.constant dense<0.000000e+00> : vector<16xf32>
    %178 = vector.multi_reduction <add>, %177, %cst_52 [1] : vector<16x32xf32> to vector<16xf32>
    %179 = vector.shape_cast %178 : vector<16xf32> to vector<16x1xf32>
    %cst_53 = arith.constant 3.200000e+01 : f32
    %180 = vector.broadcast %cst_53 : f32 to vector<16x1xf32>
    %181 = arith.divf %179, %180 : vector<16x1xf32>
    %182 = arith.mulf %176, %176 : vector<16x1xf32>
    %183 = arith.subf %181, %182 : vector<16x1xf32>
    %184 = vector.broadcast %176 : vector<16x1xf32> to vector<16x32xf32>
    %185 = arith.subf %170, %184 : vector<16x32xf32>
    %cst_54 = arith.constant 9.99999974E-6 : f32
    %186 = vector.broadcast %cst_54 : f32 to vector<16x1xf32>
    %187 = arith.addf %183, %186 : vector<16x1xf32>
    %188 = math.rsqrt %187 : vector<16x1xf32>
    %189 = vector.broadcast %188 : vector<16x1xf32> to vector<16x32xf32>
    %190 = arith.mulf %185, %189 : vector<16x32xf32>
    %191 = vector.broadcast %171 : vector<1x32xf32> to vector<16x32xf32>
    %192 = arith.mulf %190, %191 : vector<16x32xf32>
    %193 = vector.broadcast %172 : vector<1x32xf32> to vector<16x32xf32>
    %194 = arith.addf %192, %193 : vector<16x32xf32>
    %195 = arith.truncf %194 : vector<16x32xf32> to vector<16x32xbf16>
    %c0_55 = arith.constant 0 : index
    %c0_56 = arith.constant 0 : index
    %196 = vector.load %arg12[%c0_55, %c0_56] : memref<32x128xbf16, #tpu.memory_space<vmem>>, vector<32x128xbf16>
    %cst_57 = arith.constant dense<0.000000e+00> : vector<16x128xf32>
    %197 = tpu.matmul %195, %196, %cst_57 {dimension_numbers = #tpu.dot_dimension_numbers<[1], [0], [0], [1], [0, 0, 1, 1], [], []>} : vector<16x32xbf16>, vector<32x128xbf16>, vector<16x128xf32> -> vector<16x128xf32>
    %c0_58 = arith.constant 0 : index
    %c0_59 = arith.constant 0 : index
    %198 = vector.load %arg13[%c0_58, %c0_59] : memref<1x128xf32, #tpu.memory_space<vmem>>, vector<1x128xf32>
    %199 = vector.broadcast %198 : vector<1x128xf32> to vector<16x128xf32>
    %200 = arith.addf %197, %199 : vector<16x128xf32>
    %cst_60 = arith.constant 5.000000e-01 : f32
    %201 = vector.broadcast %cst_60 : f32 to vector<16x128xf32>
    %202 = arith.mulf %201, %200 : vector<16x128xf32>
    %cst_61 = arith.constant 0.707106769 : f32
    %203 = vector.broadcast %cst_61 : f32 to vector<16x128xf32>
    %204 = arith.mulf %200, %203 : vector<16x128xf32>
    %205 = math.erf %204 : vector<16x128xf32>
    %cst_62 = arith.constant 1.000000e+00 : f32
    %206 = vector.broadcast %cst_62 : f32 to vector<16x128xf32>
    %207 = arith.addf %206, %205 : vector<16x128xf32>
    %208 = arith.mulf %202, %207 : vector<16x128xf32>
    %209 = arith.truncf %208 : vector<16x128xf32> to vector<16x128xbf16>
    %c0_63 = arith.constant 0 : index
    %c0_64 = arith.constant 0 : index
    %210 = vector.load %arg14[%c0_63, %c0_64] : memref<128x32xbf16, #tpu.memory_space<vmem>>, vector<128x32xbf16>
    %cst_65 = arith.constant dense<0.000000e+00> : vector<16x32xf32>
    %211 = tpu.matmul %209, %210, %cst_65 {dimension_numbers = #tpu.dot_dimension_numbers<[1], [0], [0], [1], [0, 0, 1, 1], [], []>} : vector<16x128xbf16>, vector<128x32xbf16>, vector<16x32xf32> -> vector<16x32xf32>
    %c0_66 = arith.constant 0 : index
    %c0_67 = arith.constant 0 : index
    %212 = vector.load %arg15[%c0_66, %c0_67] : memref<1x32xf32, #tpu.memory_space<vmem>>, vector<1x32xf32>
    %213 = vector.broadcast %212 : vector<1x32xf32> to vector<16x32xf32>
    %214 = arith.addf %211, %213 : vector<16x32xf32>
    %215 = arith.addf %170, %214 : vector<16x32xf32>
    %c0_68 = arith.constant 0 : index
    %c0_69 = arith.constant 0 : index
    %216 = vector.load %arg16[%c0_68, %c0_69] : memref<1x32xf32, #tpu.memory_space<vmem>>, vector<1x32xf32>
    %c0_70 = arith.constant 0 : index
    %c0_71 = arith.constant 0 : index
    %217 = vector.load %arg17[%c0_70, %c0_71] : memref<1x32xf32, #tpu.memory_space<vmem>>, vector<1x32xf32>
    %cst_72 = arith.constant dense<0.000000e+00> : vector<16xf32>
    %218 = vector.multi_reduction <add>, %215, %cst_72 [1] : vector<16x32xf32> to vector<16xf32>
    %219 = vector.shape_cast %218 : vector<16xf32> to vector<16x1xf32>
    %cst_73 = arith.constant 3.200000e+01 : f32
    %220 = vector.broadcast %cst_73 : f32 to vector<16x1xf32>
    %221 = arith.divf %219, %220 : vector<16x1xf32>
    %222 = arith.mulf %215, %215 : vector<16x32xf32>
    %cst_74 = arith.constant dense<0.000000e+00> : vector<16xf32>
    %223 = vector.multi_reduction <add>, %222, %cst_74 [1] : vector<16x32xf32> to vector<16xf32>
    %224 = vector.shape_cast %223 : vector<16xf32> to vector<16x1xf32>
    %cst_75 = arith.constant 3.200000e+01 : f32
    %225 = vector.broadcast %cst_75 : f32 to vector<16x1xf32>
    %226 = arith.divf %224, %225 : vector<16x1xf32>
    %227 = arith.mulf %221, %221 : vector<16x1xf32>
    %228 = arith.subf %226, %227 : vector<16x1xf32>
    %229 = vector.broadcast %221 : vector<16x1xf32> to vector<16x32xf32>
    %230 = arith.subf %215, %229 : vector<16x32xf32>
    %cst_76 = arith.constant 9.99999974E-6 : f32
    %231 = vector.broadcast %cst_76 : f32 to vector<16x1xf32>
    %232 = arith.addf %228, %231 : vector<16x1xf32>
    %233 = math.rsqrt %232 : vector<16x1xf32>
    %234 = vector.broadcast %233 : vector<16x1xf32> to vector<16x32xf32>
    %235 = arith.mulf %230, %234 : vector<16x32xf32>
    %236 = vector.broadcast %216 : vector<1x32xf32> to vector<16x32xf32>
    %237 = arith.mulf %235, %236 : vector<16x32xf32>
    %238 = vector.broadcast %217 : vector<1x32xf32> to vector<16x32xf32>
    %239 = arith.addf %237, %238 : vector<16x32xf32>
    %240 = arith.truncf %239 : vector<16x32xf32> to vector<16x32xbf16>
    %c0_77 = arith.constant 0 : index
    %c0_78 = arith.constant 0 : index
    %241 = vector.load %arg18[%c0_77, %c0_78] : memref<32x32xbf16, #tpu.memory_space<vmem>>, vector<32x32xbf16>
    %cst_79 = arith.constant dense<0.000000e+00> : vector<16x32xf32>
    %242 = tpu.matmul %240, %241, %cst_79 {dimension_numbers = #tpu.dot_dimension_numbers<[1], [0], [0], [1], [0, 0, 1, 1], [], []>} : vector<16x32xbf16>, vector<32x32xbf16>, vector<16x32xf32> -> vector<16x32xf32>
    %c0_80 = arith.constant 0 : index
    %c0_81 = arith.constant 0 : index
    %243 = vector.load %arg19[%c0_80, %c0_81] : memref<1x32xf32, #tpu.memory_space<vmem>>, vector<1x32xf32>
    %244 = vector.broadcast %243 : vector<1x32xf32> to vector<16x32xf32>
    %245 = arith.addf %242, %244 : vector<16x32xf32>
    %c0_82 = arith.constant 0 : index
    %c0_83 = arith.constant 0 : index
    %246 = vector.load %arg20[%c0_82, %c0_83] : memref<32x32xbf16, #tpu.memory_space<vmem>>, vector<32x32xbf16>
    %cst_84 = arith.constant dense<0.000000e+00> : vector<16x32xf32>
    %247 = tpu.matmul %240, %246, %cst_84 {dimension_numbers = #tpu.dot_dimension_numbers<[1], [0], [0], [1], [0, 0, 1, 1], [], []>} : vector<16x32xbf16>, vector<32x32xbf16>, vector<16x32xf32> -> vector<16x32xf32>
    %c0_85 = arith.constant 0 : index
    %c0_86 = arith.constant 0 : index
    %248 = vector.load %arg21[%c0_85, %c0_86] : memref<1x32xf32, #tpu.memory_space<vmem>>, vector<1x32xf32>
    %249 = vector.broadcast %248 : vector<1x32xf32> to vector<16x32xf32>
    %250 = arith.addf %247, %249 : vector<16x32xf32>
    %c0_87 = arith.constant 0 : index
    %c0_88 = arith.constant 0 : index
    %251 = vector.load %arg22[%c0_87, %c0_88] : memref<32x32xbf16, #tpu.memory_space<vmem>>, vector<32x32xbf16>
    %cst_89 = arith.constant dense<0.000000e+00> : vector<16x32xf32>
    %252 = tpu.matmul %240, %251, %cst_89 {dimension_numbers = #tpu.dot_dimension_numbers<[1], [0], [0], [1], [0, 0, 1, 1], [], []>} : vector<16x32xbf16>, vector<32x32xbf16>, vector<16x32xf32> -> vector<16x32xf32>
    %c0_90 = arith.constant 0 : index
    %c0_91 = arith.constant 0 : index
    %253 = vector.load %arg23[%c0_90, %c0_91] : memref<1x32xf32, #tpu.memory_space<vmem>>, vector<1x32xf32>
    %254 = vector.broadcast %253 : vector<1x32xf32> to vector<16x32xf32>
    %255 = arith.addf %252, %254 : vector<16x32xf32>
    %256 = vector.shape_cast %245 : vector<16x32xf32> to vector<2x8x32xf32>
    %257 = vector.shape_cast %250 : vector<16x32xf32> to vector<2x8x32xf32>
    %258 = arith.truncf %257 : vector<2x8x32xf32> to vector<2x8x32xbf16>
    %259 = vector.shape_cast %255 : vector<16x32xf32> to vector<2x8x32xf32>
    %cst_92 = arith.constant 0.000000e+00 : f32
    %260 = vector.broadcast %cst_92 : f32 to vector<2x8x32xf32>
    %261 = vector.broadcast %7 : vector<1x1x32xf32> to vector<2x8x32xf32>
    %262 = arith.mulf %256, %261 : vector<2x8x32xf32>
    %263 = arith.truncf %262 : vector<2x8x32xf32> to vector<2x8x32xbf16>
    "tpu.trace_start"() <{level = 10 : i32, message = "bqc,bkc->bqk"}> : () -> ()
    %cst_93 = arith.constant dense<0.000000e+00> : vector<2x8x8xf32>
    %264 = tpu.matmul %263, %258, %cst_93 {dimension_numbers = #tpu.dot_dimension_numbers<[2], [2], [1], [1], [0, 0, 0, 1, 1, 1], [0], [0]>} : vector<2x8x32xbf16>, vector<2x8x32xbf16>, vector<2x8x8xf32> -> vector<2x8x8xf32>
    "tpu.trace_stop"() : () -> ()
    %265 = vector.broadcast %34 : vector<1x8x8xf32> to vector<2x8x8xf32>
    %266 = arith.addf %264, %265 : vector<2x8x8xf32>
    %cst_94 = arith.constant dense<0xFF800000> : vector<2x8xf32>
    %267 = vector.multi_reduction <maximumf>, %266, %cst_94 [2] : vector<2x8x8xf32> to vector<2x8xf32>
    %268 = vector.shape_cast %267 : vector<2x8xf32> to vector<2x8x1xf32>
    %269 = vector.broadcast %268 : vector<2x8x1xf32> to vector<2x8x8xf32>
    %270 = arith.subf %266, %269 : vector<2x8x8xf32>
    %271 = math.exp %270 : vector<2x8x8xf32>
    %cst_95 = arith.constant dense<0.000000e+00> : vector<2x8xf32>
    %272 = vector.multi_reduction <add>, %271, %cst_95 [2] : vector<2x8x8xf32> to vector<2x8xf32>
    %273 = vector.shape_cast %272 : vector<2x8xf32> to vector<2x8x1xf32>
    %274 = tpu.reciprocal %273 {approx = true} : vector<2x8x1xf32> -> vector<2x8x1xf32>
    %275 = vector.broadcast %274 : vector<2x8x1xf32> to vector<2x8x8xf32>
    %276 = arith.mulf %271, %275 : vector<2x8x8xf32>
    %277 = vector.broadcast %7 : vector<1x1x32xf32> to vector<2x8x32xf32>
    %278 = arith.mulf %259, %277 : vector<2x8x32xf32>
    %279 = arith.truncf %278 : vector<2x8x32xf32> to vector<2x8x32xbf16>
    %280 = arith.truncf %276 : vector<2x8x8xf32> to vector<2x8x8xbf16>
    "tpu.trace_start"() <{level = 10 : i32, message = "bqk,bkc->bqc"}> : () -> ()
    %cst_96 = arith.constant dense<0.000000e+00> : vector<2x8x32xf32>
    %281 = tpu.matmul %280, %279, %cst_96 {dimension_numbers = #tpu.dot_dimension_numbers<[2], [1], [1], [2], [0, 0, 0, 1, 1, 2], [0], [0]>} : vector<2x8x8xbf16>, vector<2x8x32xbf16>, vector<2x8x32xf32> -> vector<2x8x32xf32>
    "tpu.trace_stop"() : () -> ()
    %282 = arith.addf %260, %281 : vector<2x8x32xf32>
    %283 = vector.broadcast %14 : vector<1x1x32xf32> to vector<2x8x32xf32>
    %284 = arith.mulf %256, %283 : vector<2x8x32xf32>
    %285 = arith.truncf %284 : vector<2x8x32xf32> to vector<2x8x32xbf16>
    "tpu.trace_start"() <{level = 10 : i32, message = "bqc,bkc->bqk"}> : () -> ()
    %cst_97 = arith.constant dense<0.000000e+00> : vector<2x8x8xf32>
    %286 = tpu.matmul %285, %258, %cst_97 {dimension_numbers = #tpu.dot_dimension_numbers<[2], [2], [1], [1], [0, 0, 0, 1, 1, 1], [0], [0]>} : vector<2x8x32xbf16>, vector<2x8x32xbf16>, vector<2x8x8xf32> -> vector<2x8x8xf32>
    "tpu.trace_stop"() : () -> ()
    %287 = vector.broadcast %34 : vector<1x8x8xf32> to vector<2x8x8xf32>
    %288 = arith.addf %286, %287 : vector<2x8x8xf32>
    %cst_98 = arith.constant dense<0xFF800000> : vector<2x8xf32>
    %289 = vector.multi_reduction <maximumf>, %288, %cst_98 [2] : vector<2x8x8xf32> to vector<2x8xf32>
    %290 = vector.shape_cast %289 : vector<2x8xf32> to vector<2x8x1xf32>
    %291 = vector.broadcast %290 : vector<2x8x1xf32> to vector<2x8x8xf32>
    %292 = arith.subf %288, %291 : vector<2x8x8xf32>
    %293 = math.exp %292 : vector<2x8x8xf32>
    %cst_99 = arith.constant dense<0.000000e+00> : vector<2x8xf32>
    %294 = vector.multi_reduction <add>, %293, %cst_99 [2] : vector<2x8x8xf32> to vector<2x8xf32>
    %295 = vector.shape_cast %294 : vector<2x8xf32> to vector<2x8x1xf32>
    %296 = tpu.reciprocal %295 {approx = true} : vector<2x8x1xf32> -> vector<2x8x1xf32>
    %297 = vector.broadcast %296 : vector<2x8x1xf32> to vector<2x8x8xf32>
    %298 = arith.mulf %293, %297 : vector<2x8x8xf32>
    %299 = vector.broadcast %14 : vector<1x1x32xf32> to vector<2x8x32xf32>
    %300 = arith.mulf %259, %299 : vector<2x8x32xf32>
    %301 = arith.truncf %300 : vector<2x8x32xf32> to vector<2x8x32xbf16>
    %302 = arith.truncf %298 : vector<2x8x8xf32> to vector<2x8x8xbf16>
    "tpu.trace_start"() <{level = 10 : i32, message = "bqk,bkc->bqc"}> : () -> ()
    %cst_100 = arith.constant dense<0.000000e+00> : vector<2x8x32xf32>
    %303 = tpu.matmul %302, %301, %cst_100 {dimension_numbers = #tpu.dot_dimension_numbers<[2], [1], [1], [2], [0, 0, 0, 1, 1, 2], [0], [0]>} : vector<2x8x8xbf16>, vector<2x8x32xbf16>, vector<2x8x32xf32> -> vector<2x8x32xf32>
    "tpu.trace_stop"() : () -> ()
    %304 = arith.addf %282, %303 : vector<2x8x32xf32>
    %305 = vector.broadcast %21 : vector<1x1x32xf32> to vector<2x8x32xf32>
    %306 = arith.mulf %256, %305 : vector<2x8x32xf32>
    %307 = arith.truncf %306 : vector<2x8x32xf32> to vector<2x8x32xbf16>
    "tpu.trace_start"() <{level = 10 : i32, message = "bqc,bkc->bqk"}> : () -> ()
    %cst_101 = arith.constant dense<0.000000e+00> : vector<2x8x8xf32>
    %308 = tpu.matmul %307, %258, %cst_101 {dimension_numbers = #tpu.dot_dimension_numbers<[2], [2], [1], [1], [0, 0, 0, 1, 1, 1], [0], [0]>} : vector<2x8x32xbf16>, vector<2x8x32xbf16>, vector<2x8x8xf32> -> vector<2x8x8xf32>
    "tpu.trace_stop"() : () -> ()
    %309 = vector.broadcast %34 : vector<1x8x8xf32> to vector<2x8x8xf32>
    %310 = arith.addf %308, %309 : vector<2x8x8xf32>
    %cst_102 = arith.constant dense<0xFF800000> : vector<2x8xf32>
    %311 = vector.multi_reduction <maximumf>, %310, %cst_102 [2] : vector<2x8x8xf32> to vector<2x8xf32>
    %312 = vector.shape_cast %311 : vector<2x8xf32> to vector<2x8x1xf32>
    %313 = vector.broadcast %312 : vector<2x8x1xf32> to vector<2x8x8xf32>
    %314 = arith.subf %310, %313 : vector<2x8x8xf32>
    %315 = math.exp %314 : vector<2x8x8xf32>
    %cst_103 = arith.constant dense<0.000000e+00> : vector<2x8xf32>
    %316 = vector.multi_reduction <add>, %315, %cst_103 [2] : vector<2x8x8xf32> to vector<2x8xf32>
    %317 = vector.shape_cast %316 : vector<2x8xf32> to vector<2x8x1xf32>
    %318 = tpu.reciprocal %317 {approx = true} : vector<2x8x1xf32> -> vector<2x8x1xf32>
    %319 = vector.broadcast %318 : vector<2x8x1xf32> to vector<2x8x8xf32>
    %320 = arith.mulf %315, %319 : vector<2x8x8xf32>
    %321 = vector.broadcast %21 : vector<1x1x32xf32> to vector<2x8x32xf32>
    %322 = arith.mulf %259, %321 : vector<2x8x32xf32>
    %323 = arith.truncf %322 : vector<2x8x32xf32> to vector<2x8x32xbf16>
    %324 = arith.truncf %320 : vector<2x8x8xf32> to vector<2x8x8xbf16>
    "tpu.trace_start"() <{level = 10 : i32, message = "bqk,bkc->bqc"}> : () -> ()
    %cst_104 = arith.constant dense<0.000000e+00> : vector<2x8x32xf32>
    %325 = tpu.matmul %324, %323, %cst_104 {dimension_numbers = #tpu.dot_dimension_numbers<[2], [1], [1], [2], [0, 0, 0, 1, 1, 2], [0], [0]>} : vector<2x8x8xbf16>, vector<2x8x32xbf16>, vector<2x8x32xf32> -> vector<2x8x32xf32>
    "tpu.trace_stop"() : () -> ()
    %326 = arith.addf %304, %325 : vector<2x8x32xf32>
    %327 = vector.broadcast %28 : vector<1x1x32xf32> to vector<2x8x32xf32>
    %328 = arith.mulf %256, %327 : vector<2x8x32xf32>
    %329 = arith.truncf %328 : vector<2x8x32xf32> to vector<2x8x32xbf16>
    "tpu.trace_start"() <{level = 10 : i32, message = "bqc,bkc->bqk"}> : () -> ()
    %cst_105 = arith.constant dense<0.000000e+00> : vector<2x8x8xf32>
    %330 = tpu.matmul %329, %258, %cst_105 {dimension_numbers = #tpu.dot_dimension_numbers<[2], [2], [1], [1], [0, 0, 0, 1, 1, 1], [0], [0]>} : vector<2x8x32xbf16>, vector<2x8x32xbf16>, vector<2x8x8xf32> -> vector<2x8x8xf32>
    "tpu.trace_stop"() : () -> ()
    %331 = vector.broadcast %34 : vector<1x8x8xf32> to vector<2x8x8xf32>
    %332 = arith.addf %330, %331 : vector<2x8x8xf32>
    %cst_106 = arith.constant dense<0xFF800000> : vector<2x8xf32>
    %333 = vector.multi_reduction <maximumf>, %332, %cst_106 [2] : vector<2x8x8xf32> to vector<2x8xf32>
    %334 = vector.shape_cast %333 : vector<2x8xf32> to vector<2x8x1xf32>
    %335 = vector.broadcast %334 : vector<2x8x1xf32> to vector<2x8x8xf32>
    %336 = arith.subf %332, %335 : vector<2x8x8xf32>
    %337 = math.exp %336 : vector<2x8x8xf32>
    %cst_107 = arith.constant dense<0.000000e+00> : vector<2x8xf32>
    %338 = vector.multi_reduction <add>, %337, %cst_107 [2] : vector<2x8x8xf32> to vector<2x8xf32>
    %339 = vector.shape_cast %338 : vector<2x8xf32> to vector<2x8x1xf32>
    %340 = tpu.reciprocal %339 {approx = true} : vector<2x8x1xf32> -> vector<2x8x1xf32>
    %341 = vector.broadcast %340 : vector<2x8x1xf32> to vector<2x8x8xf32>
    %342 = arith.mulf %337, %341 : vector<2x8x8xf32>
    %343 = vector.broadcast %28 : vector<1x1x32xf32> to vector<2x8x32xf32>
    %344 = arith.mulf %259, %343 : vector<2x8x32xf32>
    %345 = arith.truncf %344 : vector<2x8x32xf32> to vector<2x8x32xbf16>
    %346 = arith.truncf %342 : vector<2x8x8xf32> to vector<2x8x8xbf16>
    "tpu.trace_start"() <{level = 10 : i32, message = "bqk,bkc->bqc"}> : () -> ()
    %cst_108 = arith.constant dense<0.000000e+00> : vector<2x8x32xf32>
    %347 = tpu.matmul %346, %345, %cst_108 {dimension_numbers = #tpu.dot_dimension_numbers<[2], [1], [1], [2], [0, 0, 0, 1, 1, 2], [0], [0]>} : vector<2x8x8xbf16>, vector<2x8x32xbf16>, vector<2x8x32xf32> -> vector<2x8x32xf32>
    "tpu.trace_stop"() : () -> ()
    %348 = arith.addf %326, %347 : vector<2x8x32xf32>
    %349 = vector.shape_cast %348 : vector<2x8x32xf32> to vector<16x32xf32>
    %350 = arith.addf %215, %349 : vector<16x32xf32>
    %c0_109 = arith.constant 0 : index
    %c0_110 = arith.constant 0 : index
    %351 = vector.load %arg24[%c0_109, %c0_110] : memref<1x32xf32, #tpu.memory_space<vmem>>, vector<1x32xf32>
    %c0_111 = arith.constant 0 : index
    %c0_112 = arith.constant 0 : index
    %352 = vector.load %arg25[%c0_111, %c0_112] : memref<1x32xf32, #tpu.memory_space<vmem>>, vector<1x32xf32>
    %cst_113 = arith.constant dense<0.000000e+00> : vector<16xf32>
    %353 = vector.multi_reduction <add>, %350, %cst_113 [1] : vector<16x32xf32> to vector<16xf32>
    %354 = vector.shape_cast %353 : vector<16xf32> to vector<16x1xf32>
    %cst_114 = arith.constant 3.200000e+01 : f32
    %355 = vector.broadcast %cst_114 : f32 to vector<16x1xf32>
    %356 = arith.divf %354, %355 : vector<16x1xf32>
    %357 = arith.mulf %350, %350 : vector<16x32xf32>
    %cst_115 = arith.constant dense<0.000000e+00> : vector<16xf32>
    %358 = vector.multi_reduction <add>, %357, %cst_115 [1] : vector<16x32xf32> to vector<16xf32>
    %359 = vector.shape_cast %358 : vector<16xf32> to vector<16x1xf32>
    %cst_116 = arith.constant 3.200000e+01 : f32
    %360 = vector.broadcast %cst_116 : f32 to vector<16x1xf32>
    %361 = arith.divf %359, %360 : vector<16x1xf32>
    %362 = arith.mulf %356, %356 : vector<16x1xf32>
    %363 = arith.subf %361, %362 : vector<16x1xf32>
    %364 = vector.broadcast %356 : vector<16x1xf32> to vector<16x32xf32>
    %365 = arith.subf %350, %364 : vector<16x32xf32>
    %cst_117 = arith.constant 9.99999974E-6 : f32
    %366 = vector.broadcast %cst_117 : f32 to vector<16x1xf32>
    %367 = arith.addf %363, %366 : vector<16x1xf32>
    %368 = math.rsqrt %367 : vector<16x1xf32>
    %369 = vector.broadcast %368 : vector<16x1xf32> to vector<16x32xf32>
    %370 = arith.mulf %365, %369 : vector<16x32xf32>
    %371 = vector.broadcast %351 : vector<1x32xf32> to vector<16x32xf32>
    %372 = arith.mulf %370, %371 : vector<16x32xf32>
    %373 = vector.broadcast %352 : vector<1x32xf32> to vector<16x32xf32>
    %374 = arith.addf %372, %373 : vector<16x32xf32>
    %375 = arith.truncf %374 : vector<16x32xf32> to vector<16x32xbf16>
    %c0_118 = arith.constant 0 : index
    %c0_119 = arith.constant 0 : index
    %376 = vector.load %arg26[%c0_118, %c0_119] : memref<32x128xbf16, #tpu.memory_space<vmem>>, vector<32x128xbf16>
    %cst_120 = arith.constant dense<0.000000e+00> : vector<16x128xf32>
    %377 = tpu.matmul %375, %376, %cst_120 {dimension_numbers = #tpu.dot_dimension_numbers<[1], [0], [0], [1], [0, 0, 1, 1], [], []>} : vector<16x32xbf16>, vector<32x128xbf16>, vector<16x128xf32> -> vector<16x128xf32>
    %c0_121 = arith.constant 0 : index
    %c0_122 = arith.constant 0 : index
    %378 = vector.load %arg27[%c0_121, %c0_122] : memref<1x128xf32, #tpu.memory_space<vmem>>, vector<1x128xf32>
    %379 = vector.broadcast %378 : vector<1x128xf32> to vector<16x128xf32>
    %380 = arith.addf %377, %379 : vector<16x128xf32>
    %cst_123 = arith.constant 5.000000e-01 : f32
    %381 = vector.broadcast %cst_123 : f32 to vector<16x128xf32>
    %382 = arith.mulf %381, %380 : vector<16x128xf32>
    %cst_124 = arith.constant 0.707106769 : f32
    %383 = vector.broadcast %cst_124 : f32 to vector<16x128xf32>
    %384 = arith.mulf %380, %383 : vector<16x128xf32>
    %385 = math.erf %384 : vector<16x128xf32>
    %cst_125 = arith.constant 1.000000e+00 : f32
    %386 = vector.broadcast %cst_125 : f32 to vector<16x128xf32>
    %387 = arith.addf %386, %385 : vector<16x128xf32>
    %388 = arith.mulf %382, %387 : vector<16x128xf32>
    %389 = arith.truncf %388 : vector<16x128xf32> to vector<16x128xbf16>
    %c0_126 = arith.constant 0 : index
    %c0_127 = arith.constant 0 : index
    %390 = vector.load %arg28[%c0_126, %c0_127] : memref<128x32xbf16, #tpu.memory_space<vmem>>, vector<128x32xbf16>
    %cst_128 = arith.constant dense<0.000000e+00> : vector<16x32xf32>
    %391 = tpu.matmul %389, %390, %cst_128 {dimension_numbers = #tpu.dot_dimension_numbers<[1], [0], [0], [1], [0, 0, 1, 1], [], []>} : vector<16x128xbf16>, vector<128x32xbf16>, vector<16x32xf32> -> vector<16x32xf32>
    %c0_129 = arith.constant 0 : index
    %c0_130 = arith.constant 0 : index
    %392 = vector.load %arg29[%c0_129, %c0_130] : memref<1x32xf32, #tpu.memory_space<vmem>>, vector<1x32xf32>
    %393 = vector.broadcast %392 : vector<1x32xf32> to vector<16x32xf32>
    %394 = arith.addf %391, %393 : vector<16x32xf32>
    %395 = arith.addf %350, %394 : vector<16x32xf32>
    %396 = arith.truncf %395 : vector<16x32xf32> to vector<16x32xbf16>
    %c0_131 = arith.constant 0 : index
    %c0_132 = arith.constant 0 : index
    %397 = vector.load %arg30[%c0_131, %c0_132] : memref<32x128xbf16, #tpu.memory_space<vmem>>, vector<32x128xbf16>
    %cst_133 = arith.constant dense<0.000000e+00> : vector<16x128xf32>
    %398 = tpu.matmul %396, %397, %cst_133 {dimension_numbers = #tpu.dot_dimension_numbers<[1], [0], [0], [1], [0, 0, 1, 1], [], []>} : vector<16x32xbf16>, vector<32x128xbf16>, vector<16x128xf32> -> vector<16x128xf32>
    %c0_134 = arith.constant 0 : index
    %c0_135 = arith.constant 0 : index
    %399 = vector.load %arg32[%c0_134, %c0_135] : memref<16x128xf32, #tpu.memory_space<vmem>>, vector<16x128xf32>
    tpu.vector_store %arg32[%c0_134, %c0_135], %398 {strides = array<i32>} : memref<16x128xf32, #tpu.memory_space<vmem>>, vector<16x128xf32>,
    %c0_136 = arith.constant 0 : index
    %c0_137 = arith.constant 0 : index
    %400 = vector.load %arg31[%c0_136, %c0_137] : memref<16x1xi32, #tpu.memory_space<vmem>>, vector<16x1xi32>
    %cst_138 = arith.constant dense<0xFF800000> : vector<16xf32>
    %401 = vector.multi_reduction <maximumf>, %398, %cst_138 [1] : vector<16x128xf32> to vector<16xf32>
    %402 = vector.shape_cast %401 : vector<16xf32> to vector<16x1xf32>
    %403 = vector.broadcast %402 : vector<16x1xf32> to vector<16x128xf32>
    %404 = arith.subf %398, %403 : vector<16x128xf32>
    %405 = math.exp %404 : vector<16x128xf32>
    %cst_139 = arith.constant dense<0.000000e+00> : vector<16xf32>
    %406 = vector.multi_reduction <add>, %405, %cst_139 [1] : vector<16x128xf32> to vector<16xf32>
    %407 = vector.shape_cast %406 : vector<16xf32> to vector<16x1xf32>
    %408 = math.log %407 : vector<16x1xf32>
    %409 = arith.addf %408, %402 : vector<16x1xf32>
    %410 = tpu.iota {dimensions = array<i32: 1>} : vector<16x128xi32>
    %411 = vector.broadcast %400 : vector<16x1xi32> to vector<16x128xi32>
    %412 = arith.cmpi eq, %410, %411 : vector<16x128xi32>
    %413 = arith.extui %412 : vector<16x128xi1> to vector<16x128xi32>
    %414 = arith.sitofp %413 : vector<16x128xi32> to vector<16x128xf32>
    %415 = arith.mulf %398, %414 : vector<16x128xf32>
    %cst_140 = arith.constant dense<0.000000e+00> : vector<16xf32>
    %416 = vector.multi_reduction <add>, %415, %cst_140 [1] : vector<16x128xf32> to vector<16xf32>
    %417 = vector.shape_cast %416 : vector<16xf32> to vector<16x1xf32>
    %418 = arith.subf %409, %417 : vector<16x1xf32>
    %419 = vector.shape_cast %418 : vector<16x1xf32> to vector<1x16x1xf32>
    %cst_141 = arith.constant dense<0.000000e+00> : vector<1xf32>
    %420 = vector.multi_reduction <add>, %419, %cst_141 [1, 2] : vector<1x16x1xf32> to vector<1xf32>
    %421 = vector.shape_cast %420 : vector<1xf32> to vector<1x1x1xf32>
    %422 = vector.extract %421[0, 0, 0] : f32 from vector<1x1x1xf32>
    %cst_142 = arith.constant 1.600000e+01 : f32
    %423 = arith.divf %422, %cst_142 : f32
    %cst_143 = arith.constant 1.000000e+00 : f32
    %424 = vector.broadcast %cst_143 : f32 to vector<1x1xf32>
    %425 = vector.broadcast %423 : f32 to vector<1x1xf32>
    %426 = arith.mulf %425, %424 : vector<1x1xf32>
    %c0_144 = arith.constant 0 : index
    %c0_145 = arith.constant 0 : index
    %427 = vector.load %arg33[%c0_144, %c0_145] : memref<1x1xf32, #tpu.memory_space<vmem>>, vector<1x1xf32>
    tpu.vector_store %arg33[%c0_144, %c0_145], %426 {strides = array<i32>} : memref<1x1xf32, #tpu.memory_space<vmem>>, vector<1x1xf32>,
    return
  }
  func.func @transform_0(%arg0: i32) -> (i32, i32) {
    %c0_i32 = arith.constant 0 : i32
    %c0_i32_0 = arith.constant 0 : i32
    %c0_i32_1 = arith.constant 0 : i32
    return %c0_i32, %c0_i32_0 : i32, i32
  }
  func.func @transform_1(%arg0: i32) -> (i32, i32) {
    %c0_i32 = arith.constant 0 : i32
    %c0_i32_0 = arith.constant 0 : i32
    %c0_i32_1 = arith.constant 0 : i32
    return %c0_i32, %c0_i32_0 : i32, i32
  }
  func.func @transform_2(%arg0: i32) -> (i32, i32) {
    %c0_i32 = arith.constant 0 : i32
    %c0_i32_0 = arith.constant 0 : i32
    %c0_i32_1 = arith.constant 0 : i32
    return %c0_i32, %c0_i32_0 : i32, i32
  }
  func.func @transform_3(%arg0: i32) -> (i32, i32) {
    %c0_i32 = arith.constant 0 : i32
    %c0_i32_0 = arith.constant 0 : i32
    %c0_i32_1 = arith.constant 0 : i32
    return %c0_i32, %c0_i32_0 : i32, i32
  }
  func.func @transform_4(%arg0: i32) -> (i32, i32) {
    %c0_i32 = arith.constant 0 : i32
    %c0_i32_0 = arith.constant 0 : i32
    %c0_i32_1 = arith.constant 0 : i32
    return %c0_i32, %c0_i32_0 : i32, i32
  }
  func.func @transform_5(%arg0: i32) -> (i32, i32) {
    %c0_i32 = arith.constant 0 : i32
    %c0_i32_0 = arith.constant 0 : i32
    %c0_i32_1 = arith.constant 0 : i32
    return %c0_i32, %c0_i32_0 : i32, i32
  }
  func.func @transform_6(%arg0: i32) -> (i32, i32) {
    %c0_i32 = arith.constant 0 : i32
    %c0_i32_0 = arith.constant 0 : i32
    %c0_i32_1 = arith.constant 0 : i32
    return %c0_i32, %c0_i32_0 : i32, i32
  }
  func.func @transform_7(%arg0: i32) -> (i32, i32) {
    %c0_i32 = arith.constant 0 : i32
    %c0_i32_0 = arith.constant 0 : i32
    %c0_i32_1 = arith.constant 0 : i32
    return %c0_i32, %c0_i32_0 : i32, i32
  }
  func.func @transform_8(%arg0: i32) -> (i32, i32) {
    %c0_i32 = arith.constant 0 : i32
    %c0_i32_0 = arith.constant 0 : i32
    %c0_i32_1 = arith.constant 0 : i32
    return %c0_i32, %c0_i32_0 : i32, i32
  }
  func.func @transform_9(%arg0: i32) -> (i32, i32) {
    %c0_i32 = arith.constant 0 : i32
    %c0_i32_0 = arith.constant 0 : i32
    %c0_i32_1 = arith.constant 0 : i32
    return %c0_i32, %c0_i32_0 : i32, i32
  }
  func.func @transform_10(%arg0: i32) -> (i32, i32) {
    %c0_i32 = arith.constant 0 : i32
    %c0_i32_0 = arith.constant 0 : i32
    %c0_i32_1 = arith.constant 0 : i32
    return %c0_i32, %c0_i32_0 : i32, i32
  }
  func.func @transform_11(%arg0: i32) -> (i32, i32) {
    %c0_i32 = arith.constant 0 : i32
    %c0_i32_0 = arith.constant 0 : i32
    %c0_i32_1 = arith.constant 0 : i32
    return %c0_i32, %c0_i32_0 : i32, i32
  }
  func.func @transform_12(%arg0: i32) -> (i32, i32) {
    %c0_i32 = arith.constant 0 : i32
    %c0_i32_0 = arith.constant 0 : i32
    %c0_i32_1 = arith.constant 0 : i32
    return %c0_i32, %c0_i32_0 : i32, i32
  }
  func.func @transform_13(%arg0: i32) -> (i32, i32) {
    %c0_i32 = arith.constant 0 : i32
    %c0_i32_0 = arith.constant 0 : i32
    %c0_i32_1 = arith.constant 0 : i32
    return %c0_i32, %c0_i32_0 : i32, i32
  }
  func.func @transform_14(%arg0: i32) -> (i32, i32) {
    %c0_i32 = arith.constant 0 : i32
    %c0_i32_0 = arith.constant 0 : i32
    %c0_i32_1 = arith.constant 0 : i32
    return %c0_i32, %c0_i32_0 : i32, i32
  }
  func.func @transform_15(%arg0: i32) -> (i32, i32) {
    %c0_i32 = arith.constant 0 : i32
    %c0_i32_0 = arith.constant 0 : i32
    %c0_i32_1 = arith.constant 0 : i32
    return %c0_i32, %c0_i32_0 : i32, i32
  }
  func.func @transform_16(%arg0: i32) -> (i32, i32) {
    %c0_i32 = arith.constant 0 : i32
    %c0_i32_0 = arith.constant 0 : i32
    %c0_i32_1 = arith.constant 0 : i32
    return %c0_i32, %c0_i32_0 : i32, i32
  }
  func.func @transform_17(%arg0: i32) -> (i32, i32) {
    %c0_i32 = arith.constant 0 : i32
    %c0_i32_0 = arith.constant 0 : i32
    %c0_i32_1 = arith.constant 0 : i32
    return %c0_i32, %c0_i32_0 : i32, i32
  }
  func.func @transform_18(%arg0: i32) -> (i32, i32) {
    %c0_i32 = arith.constant 0 : i32
    %c0_i32_0 = arith.constant 0 : i32
    %c0_i32_1 = arith.constant 0 : i32
    return %c0_i32, %c0_i32_0 : i32, i32
  }
  func.func @transform_19(%arg0: i32) -> (i32, i32) {
    %c0_i32 = arith.constant 0 : i32
    %c0_i32_0 = arith.constant 0 : i32
    %c0_i32_1 = arith.constant 0 : i32
    return %c0_i32, %c0_i32_0 : i32, i32
  }
  func.func @transform_20(%arg0: i32) -> (i32, i32) {
    %c0_i32 = arith.constant 0 : i32
    %c0_i32_0 = arith.constant 0 : i32
    %c0_i32_1 = arith.constant 0 : i32
    return %c0_i32, %c0_i32_0 : i32, i32
  }
  func.func @transform_21(%arg0: i32) -> (i32, i32) {
    %c0_i32 = arith.constant 0 : i32
    %c0_i32_0 = arith.constant 0 : i32
    %c0_i32_1 = arith.constant 0 : i32
    return %c0_i32, %c0_i32_0 : i32, i32
  }
  func.func @transform_22(%arg0: i32) -> (i32, i32) {
    %c0_i32 = arith.constant 0 : i32
    %c0_i32_0 = arith.constant 0 : i32
    %c0_i32_1 = arith.constant 0 : i32
    return %c0_i32, %c0_i32_0 : i32, i32
  }
  func.func @transform_23(%arg0: i32) -> (i32, i32) {
    %c0_i32 = arith.constant 0 : i32
    %c0_i32_0 = arith.constant 0 : i32
    %c0_i32_1 = arith.constant 0 : i32
    return %c0_i32, %c0_i32_0 : i32, i32
  }
  func.func @transform_24(%arg0: i32) -> (i32, i32) {
    %c0_i32 = arith.constant 0 : i32
    %c0_i32_0 = arith.constant 0 : i32
    %c0_i32_1 = arith.constant 0 : i32
    return %c0_i32, %c0_i32_0 : i32, i32
  }
  func.func @transform_25(%arg0: i32) -> (i32, i32) {
    %c0_i32 = arith.constant 0 : i32
    %c0_i32_0 = arith.constant 0 : i32
    %c0_i32_1 = arith.constant 0 : i32
    return %c0_i32, %c0_i32_0 : i32, i32
  }
  func.func @transform_26(%arg0: i32) -> (i32, i32) {
    %c0_i32 = arith.constant 0 : i32
    %c0_i32_0 = arith.constant 0 : i32
    %c0_i32_1 = arith.constant 0 : i32
    return %c0_i32, %c0_i32_0 : i32, i32
  }
  func.func @transform_27(%arg0: i32) -> (i32, i32) {
    %c0_i32 = arith.constant 0 : i32
    %c0_i32_0 = arith.constant 0 : i32
    %c0_i32_1 = arith.constant 0 : i32
    return %c0_i32, %c0_i32_0 : i32, i32
  }
  func.func @transform_28(%arg0: i32) -> (i32, i32) {
    %c0_i32 = arith.constant 0 : i32
    %c0_i32_0 = arith.constant 0 : i32
    %c0_i32_1 = arith.constant 0 : i32
    return %c0_i32, %c0_i32_0 : i32, i32
  }
  func.func @transform_29(%arg0: i32) -> (i32, i32) {
    %c0_i32 = arith.constant 0 : i32
    %c0_i32_0 = arith.constant 0 : i32
    %c0_i32_1 = arith.constant 0 : i32
    return %c0_i32, %c0_i32_0 : i32, i32
  }
  func.func @transform_30(%arg0: i32) -> (i32, i32) {
    %c0_i32 = arith.constant 0 : i32
    %c0_i32_0 = arith.constant 0 : i32
    %c0_i32_1 = arith.constant 0 : i32
    return %c0_i32, %c0_i32_0 : i32, i32
  }
  func.func @transform_31(%arg0: i32) -> (i32, i32) {
    %c0_i32 = arith.constant 0 : i32
    %c0_i32_0 = arith.constant 0 : i32
    %c0_i32_1 = arith.constant 0 : i32
    return %c0_i32, %c0_i32_0 : i32, i32
  }
  func.func @transform_32(%arg0: i32) -> (i32, i32) {
    %c0_i32 = arith.constant 0 : i32
    %c0_i32_0 = arith.constant 0 : i32
    %c0_i32_1 = arith.constant 0 : i32
    return %c0_i32, %c0_i32_0 : i32, i32
  }
}

</mosaic_0001>

<llo_original>
// kernel: tpu_custom_call.1
$region0: #{tpu_custom_call.1}
  #allocation0 [shape = 'u32[]', space=smem, size = 0x4, offset = 0x4, fixed_abs, tag = 'smem constant byte address 0x4 - core index']
  #allocation1 [shape = 'u32[144,128]{1,0:T(1,128)}', space=vmem, size = 0x12000, scoped, tag = 'internal scratch']
  %s0 = inlined_call_operand.smem [shape: u32[33], index: -1, kind: input, shape index: {}]
  %s1 = sld [smem:[%s0]]
  %s2 = scalar_lea.smem %s0, 1
  %s3 = sld [smem:[%s2]]
  %s4 = scalar_lea.smem %s0, 2
  %s5 = sld [smem:[%s4]]
  %s6 = scalar_lea.smem %s0, 3
  %s7 = sld [smem:[%s6]]
  %s8 = scalar_lea.smem %s0, 4
  %s9 = sld [smem:[%s8]]
  %s10 = scalar_lea.smem %s0, 5
  %s11 = sld [smem:[%s10]]
  %s12 = scalar_lea.smem %s0, 6
  %s13 = sld [smem:[%s12]]
  %s14 = scalar_lea.smem %s0, 7
  %s15 = sld [smem:[%s14]]
  %s16 = scalar_lea.smem %s0, 8
  %s17 = sld [smem:[%s16]]
  %s18 = scalar_lea.smem %s0, 9
  %s19 = sld [smem:[%s18]]
  %s20 = scalar_lea.smem %s0, 10
  %s21 = sld [smem:[%s20]]
  %s22 = scalar_lea.smem %s0, 11
  %s23 = sld [smem:[%s22]]
  %s24 = scalar_lea.smem %s0, 12
  %s25 = sld [smem:[%s24]]
  %s26 = scalar_lea.smem %s0, 13
  %s27 = sld [smem:[%s26]]
  %s28 = scalar_lea.smem %s0, 14
  %s29 = sld [smem:[%s28]]
  %s30 = scalar_lea.smem %s0, 15
  %s31 = sld [smem:[%s30]]
  %s32 = scalar_lea.smem %s0, 16
  %s33 = sld [smem:[%s32]]
  %s34 = scalar_lea.smem %s0, 17
  %s35 = sld [smem:[%s34]]
  %s36 = scalar_lea.smem %s0, 18
  %s37 = sld [smem:[%s36]]
  %s38 = scalar_lea.smem %s0, 19
  %s39 = sld [smem:[%s38]]
  %s40 = scalar_lea.smem %s0, 20
  %s41 = sld [smem:[%s40]]
  %s42 = scalar_lea.smem %s0, 21
  %s43 = sld [smem:[%s42]]
  %s44 = scalar_lea.smem %s0, 22
  %s45 = sld [smem:[%s44]]
  %s46 = scalar_lea.smem %s0, 23
  %s47 = sld [smem:[%s46]]
  %s48 = scalar_lea.smem %s0, 24
  %s49 = sld [smem:[%s48]]
  %s50 = scalar_lea.smem %s0, 25
  %s51 = sld [smem:[%s50]]
  %s52 = scalar_lea.smem %s0, 26
  %s53 = sld [smem:[%s52]]
  %s54 = scalar_lea.smem %s0, 27
  %s55 = sld [smem:[%s54]]
  %s56 = scalar_lea.smem %s0, 28
  %s57 = sld [smem:[%s56]]
  %s58 = scalar_lea.smem %s0, 29
  %s59 = sld [smem:[%s58]]
  %s60 = scalar_lea.smem %s0, 30
  %s61 = sld [smem:[%s60]]
  %s62 = scalar_lea.smem %s0, 31
  %s63 = sld [smem:[%s62]]
  %s64 = scalar_lea.smem %s0, 32
  %s65 = sld [smem:[%s64]]
  %66 = xla_tuple %s63, %s65
  %s67 = sld [smem:[#allocation0]]
  $region162: #{tpu_custom_call.1} parent=0
    _
  %s69 = ssub.s32 1, %s67
  %s70 = scalar_select 0, %s69, %s67
  $region1: #{tpu_custom_call.1} parent=0
    #allocation2 [shape = 'u8[512]{0}', space=vmem, size = 0x400, scoped, tag = 'input window, operand 4, single buffered']
    #allocation3 [shape = 's32[1]{0}', space=sflag, size = 0x4, scoped, tag = 'scoped memory for tpu_custom_call.1']
    #allocation4 [shape = 's32[1]{0}', space=sflag, size = 0x4, scoped, tag = 'scoped memory for tpu_custom_call.1']
    #allocation5 [shape = 'u8[512]{0}', space=vmem, size = 0x400, scoped, tag = 'input window, operand 6, single buffered']
    #allocation6 [shape = 's32[1]{0}', space=sflag, size = 0x4, scoped, tag = 'scoped memory for tpu_custom_call.1']
    #allocation7 [shape = 'u8[512]{0}', space=vmem, size = 0x400, scoped, tag = 'input window, operand 8, single buffered']
    #allocation8 [shape = 'u8[512]{0}', space=vmem, size = 0x400, scoped, tag = 'input window, operand 9, single buffered']
    #allocation9 [shape = 's32[1]{0}', space=sflag, size = 0x4, scoped, tag = 'scoped memory for tpu_custom_call.1']
    #allocation10 [shape = 'u8[512]{0}', space=vmem, size = 0x400, scoped, tag = 'input window, operand 10, single buffered']
    #allocation11 [shape = 'u8[8192]{0}', space=vmem, size = 0x2000, scoped, tag = 'output window, operand 0, single buffered']
    #allocation12 [shape = 'u8[512]{0}', space=vmem, size = 0x400, scoped, tag = 'output window, operand 1, single buffered']
    #allocation13 [shape = 's32[1]{0}', space=sflag, size = 0x4, scoped, tag = 'scoped memory for tpu_custom_call.1']
    %71 = vsyncpa [#allocation3], 0
    %72 = vsyncpa [#allocation6], 0
    %73 = vsyncpa [#allocation9], 0
    %74 = vsyncpa [#allocation4], 0
    %75 = vsyncpa [#allocation13], 0
    // Predicated region
    $region2: #{tpu_custom_call.1} parent=1 // pred_check
      _
    $region3: #{tpu_custom_call.1} parent=1 // pred_check_branch
      %77 = sbr.rel (0) target = $region5
    $region4: #{tpu_custom_call.1} parent=1 // pred_region
      _
    $region5: #{tpu_custom_call.1} parent=1 // pred_fallthru
      _
    // Predicated region
    $region6: #{tpu_custom_call.1} parent=1 // pred_check
      _
    $region7: #{tpu_custom_call.1} parent=1 // pred_check_branch
      %79 = sbr.rel (0) target = $region9
    $region8: #{tpu_custom_call.1} parent=1 // pred_region
      _
    $region9: #{tpu_custom_call.1} parent=1 // pred_fallthru
      _
    // Predicated region
    $region10: #{tpu_custom_call.1} parent=1 // pred_check
      _
    $region11: #{tpu_custom_call.1} parent=1 // pred_check_branch
      %81 = sbr.rel (0) target = $region13
    $region12: #{tpu_custom_call.1} parent=1 // pred_region
      _
    $region13: #{tpu_custom_call.1} parent=1 // pred_fallthru
      _
    // Predicated region
    $region14: #{tpu_custom_call.1} parent=1 // pred_check
      _
    $region15: #{tpu_custom_call.1} parent=1 // pred_check_branch
      %83 = sbr.rel (0) target = $region17
    $region16: #{tpu_custom_call.1} parent=1 // pred_region
      _
    $region17: #{tpu_custom_call.1} parent=1 // pred_fallthru
      _
    // Predicated region
    $region18: #{tpu_custom_call.1} parent=1 // pred_check
      _
    $region19: #{tpu_custom_call.1} parent=1 // pred_check_branch
      %85 = sbr.rel (0) target = $region21
    $region20: #{tpu_custom_call.1} parent=1 // pred_region
      %s87 = ssub.s32 16, 16
      %88 = vsyncadd [#allocation3], %s87
      %s90 = sshll.u32 [#allocation2], 4
      %s91 = int_to_ptr.vmem [resolvable:$true] %s90
      %93 = dma.hbm_to_vmem [thread:$0]  %s9, 16, %s91, [#allocation3]
    $region21: #{tpu_custom_call.1} parent=1 // pred_fallthru
      _
    // Predicated region
    $region22: #{tpu_custom_call.1} parent=1 // pred_check
      _
    $region23: #{tpu_custom_call.1} parent=1 // pred_check_branch
      %95 = sbr.rel (0) target = $region25
    $region24: #{tpu_custom_call.1} parent=1 // pred_region
      _
    $region25: #{tpu_custom_call.1} parent=1 // pred_fallthru
      _
    // Predicated region
    $region26: #{tpu_custom_call.1} parent=1 // pred_check
      _
    $region27: #{tpu_custom_call.1} parent=1 // pred_check_branch
      %97 = sbr.rel (0) target = $region29
    $region28: #{tpu_custom_call.1} parent=1 // pred_region
      %s99 = ssub.s32 16, 16
      %100 = vsyncadd [#allocation6], %s99
      %s102 = sshll.u32 [#allocation5], 4
      %s103 = int_to_ptr.vmem [resolvable:$true] %s102
      %105 = dma.hbm_to_vmem [thread:$0]  %s13, 16, %s103, [#allocation6]
    $region29: #{tpu_custom_call.1} parent=1 // pred_fallthru
      _
    // Predicated region
    $region30: #{tpu_custom_call.1} parent=1 // pred_check
      _
    $region31: #{tpu_custom_call.1} parent=1 // pred_check_branch
      %107 = sbr.rel (0) target = $region33
    $region32: #{tpu_custom_call.1} parent=1 // pred_region
      _
    $region33: #{tpu_custom_call.1} parent=1 // pred_fallthru
      _
    // Predicated region
    $region34: #{tpu_custom_call.1} parent=1 // pred_check
      _
    $region35: #{tpu_custom_call.1} parent=1 // pred_check_branch
      %109 = sbr.rel (0) target = $region37
    $region36: #{tpu_custom_call.1} parent=1 // pred_region
      %s111 = ssub.s32 16, 16
      %112 = vsyncadd [#allocation6], %s111
      %s114 = sshll.u32 [#allocation7], 4
      %s115 = int_to_ptr.vmem [resolvable:$true] %s114
      %117 = dma.hbm_to_vmem [thread:$0]  %s17, 16, %s115, [#allocation6]
    $region37: #{tpu_custom_call.1} parent=1 // pred_fallthru
      _
    // Predicated region
    $region38: #{tpu_custom_call.1} parent=1 // pred_check
      _
    $region39: #{tpu_custom_call.1} parent=1 // pred_check_branch
      %119 = sbr.rel (0) target = $region41
    $region40: #{tpu_custom_call.1} parent=1 // pred_region
      %s121 = ssub.s32 16, 16
      %122 = vsyncadd [#allocation9], %s121
      %s124 = sshll.u32 [#allocation8], 4
      %s125 = int_to_ptr.vmem [resolvable:$true] %s124
      %127 = dma.hbm_to_vmem [thread:$0]  %s19, 16, %s125, [#allocation9]
    $region41: #{tpu_custom_call.1} parent=1 // pred_fallthru
      _
    // Predicated region
    $region42: #{tpu_custom_call.1} parent=1 // pred_check
      _
    $region43: #{tpu_custom_call.1} parent=1 // pred_check_branch
      %129 = sbr.rel (0) target = $region45
    $region44: #{tpu_custom_call.1} parent=1 // pred_region
      %s131 = ssub.s32 16, 16
      %132 = vsyncadd [#allocation9], %s131
      %s134 = sshll.u32 [#allocation10], 4
      %s135 = int_to_ptr.vmem [resolvable:$true] %s134
      %137 = dma.hbm_to_vmem [thread:$0]  %s21, 16, %s135, [#allocation9]
    $region45: #{tpu_custom_call.1} parent=1 // pred_fallthru
      _
    // Predicated region
    $region46: #{tpu_custom_call.1} parent=1 // pred_check
      _
    $region47: #{tpu_custom_call.1} parent=1 // pred_check_branch
      %139 = sbr.rel (0) target = $region49
    $region48: #{tpu_custom_call.1} parent=1 // pred_region
      _
    $region49: #{tpu_custom_call.1} parent=1 // pred_fallthru
      _
    // Predicated region
    $region50: #{tpu_custom_call.1} parent=1 // pred_check
      _
    $region51: #{tpu_custom_call.1} parent=1 // pred_check_branch
      %141 = sbr.rel (0) target = $region53
    $region52: #{tpu_custom_call.1} parent=1 // pred_region
      _
    $region53: #{tpu_custom_call.1} parent=1 // pred_fallthru
      _
    // Predicated region
    $region54: #{tpu_custom_call.1} parent=1 // pred_check
      _
    $region55: #{tpu_custom_call.1} parent=1 // pred_check_branch
      %143 = sbr.rel (0) target = $region57
    $region56: #{tpu_custom_call.1} parent=1 // pred_region
      _
    $region57: #{tpu_custom_call.1} parent=1 // pred_fallthru
      _
    // Predicated region
    $region58: #{tpu_custom_call.1} parent=1 // pred_check
      _
    $region59: #{tpu_custom_call.1} parent=1 // pred_check_branch
      %145 = sbr.rel (0) target = $region61
    $region60: #{tpu_custom_call.1} parent=1 // pred_region
      _
    $region61: #{tpu_custom_call.1} parent=1 // pred_fallthru
      _
    // Predicated region
    $region62: #{tpu_custom_call.1} parent=1 // pred_check
      _
    $region63: #{tpu_custom_call.1} parent=1 // pred_check_branch
      %147 = sbr.rel (0) target = $region65
    $region64: #{tpu_custom_call.1} parent=1 // pred_region
      _
    $region65: #{tpu_custom_call.1} parent=1 // pred_fallthru
      _
    // Predicated region
    $region66: #{tpu_custom_call.1} parent=1 // pred_check
      _
    $region67: #{tpu_custom_call.1} parent=1 // pred_check_branch
      %149 = sbr.rel (0) target = $region69
    $region68: #{tpu_custom_call.1} parent=1 // pred_region
      _
    $region69: #{tpu_custom_call.1} parent=1 // pred_fallthru
      _
    // Predicated region
    $region70: #{tpu_custom_call.1} parent=1 // pred_check
      _
    $region71: #{tpu_custom_call.1} parent=1 // pred_check_branch
      %151 = sbr.rel (0) target = $region73
    $region72: #{tpu_custom_call.1} parent=1 // pred_region
      _
    $region73: #{tpu_custom_call.1} parent=1 // pred_fallthru
      _
    // Predicated region
    $region74: #{tpu_custom_call.1} parent=1 // pred_check
      _
    $region75: #{tpu_custom_call.1} parent=1 // pred_check_branch
      %153 = sbr.rel (0) target = $region77
    $region76: #{tpu_custom_call.1} parent=1 // pred_region
      _
    $region77: #{tpu_custom_call.1} parent=1 // pred_fallthru
      _
    // Predicated region
    $region78: #{tpu_custom_call.1} parent=1 // pred_check
      _
    $region79: #{tpu_custom_call.1} parent=1 // pred_check_branch
      %155 = sbr.rel (0) target = $region81
    $region80: #{tpu_custom_call.1} parent=1 // pred_region
      _
    $region81: #{tpu_custom_call.1} parent=1 // pred_fallthru
      _
    // Predicated region
    $region82: #{tpu_custom_call.1} parent=1 // pred_check
      _
    $region83: #{tpu_custom_call.1} parent=1 // pred_check_branch
      %157 = sbr.rel (0) target = $region85
    $region84: #{tpu_custom_call.1} parent=1 // pred_region
      _
    $region85: #{tpu_custom_call.1} parent=1 // pred_fallthru
      _
    // Predicated region
    $region86: #{tpu_custom_call.1} parent=1 // pred_check
      _
    $region87: #{tpu_custom_call.1} parent=1 // pred_check_branch
      %159 = sbr.rel (0) target = $region89
    $region88: #{tpu_custom_call.1} parent=1 // pred_region
      _
    $region89: #{tpu_custom_call.1} parent=1 // pred_fallthru
      _
    // Predicated region
    $region90: #{tpu_custom_call.1} parent=1 // pred_check
      _
    $region91: #{tpu_custom_call.1} parent=1 // pred_check_branch
      %161 = sbr.rel (0) target = $region93
    $region92: #{tpu_custom_call.1} parent=1 // pred_region
      _
    $region93: #{tpu_custom_call.1} parent=1 // pred_fallthru
      _
    // Predicated region
    $region94: #{tpu_custom_call.1} parent=1 // pred_check
      _
    $region95: #{tpu_custom_call.1} parent=1 // pred_check_branch
      %163 = sbr.rel (0) target = $region97
    $region96: #{tpu_custom_call.1} parent=1 // pred_region
      _
    $region97: #{tpu_custom_call.1} parent=1 // pred_fallthru
      _
    // Predicated region
    $region98: #{tpu_custom_call.1} parent=1 // pred_check
      _
    $region99: #{tpu_custom_call.1} parent=1 // pred_check_branch
      %165 = sbr.rel (0) target = $region101
    $region100: #{tpu_custom_call.1} parent=1 // pred_region
      _
    $region101: #{tpu_custom_call.1} parent=1 // pred_fallthru
      _
    // Predicated region
    $region102: #{tpu_custom_call.1} parent=1 // pred_check
      _
    $region103: #{tpu_custom_call.1} parent=1 // pred_check_branch
      %167 = sbr.rel (0) target = $region105
    $region104: #{tpu_custom_call.1} parent=1 // pred_region
      _
    $region105: #{tpu_custom_call.1} parent=1 // pred_fallthru
      _
    // Predicated region
    $region106: #{tpu_custom_call.1} parent=1 // pred_check
      _
    $region107: #{tpu_custom_call.1} parent=1 // pred_check_branch
      %169 = sbr.rel (0) target = $region109
    $region108: #{tpu_custom_call.1} parent=1 // pred_region
      _
    $region109: #{tpu_custom_call.1} parent=1 // pred_fallthru
      _
    // Predicated region
    $region110: #{tpu_custom_call.1} parent=1 // pred_check
      _
    $region111: #{tpu_custom_call.1} parent=1 // pred_check_branch
      %171 = sbr.rel (0) target = $region113
    $region112: #{tpu_custom_call.1} parent=1 // pred_region
      _
    $region113: #{tpu_custom_call.1} parent=1 // pred_fallthru
      _
    // Predicated region
    $region114: #{tpu_custom_call.1} parent=1 // pred_check
      _
    $region115: #{tpu_custom_call.1} parent=1 // pred_check_branch
      %173 = sbr.rel (0) target = $region117
    $region116: #{tpu_custom_call.1} parent=1 // pred_region
      _
    $region117: #{tpu_custom_call.1} parent=1 // pred_fallthru
      _
    // Predicated region
    $region118: #{tpu_custom_call.1} parent=1 // pred_check
      _
    $region119: #{tpu_custom_call.1} parent=1 // pred_check_branch
      %175 = sbr.rel (0) target = $region121
    $region120: #{tpu_custom_call.1} parent=1 // pred_region
      _
    $region121: #{tpu_custom_call.1} parent=1 // pred_fallthru
      _
    // Predicated region
    $region122: #{tpu_custom_call.1} parent=1 // pred_check
      _
    $region123: #{tpu_custom_call.1} parent=1 // pred_check_branch
      %177 = sbr.rel (0) target = $region125
    $region124: #{tpu_custom_call.1} parent=1 // pred_region
      _
    $region125: #{tpu_custom_call.1} parent=1 // pred_fallthru
      _
    // Predicated region
    $region126: #{tpu_custom_call.1} parent=1 // pred_check
      _
    $region127: #{tpu_custom_call.1} parent=1 // pred_check_branch
      %179 = sbr.rel (0) target = $region129
    $region128: #{tpu_custom_call.1} parent=1 // pred_region
      %180 = dma.done [#allocation3], 16
    $region129: #{tpu_custom_call.1} parent=1 // pred_fallthru
      _
    // Predicated region
    $region130: #{tpu_custom_call.1} parent=1 // pred_check
      _
    $region131: #{tpu_custom_call.1} parent=1 // pred_check_branch
      %182 = sbr.rel (0) target = $region133
    $region132: #{tpu_custom_call.1} parent=1 // pred_region
      %183 = dma.done [#allocation6], 16
    $region133: #{tpu_custom_call.1} parent=1 // pred_fallthru
      _
    // Predicated region
    $region134: #{tpu_custom_call.1} parent=1 // pred_check
      _
    $region135: #{tpu_custom_call.1} parent=1 // pred_check_branch
      %185 = sbr.rel (0) target = $region137
    $region136: #{tpu_custom_call.1} parent=1 // pred_region
      %186 = dma.done [#allocation6], 16
    $region137: #{tpu_custom_call.1} parent=1 // pred_fallthru
      _
    // Predicated region
    $region138: #{tpu_custom_call.1} parent=1 // pred_check
      _
    $region139: #{tpu_custom_call.1} parent=1 // pred_check_branch
      %188 = sbr.rel (0) target = $region141
    $region140: #{tpu_custom_call.1} parent=1 // pred_region
      %189 = dma.done [#allocation9], 16
    $region141: #{tpu_custom_call.1} parent=1 // pred_fallthru
      _
    // Predicated region
    $region142: #{tpu_custom_call.1} parent=1 // pred_check
      _
    $region143: #{tpu_custom_call.1} parent=1 // pred_check_branch
      %191 = sbr.rel (0) target = $region145
    $region144: #{tpu_custom_call.1} parent=1 // pred_region
      %192 = dma.done [#allocation9], 16
    $region145: #{tpu_custom_call.1} parent=1 // pred_fallthru
      _
    %v194 = vlaneseq
    %v195 = vand.u32 %v194, 127
    %vm196 = vcmp.ge.s32.totalorder %v195, 0
    %vm197 = vcmp.lt.s32.totalorder %v195, 8
    %vm198 = vmand %vm196, %vm197
    %v199 = vsel %vm198, 1, 0
    %v200 = vcvt.s32.f32 %v199
    %vm201 = vcmp.ge.s32.totalorder %v195, 8
    %vm202 = vcmp.lt.s32.totalorder %v195, 16
    %vm203 = vmand %vm201, %vm202
    %v204 = vsel %vm203, 1, 0
    %v205 = vcvt.s32.f32 %v204
    %vm206 = vcmp.ge.s32.totalorder %v195, 16
    %vm207 = vcmp.lt.s32.totalorder %v195, 24
    %vm208 = vmand %vm206, %vm207
    %v209 = vsel %vm208, 1, 0
    %v210 = vcvt.s32.f32 %v209
    %vm211 = vcmp.ge.s32.totalorder %v195, 24
    %vm212 = vcmp.lt.s32.totalorder %v195, 32
    %vm213 = vmand %vm211, %vm212
    %v214 = vsel %vm213, 1, 0
    %v215 = vcvt.s32.f32 %v214
    %v216 = vlaneseq
    %v217 = vshrl.u32 %v216, 7
    %vm218 = vcmp.ge.s32.totalorder %v217, %v195
    %v219 = vsel %vm218, 0.0, -1e+30
    %v220 = vld [vmem:[%s1] sm:$0xff]
    %v221 = vld [vmem:[%s1 + $0x8] sm:$0xff]
    %v222 = vld [vmem:[%s3] sm:$0x1]
    %v223 = vld [vmem:[%s5] sm:$0x1]
    %vm224 = vcmask 261120
    %v225 = vsel %vm224, %v220, 0.0
    %226 = vadd.xlane.f32.xlu0 %v225
    %v227 = vpop.xlane.xlu0 %226
    %v228 = vsel %vm224, %v221, 0.0
    %229 = vadd.xlane.f32.xlu0 %v228
    %v230 = vpop.xlane.xlu0 %229
    %v231 = vrcp.pop 32.0
    %v232 = vmul.f32 %v227, %v231
    %v233 = vmul.f32 %v230, %v231
    %v234 = vmul.f32 %v220, %v220
    %v235 = vmul.f32 %v221, %v221
    %v236 = vsel %vm224, %v234, 0.0
    %237 = vadd.xlane.f32.xlu0 %v236
    %v238 = vpop.xlane.xlu0 %237
    %v239 = vsel %vm224, %v235, 0.0
    %240 = vadd.xlane.f32.xlu0 %v239
    %v241 = vpop.xlane.xlu0 %240
    %v242 = vmul.f32 %v238, %v231
    %v243 = vmul.f32 %v241, %v231
    %v244 = vmul.f32 %v232, %v232
    %v245 = vmul.f32 %v233, %v233
    %v246 = vsub.f32 %v242, %v244
    %v247 = vsub.f32 %v243, %v245
    %v248 = vsub.f32 %v220, %v232
    %v249 = vsub.f32 %v221, %v233
    %v250 = vadd.f32 %v246, 1e-05
    %v251 = vadd.f32 %v247, 1e-05
    %v252 = vrsqrt.pop %v250
    %v253 = vrsqrt.pop %v251
    %v254 = vmul.f32 %v248, %v252
    %v255 = vmul.f32 %v249, %v253
    %v257 = vlaneseq
    %v258 = vshrl.u32 %v257, 7
    %v259 = vsub.s32 0, %v258
    %v260 = vrot.slane %v222, %v259
    %v262 = vmul.f32 %v254, %v260
    %v263 = vmul.f32 %v255, %v260
    %v265 = vlaneseq
    %v266 = vshrl.u32 %v265, 7
    %v267 = vsub.s32 0, %v266
    %v268 = vrot.slane %v223, %v267
    %v270 = vadd.f32 %v262, %v268
    %v271 = vadd.f32 %v263, %v268
    %v272 = vpack.c.bf16 %v271, %v270
    %v273 = vld [vmem:[%s7] sm:$0xf]
    %v274 = vld [vmem:[%s7 + $0x4] sm:$0xf]
    %v275 = vld [vmem:[%s7 + $0x8] sm:$0xf]
    %v276 = vld [vmem:[%s7 + $0xc] sm:$0xf]
    %v277 = vld [vmem:[#allocation2] sm:$0x1]
    %v279 = vlaneseq
    %v280 = vshrl.u32 %v279, 7
    %v281 = vsub.s32 0, %v280
    %v282 = vrot.slane %v277, %v281
    %v288 = vunpack.c.l.b16 %v273
    %v289 = vunpack.c.l.b16 %v274
    %v290 = vunpack.c.l.b16 %v275
    %v291 = vunpack.c.l.b16 %v276
    %v292 = vpack.c.b16 %v289, %v288
    %v293 = vpack.c.b16 %v291, %v290
    %v297 = vsel %vm224, %v272, 0
    %299 = vmatprep.subr.bf16.mxu0 0
    %300 = vmatpush1.bf16.msra.mxu0 0
    %301 = vmatprep.subr.bf16.mxu0 0
    %302 = vmatpush1.bf16.msra.mxu0 0
    %303 = vmatprep.subr.bf16.mxu0 0
    %304 = vmatpush1.bf16.msra.mxu0 0
    %305 = vmatprep.subr.bf16.mxu0 0
    %306 = vmatpush1.bf16.msra.mxu0 0
    %307 = vmatprep.subr.bf16.mxu0 0
    %308 = vmatpush1.bf16.msra.mxu0 0
    %309 = vmatprep.subr.bf16.mxu0 0
    %310 = vmatpush1.bf16.msra.mxu0 0
    %311 = vmatprep.subr.bf16.mxu0 0
    %312 = vmatpush1.bf16.msra.mxu0 %v293
    %313 = vmatprep.subr.bf16.mxu0 0
    %314 = vmatpush1.bf16.msra.mxu0 %v292
    %315 = vmatprep.subr.bf16.mxu0 0
    %316 = vmatpush2.bf16.msra.mxu0 0
    %317 = vmatprep.subr.bf16.mxu0 0
    %318 = vmatpush2.bf16.msra.mxu0 0
    %319 = vmatprep.subr.bf16.mxu0 0
    %320 = vmatpush2.bf16.msra.mxu0 0
    %321 = vmatprep.subr.bf16.mxu0 0
    %322 = vmatpush2.bf16.msra.mxu0 0
    %323 = vmatprep.subr.bf16.mxu0 0
    %324 = vmatpush2.bf16.msra.mxu0 0
    %325 = vmatprep.subr.bf16.mxu0 0
    %326 = vmatpush2.bf16.msra.mxu0 0
    %327 = vmatprep.subr.bf16.mxu0 0
    %328 = vmatpush2.bf16.msra.mxu0 0
    %329 = vmatprep.subr.bf16.mxu0 0
    %330 = vmatpush2.bf16.msra.mxu0 0
    %331 = vmatprep.mubr.bf16.mxu0 0
    %332 = vmatmul.mubr.bf16.gmra.mxu0 %v297
    %v333 = vpop.f32.mrf.mxu0
    %v334 = vadd.f32 %v282, %v333
    %v335 = vpop.f32.mrf.mxu0
    %v336 = vpop.f32.mrf.mxu0
    %v337 = vadd.f32 %v282, %v336
    %v338 = vpop.f32.mrf.mxu0
    %339 = vdwg.mxu0
    %v340 = vld [vmem:[%s11] sm:$0xf]
    %v341 = vld [vmem:[%s11 + $0x4] sm:$0xf]
    %v342 = vld [vmem:[%s11 + $0x8] sm:$0xf]
    %v343 = vld [vmem:[%s11 + $0xc] sm:$0xf]
    %v344 = vld [vmem:[#allocation5] sm:$0x1]
    %v346 = vlaneseq
    %v347 = vshrl.u32 %v346, 7
    %v348 = vsub.s32 0, %v347
    %v349 = vrot.slane %v344, %v348
    %v355 = vunpack.c.l.b16 %v340
    %v356 = vunpack.c.l.b16 %v341
    %v357 = vunpack.c.l.b16 %v342
    %v358 = vunpack.c.l.b16 %v343
    %v359 = vpack.c.b16 %v356, %v355
    %v360 = vpack.c.b16 %v358, %v357
    %363 = vmatprep.subr.bf16.mxu0 0
    %364 = vmatpush1.bf16.msra.mxu0 0
    %365 = vmatprep.subr.bf16.mxu0 0
    %366 = vmatpush1.bf16.msra.mxu0 0
    %367 = vmatprep.subr.bf16.mxu0 0
    %368 = vmatpush1.bf16.msra.mxu0 0
    %369 = vmatprep.subr.bf16.mxu0 0
    %370 = vmatpush1.bf16.msra.mxu0 0
    %371 = vmatprep.subr.bf16.mxu0 0
    %372 = vmatpush1.bf16.msra.mxu0 0
    %373 = vmatprep.subr.bf16.mxu0 0
    %374 = vmatpush1.bf16.msra.mxu0 0
    %375 = vmatprep.subr.bf16.mxu0 0
    %376 = vmatpush1.bf16.msra.mxu0 %v360
    %377 = vmatprep.subr.bf16.mxu0 0
    %378 = vmatpush1.bf16.msra.mxu0 %v359
    %379 = vmatprep.subr.bf16.mxu0 0
    %380 = vmatpush2.bf16.msra.mxu0 0
    %381 = vmatprep.subr.bf16.mxu0 0
    %382 = vmatpush2.bf16.msra.mxu0 0
    %383 = vmatprep.subr.bf16.mxu0 0
    %384 = vmatpush2.bf16.msra.mxu0 0
    %385 = vmatprep.subr.bf16.mxu0 0
    %386 = vmatpush2.bf16.msra.mxu0 0
    %387 = vmatprep.subr.bf16.mxu0 0
    %388 = vmatpush2.bf16.msra.mxu0 0
    %389 = vmatprep.subr.bf16.mxu0 0
    %390 = vmatpush2.bf16.msra.mxu0 0
    %391 = vmatprep.subr.bf16.mxu0 0
    %392 = vmatpush2.bf16.msra.mxu0 0
    %393 = vmatprep.subr.bf16.mxu0 0
    %394 = vmatpush2.bf16.msra.mxu0 0
    %395 = vmatprep.mubr.bf16.mxu0 0
    %396 = vmatmul.mubr.bf16.gmra.mxu0 %v297
    %v397 = vpop.f32.mrf.mxu0
    %v398 = vadd.f32 %v349, %v397
    %v399 = vpop.f32.mrf.mxu0
    %v400 = vpop.f32.mrf.mxu0
    %v401 = vadd.f32 %v349, %v400
    %v402 = vpop.f32.mrf.mxu0
    %403 = vdwg.mxu0
    %v404 = vld [vmem:[%s15] sm:$0xf]
    %v405 = vld [vmem:[%s15 + $0x4] sm:$0xf]
    %v406 = vld [vmem:[%s15 + $0x8] sm:$0xf]
    %v407 = vld [vmem:[%s15 + $0xc] sm:$0xf]
    %v408 = vld [vmem:[#allocation7] sm:$0x1]
    %v410 = vlaneseq
    %v411 = vshrl.u32 %v410, 7
    %v412 = vsub.s32 0, %v411
    %v413 = vrot.slane %v408, %v412
    %v419 = vunpack.c.l.b16 %v404
    %v420 = vunpack.c.l.b16 %v405
    %v421 = vunpack.c.l.b16 %v406
    %v422 = vunpack.c.l.b16 %v407
    %v423 = vpack.c.b16 %v420, %v419
    %v424 = vpack.c.b16 %v422, %v421
    %427 = vmatprep.subr.bf16.mxu0 0
    %428 = vmatpush1.bf16.msra.mxu0 0
    %429 = vmatprep.subr.bf16.mxu0 0
    %430 = vmatpush1.bf16.msra.mxu0 0
    %431 = vmatprep.subr.bf16.mxu0 0
    %432 = vmatpush1.bf16.msra.mxu0 0
    %433 = vmatprep.subr.bf16.mxu0 0
    %434 = vmatpush1.bf16.msra.mxu0 0
    %435 = vmatprep.subr.bf16.mxu0 0
    %436 = vmatpush1.bf16.msra.mxu0 0
    %437 = vmatprep.subr.bf16.mxu0 0
    %438 = vmatpush1.bf16.msra.mxu0 0
    %439 = vmatprep.subr.bf16.mxu0 0
    %440 = vmatpush1.bf16.msra.mxu0 %v424
    %441 = vmatprep.subr.bf16.mxu0 0
    %442 = vmatpush1.bf16.msra.mxu0 %v423
    %443 = vmatprep.subr.bf16.mxu0 0
    %444 = vmatpush2.bf16.msra.mxu0 0
    %445 = vmatprep.subr.bf16.mxu0 0
    %446 = vmatpush2.bf16.msra.mxu0 0
    %447 = vmatprep.subr.bf16.mxu0 0
    %448 = vmatpush2.bf16.msra.mxu0 0
    %449 = vmatprep.subr.bf16.mxu0 0
    %450 = vmatpush2.bf16.msra.mxu0 0
    %451 = vmatprep.subr.bf16.mxu0 0
    %452 = vmatpush2.bf16.msra.mxu0 0
    %453 = vmatprep.subr.bf16.mxu0 0
    %454 = vmatpush2.bf16.msra.mxu0 0
    %455 = vmatprep.subr.bf16.mxu0 0
    %456 = vmatpush2.bf16.msra.mxu0 0
    %457 = vmatprep.subr.bf16.mxu0 0
    %458 = vmatpush2.bf16.msra.mxu0 0
    %459 = vmatprep.mubr.bf16.mxu0 0
    %460 = vmatmul.mubr.bf16.gmra.mxu0 %v297
    %v461 = vpop.f32.mrf.mxu0
    %v462 = vadd.f32 %v413, %v461
    %v463 = vpop.f32.mrf.mxu0
    %v464 = vpop.f32.mrf.mxu0
    %v465 = vadd.f32 %v413, %v464
    %v466 = vpop.f32.mrf.mxu0
    %467 = vdwg.mxu0
    %v468 = vpack.c.bf16 %v398, %v398
    %v469 = vpack.c.bf16 %v401, %v401
    %v470 = vmul.f32 %v334, %v200
    %v471 = vmul.f32 %v337, %v200
    %v472 = vpack.c.bf16 %v470, %v470
    %v473 = vpack.c.bf16 %v471, %v471
    %v475 = vsel %vm224, %v472, 0
    %v478 = vsel %vm224, %v468, 0
    %480 = vmatprep.subr.bf16.mxu0 0
    %481 = vmatpush1.bf16.xpose.msra.mxu0 0
    %482 = vmatprep.subr.bf16.mxu0 0
    %483 = vmatpush1.bf16.xpose.msra.mxu0 0
    %484 = vmatprep.subr.bf16.mxu0 0
    %485 = vmatpush1.bf16.xpose.msra.mxu0 0
    %486 = vmatprep.subr.bf16.mxu0 0
    %487 = vmatpush1.bf16.xpose.msra.mxu0 0
    %488 = vmatprep.subr.bf16.mxu0 0
    %489 = vmatpush1.bf16.xpose.msra.mxu0 0
    %490 = vmatprep.subr.bf16.mxu0 0
    %491 = vmatpush1.bf16.xpose.msra.mxu0 0
    %492 = vmatprep.subr.bf16.mxu0 0
    %493 = vmatpush1.bf16.xpose.msra.mxu0 0
    %494 = vmatprep.subr.bf16.mxu0 0
    %495 = vmatpush1.bf16.xpose.msra.mxu0 %v478
    %496 = vmatprep.subr.bf16.mxu0 0
    %497 = vmatpush2.bf16.xpose.msra.mxu0 0
    %498 = vmatprep.subr.bf16.mxu0 0
    %499 = vmatpush2.bf16.xpose.msra.mxu0 0
    %500 = vmatprep.subr.bf16.mxu0 0
    %501 = vmatpush2.bf16.xpose.msra.mxu0 0
    %502 = vmatprep.subr.bf16.mxu0 0
    %503 = vmatpush2.bf16.xpose.msra.mxu0 0
    %504 = vmatprep.subr.bf16.mxu0 0
    %505 = vmatpush2.bf16.xpose.msra.mxu0 0
    %506 = vmatprep.subr.bf16.mxu0 0
    %507 = vmatpush2.bf16.xpose.msra.mxu0 0
    %508 = vmatprep.subr.bf16.mxu0 0
    %509 = vmatpush2.bf16.xpose.msra.mxu0 0
    %510 = vmatprep.subr.bf16.mxu0 0
    %511 = vmatpush2.bf16.xpose.msra.mxu0 0
    %512 = vmatprep.mubr.bf16.mxu0 0
    %513 = vmatmul.mubr.bf16.gmra.mxu0 %v475
    %v514 = vpop.f32.mrf.mxu0
    %v515 = vadd.f32 %v219, %v514
    %v516 = vpop.f32.mrf.mxu0
    %v517 = vpop.f32.mrf.mxu0
    %v518 = vpop.f32.mrf.mxu0
    %519 = vdwg.mxu0
    %v521 = vsel %vm224, %v473, 0
    %v524 = vsel %vm224, %v469, 0
    %526 = vmatprep.subr.bf16.mxu0 0
    %527 = vmatpush1.bf16.xpose.msra.mxu0 0
    %528 = vmatprep.subr.bf16.mxu0 0
    %529 = vmatpush1.bf16.xpose.msra.mxu0 0
    %530 = vmatprep.subr.bf16.mxu0 0
    %531 = vmatpush1.bf16.xpose.msra.mxu0 0
    %532 = vmatprep.subr.bf16.mxu0 0
    %533 = vmatpush1.bf16.xpose.msra.mxu0 0
    %534 = vmatprep.subr.bf16.mxu0 0
    %535 = vmatpush1.bf16.xpose.msra.mxu0 0
    %536 = vmatprep.subr.bf16.mxu0 0
    %537 = vmatpush1.bf16.xpose.msra.mxu0 0
    %538 = vmatprep.subr.bf16.mxu0 0
    %539 = vmatpush1.bf16.xpose.msra.mxu0 0
    %540 = vmatprep.subr.bf16.mxu0 0
    %541 = vmatpush1.bf16.xpose.msra.mxu0 %v524
    %542 = vmatprep.subr.bf16.mxu0 0
    %543 = vmatpush2.bf16.xpose.msra.mxu0 0
    %544 = vmatprep.subr.bf16.mxu0 0
    %545 = vmatpush2.bf16.xpose.msra.mxu0 0
    %546 = vmatprep.subr.bf16.mxu0 0
    %547 = vmatpush2.bf16.xpose.msra.mxu0 0
    %548 = vmatprep.subr.bf16.mxu0 0
    %549 = vmatpush2.bf16.xpose.msra.mxu0 0
    %550 = vmatprep.subr.bf16.mxu0 0
    %551 = vmatpush2.bf16.xpose.msra.mxu0 0
    %552 = vmatprep.subr.bf16.mxu0 0
    %553 = vmatpush2.bf16.xpose.msra.mxu0 0
    %554 = vmatprep.subr.bf16.mxu0 0
    %555 = vmatpush2.bf16.xpose.msra.mxu0 0
    %556 = vmatprep.subr.bf16.mxu0 0
    %557 = vmatpush2.bf16.xpose.msra.mxu0 0
    %558 = vmatprep.mubr.bf16.mxu0 0
    %559 = vmatmul.mubr.bf16.gmra.mxu0 %v521
    %v560 = vpop.f32.mrf.mxu0
    %v561 = vadd.f32 %v219, %v560
    %v562 = vpop.f32.mrf.mxu0
    %v563 = vpop.f32.mrf.mxu0
    %v564 = vpop.f32.mrf.mxu0
    %565 = vdwg.mxu0
    %vm566 = vcmask 64512
    %v567 = vsel %vm566, %v515, -inf
    %568 = vmax.xlane.f32.xlu0 %v567
    %v569 = vpop.xlane.xlu0 %568
    %v570 = vsel %vm566, %v561, -inf
    %571 = vmax.xlane.f32.xlu0 %v570
    %v572 = vpop.xlane.xlu0 %571
    %v573 = vsub.f32 %v515, %v569
    %v574 = vsub.f32 %v561, %v572
    %v575 = vmul.f32 %v573, 1.442695
    %v576 = vpow.pop %v575
    %v577 = vmul.f32 %v574, 1.442695
    %v578 = vpow.pop %v577
    %v579 = vsel %vm566, %v576, 0.0
    %580 = vadd.xlane.f32.xlu0 %v579
    %v581 = vpop.xlane.xlu0 %580
    %v582 = vsel %vm566, %v578, 0.0
    %583 = vadd.xlane.f32.xlu0 %v582
    %v584 = vpop.xlane.xlu0 %583
    %v585 = vrcp.pop %v581
    %v586 = vrcp.pop %v584
    %v587 = vmul.f32 %v576, %v585
    %v588 = vmul.f32 %v578, %v586
    %v589 = vmul.f32 %v462, %v200
    %v590 = vmul.f32 %v465, %v200
    %v591 = vpack.c.bf16 %v589, %v589
    %v592 = vpack.c.bf16 %v590, %v590
    %v593 = vpack.c.bf16 %v587, %v587
    %v594 = vpack.c.bf16 %v588, %v588
    %v595 = vmul.f32 %v334, %v205
    %v596 = vmul.f32 %v337, %v205
    %v597 = vpack.c.bf16 %v595, %v595
    %v598 = vpack.c.bf16 %v596, %v596
    %v600 = vsel %vm224, %v597, 0
    %602 = vmatprep.subr.bf16.mxu0 0
    %603 = vmatpush1.bf16.xpose.msra.mxu0 0
    %604 = vmatprep.subr.bf16.mxu0 0
    %605 = vmatpush1.bf16.xpose.msra.mxu0 0
    %606 = vmatprep.subr.bf16.mxu0 0
    %607 = vmatpush1.bf16.xpose.msra.mxu0 0
    %608 = vmatprep.subr.bf16.mxu0 0
    %609 = vmatpush1.bf16.xpose.msra.mxu0 0
    %610 = vmatprep.subr.bf16.mxu0 0
    %611 = vmatpush1.bf16.xpose.msra.mxu0 0
    %612 = vmatprep.subr.bf16.mxu0 0
    %613 = vmatpush1.bf16.xpose.msra.mxu0 0
    %614 = vmatprep.subr.bf16.mxu0 0
    %615 = vmatpush1.bf16.xpose.msra.mxu0 0
    %616 = vmatprep.subr.bf16.mxu0 0
    %617 = vmatpush1.bf16.xpose.msra.mxu0 %v478
    %618 = vmatprep.subr.bf16.mxu0 0
    %619 = vmatpush2.bf16.xpose.msra.mxu0 0
    %620 = vmatprep.subr.bf16.mxu0 0
    %621 = vmatpush2.bf16.xpose.msra.mxu0 0
    %622 = vmatprep.subr.bf16.mxu0 0
    %623 = vmatpush2.bf16.xpose.msra.mxu0 0
    %624 = vmatprep.subr.bf16.mxu0 0
    %625 = vmatpush2.bf16.xpose.msra.mxu0 0
    %626 = vmatprep.subr.bf16.mxu0 0
    %627 = vmatpush2.bf16.xpose.msra.mxu0 0
    %628 = vmatprep.subr.bf16.mxu0 0
    %629 = vmatpush2.bf16.xpose.msra.mxu0 0
    %630 = vmatprep.subr.bf16.mxu0 0
    %631 = vmatpush2.bf16.xpose.msra.mxu0 0
    %632 = vmatprep.subr.bf16.mxu0 0
    %633 = vmatpush2.bf16.xpose.msra.mxu0 0
    %634 = vmatprep.mubr.bf16.mxu0 0
    %635 = vmatmul.mubr.bf16.gmra.mxu0 %v600
    %v636 = vpop.f32.mrf.mxu0
    %v637 = vadd.f32 %v219, %v636
    %v638 = vpop.f32.mrf.mxu0
    %v639 = vpop.f32.mrf.mxu0
    %v640 = vpop.f32.mrf.mxu0
    %641 = vdwg.mxu0
    %v643 = vsel %vm224, %v598, 0
    %645 = vmatprep.subr.bf16.mxu0 0
    %646 = vmatpush1.bf16.xpose.msra.mxu0 0
    %647 = vmatprep.subr.bf16.mxu0 0
    %648 = vmatpush1.bf16.xpose.msra.mxu0 0
    %649 = vmatprep.subr.bf16.mxu0 0
    %650 = vmatpush1.bf16.xpose.msra.mxu0 0
    %651 = vmatprep.subr.bf16.mxu0 0
    %652 = vmatpush1.bf16.xpose.msra.mxu0 0
    %653 = vmatprep.subr.bf16.mxu0 0
    %654 = vmatpush1.bf16.xpose.msra.mxu0 0
    %655 = vmatprep.subr.bf16.mxu0 0
    %656 = vmatpush1.bf16.xpose.msra.mxu0 0
    %657 = vmatprep.subr.bf16.mxu0 0
    %658 = vmatpush1.bf16.xpose.msra.mxu0 0
    %659 = vmatprep.subr.bf16.mxu0 0
    %660 = vmatpush1.bf16.xpose.msra.mxu0 %v524
    %661 = vmatprep.subr.bf16.mxu0 0
    %662 = vmatpush2.bf16.xpose.msra.mxu0 0
    %663 = vmatprep.subr.bf16.mxu0 0
    %664 = vmatpush2.bf16.xpose.msra.mxu0 0
    %665 = vmatprep.subr.bf16.mxu0 0
    %666 = vmatpush2.bf16.xpose.msra.mxu0 0
    %667 = vmatprep.subr.bf16.mxu0 0
    %668 = vmatpush2.bf16.xpose.msra.mxu0 0
    %669 = vmatprep.subr.bf16.mxu0 0
    %670 = vmatpush2.bf16.xpose.msra.mxu0 0
    %671 = vmatprep.subr.bf16.mxu0 0
    %672 = vmatpush2.bf16.xpose.msra.mxu0 0
    %673 = vmatprep.subr.bf16.mxu0 0
    %674 = vmatpush2.bf16.xpose.msra.mxu0 0
    %675 = vmatprep.subr.bf16.mxu0 0
    %676 = vmatpush2.bf16.xpose.msra.mxu0 0
    %677 = vmatprep.mubr.bf16.mxu0 0
    %678 = vmatmul.mubr.bf16.gmra.mxu0 %v643
    %v679 = vpop.f32.mrf.mxu0
    %v680 = vadd.f32 %v219, %v679
    %v681 = vpop.f32.mrf.mxu0
    %v682 = vpop.f32.mrf.mxu0
    %v683 = vpop.f32.mrf.mxu0
    %684 = vdwg.mxu0
    %v685 = vsel %vm566, %v637, -inf
    %686 = vmax.xlane.f32.xlu0 %v685
    %v687 = vpop.xlane.xlu0 %686
    %v688 = vsel %vm566, %v680, -inf
    %689 = vmax.xlane.f32.xlu0 %v688
    %v690 = vpop.xlane.xlu0 %689
    %v691 = vsub.f32 %v637, %v687
    %v692 = vsub.f32 %v680, %v690
    %v693 = vmul.f32 %v691, 1.442695
    %v694 = vpow.pop %v693
    %v695 = vmul.f32 %v692, 1.442695
    %v696 = vpow.pop %v695
    %v697 = vsel %vm566, %v694, 0.0
    %698 = vadd.xlane.f32.xlu0 %v697
    %v699 = vpop.xlane.xlu0 %698
    %v700 = vsel %vm566, %v696, 0.0
    %701 = vadd.xlane.f32.xlu0 %v700
    %v702 = vpop.xlane.xlu0 %701
    %v703 = vrcp.pop %v699
    %v704 = vrcp.pop %v702
    %v705 = vmul.f32 %v694, %v703
    %v706 = vmul.f32 %v696, %v704
    %v707 = vmul.f32 %v462, %v205
    %v708 = vmul.f32 %v465, %v205
    %v709 = vpack.c.bf16 %v707, %v707
    %v710 = vpack.c.bf16 %v708, %v708
    %v711 = vpack.c.bf16 %v705, %v705
    %v712 = vpack.c.bf16 %v706, %v706
    %v714 = vsel %vm566, %v711, 0
    %vm716 = vcmask 1043456
    %v718 = vsel %vm716, %v709, 0
    %720 = vmatprep.subr.bf16.mxu0 0
    %721 = vmatpush1.bf16.msra.mxu0 0
    %722 = vmatprep.subr.bf16.mxu0 0
    %723 = vmatpush1.bf16.msra.mxu0 0
    %724 = vmatprep.subr.bf16.mxu0 0
    %725 = vmatpush1.bf16.msra.mxu0 0
    %726 = vmatprep.subr.bf16.mxu0 0
    %727 = vmatpush1.bf16.msra.mxu0 0
    %728 = vmatprep.subr.bf16.mxu0 0
    %729 = vmatpush1.bf16.msra.mxu0 0
    %730 = vmatprep.subr.bf16.mxu0 0
    %731 = vmatpush1.bf16.msra.mxu0 0
    %732 = vmatprep.subr.bf16.mxu0 0
    %733 = vmatpush1.bf16.msra.mxu0 0
    %734 = vmatprep.subr.bf16.mxu0 0
    %735 = vmatpush1.bf16.msra.mxu0 %v718
    %736 = vmatprep.subr.bf16.mxu0 0
    %737 = vmatpush2.bf16.msra.mxu0 0
    %738 = vmatprep.subr.bf16.mxu0 0
    %739 = vmatpush2.bf16.msra.mxu0 0
    %740 = vmatprep.subr.bf16.mxu0 0
    %741 = vmatpush2.bf16.msra.mxu0 0
    %742 = vmatprep.subr.bf16.mxu0 0
    %743 = vmatpush2.bf16.msra.mxu0 0
    %744 = vmatprep.subr.bf16.mxu0 0
    %745 = vmatpush2.bf16.msra.mxu0 0
    %746 = vmatprep.subr.bf16.mxu0 0
    %747 = vmatpush2.bf16.msra.mxu0 0
    %748 = vmatprep.subr.bf16.mxu0 0
    %749 = vmatpush2.bf16.msra.mxu0 0
    %750 = vmatprep.subr.bf16.mxu0 0
    %751 = vmatpush2.bf16.msra.mxu0 0
    %752 = vmatprep.mubr.bf16.mxu0 0
    %753 = vmatmul.mubr.bf16.gmra.mxu0 %v714
    %v754 = vpop.f32.mrf.mxu0
    %v755 = vadd.f32 0.0, %v754
    %v756 = vpop.f32.mrf.mxu0
    %v757 = vpop.f32.mrf.mxu0
    %v758 = vpop.f32.mrf.mxu0
    %759 = vdwg.mxu0
    %v761 = vsel %vm566, %v712, 0
    %v764 = vsel %vm716, %v710, 0
    %766 = vmatprep.subr.bf16.mxu0 0
    %767 = vmatpush1.bf16.msra.mxu0 0
    %768 = vmatprep.subr.bf16.mxu0 0
    %769 = vmatpush1.bf16.msra.mxu0 0
    %770 = vmatprep.subr.bf16.mxu0 0
    %771 = vmatpush1.bf16.msra.mxu0 0
    %772 = vmatprep.subr.bf16.mxu0 0
    %773 = vmatpush1.bf16.msra.mxu0 0
    %774 = vmatprep.subr.bf16.mxu0 0
    %775 = vmatpush1.bf16.msra.mxu0 0
    %776 = vmatprep.subr.bf16.mxu0 0
    %777 = vmatpush1.bf16.msra.mxu0 0
    %778 = vmatprep.subr.bf16.mxu0 0
    %779 = vmatpush1.bf16.msra.mxu0 0
    %780 = vmatprep.subr.bf16.mxu0 0
    %781 = vmatpush1.bf16.msra.mxu0 %v764
    %782 = vmatprep.subr.bf16.mxu0 0
    %783 = vmatpush2.bf16.msra.mxu0 0
    %784 = vmatprep.subr.bf16.mxu0 0
    %785 = vmatpush2.bf16.msra.mxu0 0
    %786 = vmatprep.subr.bf16.mxu0 0
    %787 = vmatpush2.bf16.msra.mxu0 0
    %788 = vmatprep.subr.bf16.mxu0 0
    %789 = vmatpush2.bf16.msra.mxu0 0
    %790 = vmatprep.subr.bf16.mxu0 0
    %791 = vmatpush2.bf16.msra.mxu0 0
    %792 = vmatprep.subr.bf16.mxu0 0
    %793 = vmatpush2.bf16.msra.mxu0 0
    %794 = vmatprep.subr.bf16.mxu0 0
    %795 = vmatpush2.bf16.msra.mxu0 0
    %796 = vmatprep.subr.bf16.mxu0 0
    %797 = vmatpush2.bf16.msra.mxu0 0
    %798 = vmatprep.mubr.bf16.mxu0 0
    %799 = vmatmul.mubr.bf16.gmra.mxu0 %v761
    %v800 = vpop.f32.mrf.mxu0
    %v801 = vadd.f32 0.0, %v800
    %v802 = vpop.f32.mrf.mxu0
    %v803 = vpop.f32.mrf.mxu0
    %v804 = vpop.f32.mrf.mxu0
    %805 = vdwg.mxu0
    %v807 = vsel %vm566, %v593, 0
    %v810 = vsel %vm716, %v591, 0
    %812 = vmatprep.subr.bf16.mxu0 0
    %813 = vmatpush1.bf16.msra.mxu0 0
    %814 = vmatprep.subr.bf16.mxu0 0
    %815 = vmatpush1.bf16.msra.mxu0 0
    %816 = vmatprep.subr.bf16.mxu0 0
    %817 = vmatpush1.bf16.msra.mxu0 0
    %818 = vmatprep.subr.bf16.mxu0 0
    %819 = vmatpush1.bf16.msra.mxu0 0
    %820 = vmatprep.subr.bf16.mxu0 0
    %821 = vmatpush1.bf16.msra.mxu0 0
    %822 = vmatprep.subr.bf16.mxu0 0
    %823 = vmatpush1.bf16.msra.mxu0 0
    %824 = vmatprep.subr.bf16.mxu0 0
    %825 = vmatpush1.bf16.msra.mxu0 0
    %826 = vmatprep.subr.bf16.mxu0 0
    %827 = vmatpush1.bf16.msra.mxu0 %v810
    %828 = vmatprep.subr.bf16.mxu0 0
    %829 = vmatpush2.bf16.msra.mxu0 0
    %830 = vmatprep.subr.bf16.mxu0 0
    %831 = vmatpush2.bf16.msra.mxu0 0
    %832 = vmatprep.subr.bf16.mxu0 0
    %833 = vmatpush2.bf16.msra.mxu0 0
    %834 = vmatprep.subr.bf16.mxu0 0
    %835 = vmatpush2.bf16.msra.mxu0 0
    %836 = vmatprep.subr.bf16.mxu0 0
    %837 = vmatpush2.bf16.msra.mxu0 0
    %838 = vmatprep.subr.bf16.mxu0 0
    %839 = vmatpush2.bf16.msra.mxu0 0
    %840 = vmatprep.subr.bf16.mxu0 0
    %841 = vmatpush2.bf16.msra.mxu0 0
    %842 = vmatprep.subr.bf16.mxu0 0
    %843 = vmatpush2.bf16.msra.mxu0 0
    %844 = vmatprep.mubr.bf16.mxu0 0
    %845 = vmatmul.mubr.bf16.gmra.mxu0 %v807
    %v846 = vpop.f32.mrf.mxu0
    %v847 = vadd.f32 %v755, %v846
    %v848 = vpop.f32.mrf.mxu0
    %v849 = vpop.f32.mrf.mxu0
    %v850 = vpop.f32.mrf.mxu0
    %851 = vdwg.mxu0
    %v853 = vsel %vm566, %v594, 0
    %v856 = vsel %vm716, %v592, 0
    %858 = vmatprep.subr.bf16.mxu0 0
    %859 = vmatpush1.bf16.msra.mxu0 0
    %860 = vmatprep.subr.bf16.mxu0 0
    %861 = vmatpush1.bf16.msra.mxu0 0
    %862 = vmatprep.subr.bf16.mxu0 0
    %863 = vmatpush1.bf16.msra.mxu0 0
    %864 = vmatprep.subr.bf16.mxu0 0
    %865 = vmatpush1.bf16.msra.mxu0 0
    %866 = vmatprep.subr.bf16.mxu0 0
    %867 = vmatpush1.bf16.msra.mxu0 0
    %868 = vmatprep.subr.bf16.mxu0 0
    %869 = vmatpush1.bf16.msra.mxu0 0
    %870 = vmatprep.subr.bf16.mxu0 0
    %871 = vmatpush1.bf16.msra.mxu0 0
    %872 = vmatprep.subr.bf16.mxu0 0
    %873 = vmatpush1.bf16.msra.mxu0 %v856
    %874 = vmatprep.subr.bf16.mxu0 0
    %875 = vmatpush2.bf16.msra.mxu0 0
    %876 = vmatprep.subr.bf16.mxu0 0
    %877 = vmatpush2.bf16.msra.mxu0 0
    %878 = vmatprep.subr.bf16.mxu0 0
    %879 = vmatpush2.bf16.msra.mxu0 0
    %880 = vmatprep.subr.bf16.mxu0 0
    %881 = vmatpush2.bf16.msra.mxu0 0
    %882 = vmatprep.subr.bf16.mxu0 0
    %883 = vmatpush2.bf16.msra.mxu0 0
    %884 = vmatprep.subr.bf16.mxu0 0
    %885 = vmatpush2.bf16.msra.mxu0 0
    %886 = vmatprep.subr.bf16.mxu0 0
    %887 = vmatpush2.bf16.msra.mxu0 0
    %888 = vmatprep.subr.bf16.mxu0 0
    %889 = vmatpush2.bf16.msra.mxu0 0
    %890 = vmatprep.mubr.bf16.mxu0 0
    %891 = vmatmul.mubr.bf16.gmra.mxu0 %v853
    %v892 = vpop.f32.mrf.mxu0
    %v893 = vadd.f32 %v801, %v892
    %v894 = vpop.f32.mrf.mxu0
    %v895 = vpop.f32.mrf.mxu0
    %v896 = vpop.f32.mrf.mxu0
    %897 = vdwg.mxu0
    %v898 = vmul.f32 %v334, %v210
    %v899 = vmul.f32 %v337, %v210
    %v900 = vpack.c.bf16 %v898, %v898
    %v901 = vpack.c.bf16 %v899, %v899
    %v903 = vsel %vm224, %v900, 0
    %905 = vmatprep.subr.bf16.mxu0 0
    %906 = vmatpush1.bf16.xpose.msra.mxu0 0
    %907 = vmatprep.subr.bf16.mxu0 0
    %908 = vmatpush1.bf16.xpose.msra.mxu0 0
    %909 = vmatprep.subr.bf16.mxu0 0
    %910 = vmatpush1.bf16.xpose.msra.mxu0 0
    %911 = vmatprep.subr.bf16.mxu0 0
    %912 = vmatpush1.bf16.xpose.msra.mxu0 0
    %913 = vmatprep.subr.bf16.mxu0 0
    %914 = vmatpush1.bf16.xpose.msra.mxu0 0
    %915 = vmatprep.subr.bf16.mxu0 0
    %916 = vmatpush1.bf16.xpose.msra.mxu0 0
    %917 = vmatprep.subr.bf16.mxu0 0
    %918 = vmatpush1.bf16.xpose.msra.mxu0 0
    %919 = vmatprep.subr.bf16.mxu0 0
    %920 = vmatpush1.bf16.xpose.msra.mxu0 %v478
    %921 = vmatprep.subr.bf16.mxu0 0
    %922 = vmatpush2.bf16.xpose.msra.mxu0 0
    %923 = vmatprep.subr.bf16.mxu0 0
    %924 = vmatpush2.bf16.xpose.msra.mxu0 0
    %925 = vmatprep.subr.bf16.mxu0 0
    %926 = vmatpush2.bf16.xpose.msra.mxu0 0
    %927 = vmatprep.subr.bf16.mxu0 0
    %928 = vmatpush2.bf16.xpose.msra.mxu0 0
    %929 = vmatprep.subr.bf16.mxu0 0
    %930 = vmatpush2.bf16.xpose.msra.mxu0 0
    %931 = vmatprep.subr.bf16.mxu0 0
    %932 = vmatpush2.bf16.xpose.msra.mxu0 0
    %933 = vmatprep.subr.bf16.mxu0 0
    %934 = vmatpush2.bf16.xpose.msra.mxu0 0
    %935 = vmatprep.subr.bf16.mxu0 0
    %936 = vmatpush2.bf16.xpose.msra.mxu0 0
    %937 = vmatprep.mubr.bf16.mxu0 0
    %938 = vmatmul.mubr.bf16.gmra.mxu0 %v903
    %v939 = vpop.f32.mrf.mxu0
    %v940 = vadd.f32 %v219, %v939
    %v941 = vpop.f32.mrf.mxu0
    %v942 = vpop.f32.mrf.mxu0
    %v943 = vpop.f32.mrf.mxu0
    %944 = vdwg.mxu0
    %v946 = vsel %vm224, %v901, 0
    %948 = vmatprep.subr.bf16.mxu0 0
    %949 = vmatpush1.bf16.xpose.msra.mxu0 0
    %950 = vmatprep.subr.bf16.mxu0 0
    %951 = vmatpush1.bf16.xpose.msra.mxu0 0
    %952 = vmatprep.subr.bf16.mxu0 0
    %953 = vmatpush1.bf16.xpose.msra.mxu0 0
    %954 = vmatprep.subr.bf16.mxu0 0
    %955 = vmatpush1.bf16.xpose.msra.mxu0 0
    %956 = vmatprep.subr.bf16.mxu0 0
    %957 = vmatpush1.bf16.xpose.msra.mxu0 0
    %958 = vmatprep.subr.bf16.mxu0 0
    %959 = vmatpush1.bf16.xpose.msra.mxu0 0
    %960 = vmatprep.subr.bf16.mxu0 0
    %961 = vmatpush1.bf16.xpose.msra.mxu0 0
    %962 = vmatprep.subr.bf16.mxu0 0
    %963 = vmatpush1.bf16.xpose.msra.mxu0 %v524
    %964 = vmatprep.subr.bf16.mxu0 0
    %965 = vmatpush2.bf16.xpose.msra.mxu0 0
    %966 = vmatprep.subr.bf16.mxu0 0
    %967 = vmatpush2.bf16.xpose.msra.mxu0 0
    %968 = vmatprep.subr.bf16.mxu0 0
    %969 = vmatpush2.bf16.xpose.msra.mxu0 0
    %970 = vmatprep.subr.bf16.mxu0 0
    %971 = vmatpush2.bf16.xpose.msra.mxu0 0
    %972 = vmatprep.subr.bf16.mxu0 0
    %973 = vmatpush2.bf16.xpose.msra.mxu0 0
    %974 = vmatprep.subr.bf16.mxu0 0
    %975 = vmatpush2.bf16.xpose.msra.mxu0 0
    %976 = vmatprep.subr.bf16.mxu0 0
    %977 = vmatpush2.bf16.xpose.msra.mxu0 0
    %978 = vmatprep.subr.bf16.mxu0 0
    %979 = vmatpush2.bf16.xpose.msra.mxu0 0
    %980 = vmatprep.mubr.bf16.mxu0 0
    %981 = vmatmul.mubr.bf16.gmra.mxu0 %v946
    %v982 = vpop.f32.mrf.mxu0
    %v983 = vadd.f32 %v219, %v982
    %v984 = vpop.f32.mrf.mxu0
    %v985 = vpop.f32.mrf.mxu0
    %v986 = vpop.f32.mrf.mxu0
    %987 = vdwg.mxu0
    %v988 = vsel %vm566, %v940, -inf
    %989 = vmax.xlane.f32.xlu0 %v988
    %v990 = vpop.xlane.xlu0 %989
    %v991 = vsel %vm566, %v983, -inf
    %992 = vmax.xlane.f32.xlu0 %v991
    %v993 = vpop.xlane.xlu0 %992
    %v994 = vsub.f32 %v940, %v990
    %v995 = vsub.f32 %v983, %v993
    %v996 = vmul.f32 %v994, 1.442695
    %v997 = vpow.pop %v996
    %v998 = vmul.f32 %v995, 1.442695
    %v999 = vpow.pop %v998
    %v1000 = vsel %vm566, %v997, 0.0
    %1001 = vadd.xlane.f32.xlu0 %v1000
    %v1002 = vpop.xlane.xlu0 %1001
    %v1003 = vsel %vm566, %v999, 0.0
    %1004 = vadd.xlane.f32.xlu0 %v1003
    %v1005 = vpop.xlane.xlu0 %1004
    %v1006 = vrcp.pop %v1002
    %v1007 = vrcp.pop %v1005
    %v1008 = vmul.f32 %v997, %v1006
    %v1009 = vmul.f32 %v999, %v1007
    %v1010 = vmul.f32 %v462, %v210
    %v1011 = vmul.f32 %v465, %v210
    %v1012 = vpack.c.bf16 %v1010, %v1010
    %v1013 = vpack.c.bf16 %v1011, %v1011
    %v1014 = vpack.c.bf16 %v1008, %v1008
    %v1015 = vpack.c.bf16 %v1009, %v1009
    %v1017 = vsel %vm566, %v1014, 0
    %v1020 = vsel %vm716, %v1012, 0
    %1022 = vmatprep.subr.bf16.mxu0 0
    %1023 = vmatpush1.bf16.msra.mxu0 0
    %1024 = vmatprep.subr.bf16.mxu0 0
    %1025 = vmatpush1.bf16.msra.mxu0 0
    %1026 = vmatprep.subr.bf16.mxu0 0
    %1027 = vmatpush1.bf16.msra.mxu0 0
    %1028 = vmatprep.subr.bf16.mxu0 0
    %1029 = vmatpush1.bf16.msra.mxu0 0
    %1030 = vmatprep.subr.bf16.mxu0 0
    %1031 = vmatpush1.bf16.msra.mxu0 0
    %1032 = vmatprep.subr.bf16.mxu0 0
    %1033 = vmatpush1.bf16.msra.mxu0 0
    %1034 = vmatprep.subr.bf16.mxu0 0
    %1035 = vmatpush1.bf16.msra.mxu0 0
    %1036 = vmatprep.subr.bf16.mxu0 0
    %1037 = vmatpush1.bf16.msra.mxu0 %v1020
    %1038 = vmatprep.subr.bf16.mxu0 0
    %1039 = vmatpush2.bf16.msra.mxu0 0
    %1040 = vmatprep.subr.bf16.mxu0 0
    %1041 = vmatpush2.bf16.msra.mxu0 0
    %1042 = vmatprep.subr.bf16.mxu0 0
    %1043 = vmatpush2.bf16.msra.mxu0 0
    %1044 = vmatprep.subr.bf16.mxu0 0
    %1045 = vmatpush2.bf16.msra.mxu0 0
    %1046 = vmatprep.subr.bf16.mxu0 0
    %1047 = vmatpush2.bf16.msra.mxu0 0
    %1048 = vmatprep.subr.bf16.mxu0 0
    %1049 = vmatpush2.bf16.msra.mxu0 0
    %1050 = vmatprep.subr.bf16.mxu0 0
    %1051 = vmatpush2.bf16.msra.mxu0 0
    %1052 = vmatprep.subr.bf16.mxu0 0
    %1053 = vmatpush2.bf16.msra.mxu0 0
    %1054 = vmatprep.mubr.bf16.mxu0 0
    %1055 = vmatmul.mubr.bf16.gmra.mxu0 %v1017
    %v1056 = vpop.f32.mrf.mxu0
    %v1057 = vadd.f32 0.0, %v1056
    %v1058 = vpop.f32.mrf.mxu0
    %v1059 = vpop.f32.mrf.mxu0
    %v1060 = vpop.f32.mrf.mxu0
    %1061 = vdwg.mxu0
    %v1063 = vsel %vm566, %v1015, 0
    %v1066 = vsel %vm716, %v1013, 0
    %1068 = vmatprep.subr.bf16.mxu0 0
    %1069 = vmatpush1.bf16.msra.mxu0 0
    %1070 = vmatprep.subr.bf16.mxu0 0
    %1071 = vmatpush1.bf16.msra.mxu0 0
    %1072 = vmatprep.subr.bf16.mxu0 0
    %1073 = vmatpush1.bf16.msra.mxu0 0
    %1074 = vmatprep.subr.bf16.mxu0 0
    %1075 = vmatpush1.bf16.msra.mxu0 0
    %1076 = vmatprep.subr.bf16.mxu0 0
    %1077 = vmatpush1.bf16.msra.mxu0 0
    %1078 = vmatprep.subr.bf16.mxu0 0
    %1079 = vmatpush1.bf16.msra.mxu0 0
    %1080 = vmatprep.subr.bf16.mxu0 0
    %1081 = vmatpush1.bf16.msra.mxu0 0
    %1082 = vmatprep.subr.bf16.mxu0 0
    %1083 = vmatpush1.bf16.msra.mxu0 %v1066
    %1084 = vmatprep.subr.bf16.mxu0 0
    %1085 = vmatpush2.bf16.msra.mxu0 0
    %1086 = vmatprep.subr.bf16.mxu0 0
    %1087 = vmatpush2.bf16.msra.mxu0 0
    %1088 = vmatprep.subr.bf16.mxu0 0
    %1089 = vmatpush2.bf16.msra.mxu0 0
    %1090 = vmatprep.subr.bf16.mxu0 0
    %1091 = vmatpush2.bf16.msra.mxu0 0
    %1092 = vmatprep.subr.bf16.mxu0 0
    %1093 = vmatpush2.bf16.msra.mxu0 0
    %1094 = vmatprep.subr.bf16.mxu0 0
    %1095 = vmatpush2.bf16.msra.mxu0 0
    %1096 = vmatprep.subr.bf16.mxu0 0
    %1097 = vmatpush2.bf16.msra.mxu0 0
    %1098 = vmatprep.subr.bf16.mxu0 0
    %1099 = vmatpush2.bf16.msra.mxu0 0
    %1100 = vmatprep.mubr.bf16.mxu0 0
    %1101 = vmatmul.mubr.bf16.gmra.mxu0 %v1063
    %v1102 = vpop.f32.mrf.mxu0
    %v1103 = vadd.f32 0.0, %v1102
    %v1104 = vpop.f32.mrf.mxu0
    %v1105 = vpop.f32.mrf.mxu0
    %v1106 = vpop.f32.mrf.mxu0
    %1107 = vdwg.mxu0
    %v1108 = vadd.f32 %v847, %v1057
    %v1109 = vadd.f32 %v893, %v1103
    %v1110 = vmul.f32 %v334, %v215
    %v1111 = vmul.f32 %v337, %v215
    %v1112 = vpack.c.bf16 %v1110, %v1110
    %v1113 = vpack.c.bf16 %v1111, %v1111
    %v1115 = vsel %vm224, %v1112, 0
    %1117 = vmatprep.subr.bf16.mxu0 0
    %1118 = vmatpush1.bf16.xpose.msra.mxu0 0
    %1119 = vmatprep.subr.bf16.mxu0 0
    %1120 = vmatpush1.bf16.xpose.msra.mxu0 0
    %1121 = vmatprep.subr.bf16.mxu0 0
    %1122 = vmatpush1.bf16.xpose.msra.mxu0 0
    %1123 = vmatprep.subr.bf16.mxu0 0
    %1124 = vmatpush1.bf16.xpose.msra.mxu0 0
    %1125 = vmatprep.subr.bf16.mxu0 0
    %1126 = vmatpush1.bf16.xpose.msra.mxu0 0
    %1127 = vmatprep.subr.bf16.mxu0 0
    %1128 = vmatpush1.bf16.xpose.msra.mxu0 0
    %1129 = vmatprep.subr.bf16.mxu0 0
    %1130 = vmatpush1.bf16.xpose.msra.mxu0 0
    %1131 = vmatprep.subr.bf16.mxu0 0
    %1132 = vmatpush1.bf16.xpose.msra.mxu0 %v478
    %1133 = vmatprep.subr.bf16.mxu0 0
    %1134 = vmatpush2.bf16.xpose.msra.mxu0 0
    %1135 = vmatprep.subr.bf16.mxu0 0
    %1136 = vmatpush2.bf16.xpose.msra.mxu0 0
    %1137 = vmatprep.subr.bf16.mxu0 0
    %1138 = vmatpush2.bf16.xpose.msra.mxu0 0
    %1139 = vmatprep.subr.bf16.mxu0 0
    %1140 = vmatpush2.bf16.xpose.msra.mxu0 0
    %1141 = vmatprep.subr.bf16.mxu0 0
    %1142 = vmatpush2.bf16.xpose.msra.mxu0 0
    %1143 = vmatprep.subr.bf16.mxu0 0
    %1144 = vmatpush2.bf16.xpose.msra.mxu0 0
    %1145 = vmatprep.subr.bf16.mxu0 0
    %1146 = vmatpush2.bf16.xpose.msra.mxu0 0
    %1147 = vmatprep.subr.bf16.mxu0 0
    %1148 = vmatpush2.bf16.xpose.msra.mxu0 0
    %1149 = vmatprep.mubr.bf16.mxu0 0
    %1150 = vmatmul.mubr.bf16.gmra.mxu0 %v1115
    %v1151 = vpop.f32.mrf.mxu0
    %v1152 = vadd.f32 %v219, %v1151
    %v1153 = vpop.f32.mrf.mxu0
    %v1154 = vpop.f32.mrf.mxu0
    %v1155 = vpop.f32.mrf.mxu0
    %1156 = vdwg.mxu0
    %v1158 = vsel %vm224, %v1113, 0
    %1160 = vmatprep.subr.bf16.mxu0 0
    %1161 = vmatpush1.bf16.xpose.msra.mxu0 0
    %1162 = vmatprep.subr.bf16.mxu0 0
    %1163 = vmatpush1.bf16.xpose.msra.mxu0 0
    %1164 = vmatprep.subr.bf16.mxu0 0
    %1165 = vmatpush1.bf16.xpose.msra.mxu0 0
    %1166 = vmatprep.subr.bf16.mxu0 0
    %1167 = vmatpush1.bf16.xpose.msra.mxu0 0
    %1168 = vmatprep.subr.bf16.mxu0 0
    %1169 = vmatpush1.bf16.xpose.msra.mxu0 0
    %1170 = vmatprep.subr.bf16.mxu0 0
    %1171 = vmatpush1.bf16.xpose.msra.mxu0 0
    %1172 = vmatprep.subr.bf16.mxu0 0
    %1173 = vmatpush1.bf16.xpose.msra.mxu0 0
    %1174 = vmatprep.subr.bf16.mxu0 0
    %1175 = vmatpush1.bf16.xpose.msra.mxu0 %v524
    %1176 = vmatprep.subr.bf16.mxu0 0
    %1177 = vmatpush2.bf16.xpose.msra.mxu0 0
    %1178 = vmatprep.subr.bf16.mxu0 0
    %1179 = vmatpush2.bf16.xpose.msra.mxu0 0
    %1180 = vmatprep.subr.bf16.mxu0 0
    %1181 = vmatpush2.bf16.xpose.msra.mxu0 0
    %1182 = vmatprep.subr.bf16.mxu0 0
    %1183 = vmatpush2.bf16.xpose.msra.mxu0 0
    %1184 = vmatprep.subr.bf16.mxu0 0
    %1185 = vmatpush2.bf16.xpose.msra.mxu0 0
    %1186 = vmatprep.subr.bf16.mxu0 0
    %1187 = vmatpush2.bf16.xpose.msra.mxu0 0
    %1188 = vmatprep.subr.bf16.mxu0 0
    %1189 = vmatpush2.bf16.xpose.msra.mxu0 0
    %1190 = vmatprep.subr.bf16.mxu0 0
    %1191 = vmatpush2.bf16.xpose.msra.mxu0 0
    %1192 = vmatprep.mubr.bf16.mxu0 0
    %1193 = vmatmul.mubr.bf16.gmra.mxu0 %v1158
    %v1194 = vpop.f32.mrf.mxu0
    %v1195 = vadd.f32 %v219, %v1194
    %v1196 = vpop.f32.mrf.mxu0
    %v1197 = vpop.f32.mrf.mxu0
    %v1198 = vpop.f32.mrf.mxu0
    %1199 = vdwg.mxu0
    %v1200 = vsel %vm566, %v1152, -inf
    %1201 = vmax.xlane.f32.xlu0 %v1200
    %v1202 = vpop.xlane.xlu0 %1201
    %v1203 = vsel %vm566, %v1195, -inf
    %1204 = vmax.xlane.f32.xlu0 %v1203
    %v1205 = vpop.xlane.xlu0 %1204
    %v1206 = vsub.f32 %v1152, %v1202
    %v1207 = vsub.f32 %v1195, %v1205
    %v1208 = vmul.f32 %v1206, 1.442695
    %v1209 = vpow.pop %v1208
    %v1210 = vmul.f32 %v1207, 1.442695
    %v1211 = vpow.pop %v1210
    %v1212 = vsel %vm566, %v1209, 0.0
    %1213 = vadd.xlane.f32.xlu0 %v1212
    %v1214 = vpop.xlane.xlu0 %1213
    %v1215 = vsel %vm566, %v1211, 0.0
    %1216 = vadd.xlane.f32.xlu0 %v1215
    %v1217 = vpop.xlane.xlu0 %1216
    %v1218 = vrcp.pop %v1214
    %v1219 = vrcp.pop %v1217
    %v1220 = vmul.f32 %v1209, %v1218
    %v1221 = vmul.f32 %v1211, %v1219
    %v1222 = vmul.f32 %v462, %v215
    %v1223 = vmul.f32 %v465, %v215
    %v1224 = vpack.c.bf16 %v1222, %v1222
    %v1225 = vpack.c.bf16 %v1223, %v1223
    %v1226 = vpack.c.bf16 %v1220, %v1220
    %v1227 = vpack.c.bf16 %v1221, %v1221
    %v1229 = vsel %vm566, %v1226, 0
    %v1232 = vsel %vm716, %v1224, 0
    %1234 = vmatprep.subr.bf16.mxu0 0
    %1235 = vmatpush1.bf16.msra.mxu0 0
    %1236 = vmatprep.subr.bf16.mxu0 0
    %1237 = vmatpush1.bf16.msra.mxu0 0
    %1238 = vmatprep.subr.bf16.mxu0 0
    %1239 = vmatpush1.bf16.msra.mxu0 0
    %1240 = vmatprep.subr.bf16.mxu0 0
    %1241 = vmatpush1.bf16.msra.mxu0 0
    %1242 = vmatprep.subr.bf16.mxu0 0
    %1243 = vmatpush1.bf16.msra.mxu0 0
    %1244 = vmatprep.subr.bf16.mxu0 0
    %1245 = vmatpush1.bf16.msra.mxu0 0
    %1246 = vmatprep.subr.bf16.mxu0 0
    %1247 = vmatpush1.bf16.msra.mxu0 0
    %1248 = vmatprep.subr.bf16.mxu0 0
    %1249 = vmatpush1.bf16.msra.mxu0 %v1232
    %1250 = vmatprep.subr.bf16.mxu0 0
    %1251 = vmatpush2.bf16.msra.mxu0 0
    %1252 = vmatprep.subr.bf16.mxu0 0
    %1253 = vmatpush2.bf16.msra.mxu0 0
    %1254 = vmatprep.subr.bf16.mxu0 0
    %1255 = vmatpush2.bf16.msra.mxu0 0
    %1256 = vmatprep.subr.bf16.mxu0 0
    %1257 = vmatpush2.bf16.msra.mxu0 0
    %1258 = vmatprep.subr.bf16.mxu0 0
    %1259 = vmatpush2.bf16.msra.mxu0 0
    %1260 = vmatprep.subr.bf16.mxu0 0
    %1261 = vmatpush2.bf16.msra.mxu0 0
    %1262 = vmatprep.subr.bf16.mxu0 0
    %1263 = vmatpush2.bf16.msra.mxu0 0
    %1264 = vmatprep.subr.bf16.mxu0 0
    %1265 = vmatpush2.bf16.msra.mxu0 0
    %1266 = vmatprep.mubr.bf16.mxu0 0
    %1267 = vmatmul.mubr.bf16.gmra.mxu0 %v1229
    %v1268 = vpop.f32.mrf.mxu0
    %v1269 = vadd.f32 0.0, %v1268
    %v1270 = vpop.f32.mrf.mxu0
    %v1271 = vpop.f32.mrf.mxu0
    %v1272 = vpop.f32.mrf.mxu0
    %1273 = vdwg.mxu0
    %v1275 = vsel %vm566, %v1227, 0
    %v1278 = vsel %vm716, %v1225, 0
    %1280 = vmatprep.subr.bf16.mxu0 0
    %1281 = vmatpush1.bf16.msra.mxu0 0
    %1282 = vmatprep.subr.bf16.mxu0 0
    %1283 = vmatpush1.bf16.msra.mxu0 0
    %1284 = vmatprep.subr.bf16.mxu0 0
    %1285 = vmatpush1.bf16.msra.mxu0 0
    %1286 = vmatprep.subr.bf16.mxu0 0
    %1287 = vmatpush1.bf16.msra.mxu0 0
    %1288 = vmatprep.subr.bf16.mxu0 0
    %1289 = vmatpush1.bf16.msra.mxu0 0
    %1290 = vmatprep.subr.bf16.mxu0 0
    %1291 = vmatpush1.bf16.msra.mxu0 0
    %1292 = vmatprep.subr.bf16.mxu0 0
    %1293 = vmatpush1.bf16.msra.mxu0 0
    %1294 = vmatprep.subr.bf16.mxu0 0
    %1295 = vmatpush1.bf16.msra.mxu0 %v1278
    %1296 = vmatprep.subr.bf16.mxu0 0
    %1297 = vmatpush2.bf16.msra.mxu0 0
    %1298 = vmatprep.subr.bf16.mxu0 0
    %1299 = vmatpush2.bf16.msra.mxu0 0
    %1300 = vmatprep.subr.bf16.mxu0 0
    %1301 = vmatpush2.bf16.msra.mxu0 0
    %1302 = vmatprep.subr.bf16.mxu0 0
    %1303 = vmatpush2.bf16.msra.mxu0 0
    %1304 = vmatprep.subr.bf16.mxu0 0
    %1305 = vmatpush2.bf16.msra.mxu0 0
    %1306 = vmatprep.subr.bf16.mxu0 0
    %1307 = vmatpush2.bf16.msra.mxu0 0
    %1308 = vmatprep.subr.bf16.mxu0 0
    %1309 = vmatpush2.bf16.msra.mxu0 0
    %1310 = vmatprep.subr.bf16.mxu0 0
    %1311 = vmatpush2.bf16.msra.mxu0 0
    %1312 = vmatprep.mubr.bf16.mxu0 0
    %1313 = vmatmul.mubr.bf16.gmra.mxu0 %v1275
    %v1314 = vpop.f32.mrf.mxu0
    %v1315 = vadd.f32 0.0, %v1314
    %v1316 = vpop.f32.mrf.mxu0
    %v1317 = vpop.f32.mrf.mxu0
    %v1318 = vpop.f32.mrf.mxu0
    %1319 = vdwg.mxu0
    %v1320 = vadd.f32 %v1108, %v1269
    %v1321 = vadd.f32 %v1109, %v1315
    %v1322 = vadd.f32 %v220, %v1320
    %v1323 = vadd.f32 %v221, %v1321
    %v1324 = vld [vmem:[#allocation8] sm:$0x1]
    %v1325 = vld [vmem:[#allocation10] sm:$0x1]
    %v1326 = vsel %vm224, %v1322, 0.0
    %1327 = vadd.xlane.f32.xlu0 %v1326
    %v1328 = vpop.xlane.xlu0 %1327
    %v1329 = vsel %vm224, %v1323, 0.0
    %1330 = vadd.xlane.f32.xlu0 %v1329
    %v1331 = vpop.xlane.xlu0 %1330
    %v1332 = vmul.f32 %v1328, %v231
    %v1333 = vmul.f32 %v1331, %v231
    %v1334 = vmul.f32 %v1322, %v1322
    %v1335 = vmul.f32 %v1323, %v1323
    %v1336 = vsel %vm224, %v1334, 0.0
    %1337 = vadd.xlane.f32.xlu0 %v1336
    %v1338 = vpop.xlane.xlu0 %1337
    %v1339 = vsel %vm224, %v1335, 0.0
    %1340 = vadd.xlane.f32.xlu0 %v1339
    %v1341 = vpop.xlane.xlu0 %1340
    %v1342 = vmul.f32 %v1338, %v231
    %v1343 = vmul.f32 %v1341, %v231
    %v1344 = vmul.f32 %v1332, %v1332
    %v1345 = vmul.f32 %v1333, %v1333
    %v1346 = vsub.f32 %v1342, %v1344
    %v1347 = vsub.f32 %v1343, %v1345
    %v1348 = vsub.f32 %v1322, %v1332
    %v1349 = vsub.f32 %v1323, %v1333
    %v1350 = vadd.f32 %v1346, 1e-05
    %v1351 = vadd.f32 %v1347, 1e-05
    %v1352 = vrsqrt.pop %v1350
    %v1353 = vrsqrt.pop %v1351
    %v1354 = vmul.f32 %v1348, %v1352
    %v1355 = vmul.f32 %v1349, %v1353
    %v1357 = vlaneseq
    %v1358 = vshrl.u32 %v1357, 7
    %v1359 = vsub.s32 0, %v1358
    %v1360 = vrot.slane %v1324, %v1359
    %v1362 = vmul.f32 %v1354, %v1360
    %v1363 = vmul.f32 %v1355, %v1360
    %v1365 = vlaneseq
    %v1366 = vshrl.u32 %v1365, 7
    %v1367 = vsub.s32 0, %v1366
    %v1368 = vrot.slane %v1325, %v1367
    %v1370 = vadd.f32 %v1362, %v1368
    %v1371 = vadd.f32 %v1363, %v1368
    %v1372 = vpack.c.bf16 %v1371, %v1370
    %v1373 = vld [vmem:[%s23] sm:$0xf]
    %v1374 = vld [vmem:[%s23 + $0x4] sm:$0xf]
    %v1375 = vld [vmem:[%s23 + $0x8] sm:$0xf]
    %v1376 = vld [vmem:[%s23 + $0xc] sm:$0xf]
    %v1377 = vld [vmem:[%s25] sm:$0x1]
    %v1379 = vlaneseq
    %v1380 = vshrl.u32 %v1379, 7
    %v1381 = vsub.s32 0, %v1380
    %v1382 = vrot.slane %v1377, %v1381
    %v1388 = vunpack.c.l.b16 %v1373
    %v1389 = vunpack.c.l.b16 %v1374
    %v1390 = vunpack.c.l.b16 %v1375
    %v1391 = vunpack.c.l.b16 %v1376
    %v1392 = vpack.c.b16 %v1389, %v1388
    %v1393 = vpack.c.b16 %v1391, %v1390
    %v1397 = vsel %vm224, %v1372, 0
    %1399 = vmatprep.subr.bf16.mxu0 0
    %1400 = vmatpush1.bf16.msra.mxu0 0
    %1401 = vmatprep.subr.bf16.mxu0 0
    %1402 = vmatpush1.bf16.msra.mxu0 0
    %1403 = vmatprep.subr.bf16.mxu0 0
    %1404 = vmatpush1.bf16.msra.mxu0 0
    %1405 = vmatprep.subr.bf16.mxu0 0
    %1406 = vmatpush1.bf16.msra.mxu0 0
    %1407 = vmatprep.subr.bf16.mxu0 0
    %1408 = vmatpush1.bf16.msra.mxu0 0
    %1409 = vmatprep.subr.bf16.mxu0 0
    %1410 = vmatpush1.bf16.msra.mxu0 0
    %1411 = vmatprep.subr.bf16.mxu0 0
    %1412 = vmatpush1.bf16.msra.mxu0 %v1393
    %1413 = vmatprep.subr.bf16.mxu0 0
    %1414 = vmatpush1.bf16.msra.mxu0 %v1392
    %1415 = vmatprep.subr.bf16.mxu0 0
    %1416 = vmatpush2.bf16.msra.mxu0 0
    %1417 = vmatprep.subr.bf16.mxu0 0
    %1418 = vmatpush2.bf16.msra.mxu0 0
    %1419 = vmatprep.subr.bf16.mxu0 0
    %1420 = vmatpush2.bf16.msra.mxu0 0
    %1421 = vmatprep.subr.bf16.mxu0 0
    %1422 = vmatpush2.bf16.msra.mxu0 0
    %1423 = vmatprep.subr.bf16.mxu0 0
    %1424 = vmatpush2.bf16.msra.mxu0 0
    %1425 = vmatprep.subr.bf16.mxu0 0
    %1426 = vmatpush2.bf16.msra.mxu0 0
    %1427 = vmatprep.subr.bf16.mxu0 0
    %1428 = vmatpush2.bf16.msra.mxu0 0
    %1429 = vmatprep.subr.bf16.mxu0 0
    %1430 = vmatpush2.bf16.msra.mxu0 0
    %1431 = vmatprep.mubr.bf16.mxu0 0
    %1432 = vmatmul.mubr.bf16.gmra.mxu0 %v1397
    %v1433 = vpop.f32.mrf.mxu0
    %v1434 = vadd.f32 %v1382, %v1433
    %v1435 = vpop.f32.mrf.mxu0
    %v1436 = vpop.f32.mrf.mxu0
    %v1437 = vadd.f32 %v1382, %v1436
    %v1438 = vpop.f32.mrf.mxu0
    %1439 = vdwg.mxu0
    %v1440 = vmul.f32 %v1434, 0.5
    %v1441 = vmul.f32 %v1437, 0.5
    %v1442 = vmul.f32 %v1434, 0.70710677
    %v1443 = vmul.f32 %v1437, 0.70710677
    %v1444 = verf.f32.pop %v1442
    %v1445 = verf.f32.pop %v1443
    %v1446 = vadd.f32 %v1444, 1.0
    %v1447 = vadd.f32 %v1445, 1.0
    %v1448 = vmul.f32 %v1440, %v1446
    %v1449 = vmul.f32 %v1441, %v1447
    %v1450 = vpack.c.bf16 %v1449, %v1448
    %v1451 = vld [vmem:[%s27] sm:$0xf]
    %v1452 = vld [vmem:[%s27 + $0x4] sm:$0xf]
    %v1453 = vld [vmem:[%s27 + $0x8] sm:$0xf]
    %v1454 = vld [vmem:[%s27 + $0xc] sm:$0xf]
    %v1455 = vld [vmem:[%s27 + $0x10] sm:$0xf]
    %v1456 = vld [vmem:[%s27 + $0x14] sm:$0xf]
    %v1457 = vld [vmem:[%s27 + $0x18] sm:$0xf]
    %v1458 = vld [vmem:[%s27 + $0x1c] sm:$0xf]
    %v1459 = vld [vmem:[%s27 + $0x20] sm:$0xf]
    %v1460 = vld [vmem:[%s27 + $0x24] sm:$0xf]
    %v1461 = vld [vmem:[%s27 + $0x28] sm:$0xf]
    %v1462 = vld [vmem:[%s27 + $0x2c] sm:$0xf]
    %v1463 = vld [vmem:[%s27 + $0x30] sm:$0xf]
    %v1464 = vld [vmem:[%s27 + $0x34] sm:$0xf]
    %v1465 = vld [vmem:[%s27 + $0x38] sm:$0xf]
    %v1466 = vld [vmem:[%s27 + $0x3c] sm:$0xf]
    %v1467 = vld [vmem:[%s29] sm:$0x1]
    %v1469 = vlaneseq
    %v1470 = vshrl.u32 %v1469, 7
    %v1471 = vsub.s32 0, %v1470
    %v1472 = vrot.slane %v1467, %v1471
    %v1490 = vunpack.c.l.b16 %v1451
    %v1491 = vunpack.c.l.b16 %v1452
    %v1492 = vunpack.c.l.b16 %v1453
    %v1493 = vunpack.c.l.b16 %v1454
    %v1494 = vunpack.c.l.b16 %v1455
    %v1495 = vunpack.c.l.b16 %v1456
    %v1496 = vunpack.c.l.b16 %v1457
    %v1497 = vunpack.c.l.b16 %v1458
    %v1498 = vunpack.c.l.b16 %v1459
    %v1499 = vunpack.c.l.b16 %v1460
    %v1500 = vunpack.c.l.b16 %v1461
    %v1501 = vunpack.c.l.b16 %v1462
    %v1502 = vunpack.c.l.b16 %v1463
    %v1503 = vunpack.c.l.b16 %v1464
    %v1504 = vunpack.c.l.b16 %v1465
    %v1505 = vunpack.c.l.b16 %v1466
    %v1506 = vpack.c.b16 %v1491, %v1490
    %v1507 = vpack.c.b16 %v1493, %v1492
    %v1508 = vpack.c.b16 %v1495, %v1494
    %v1509 = vpack.c.b16 %v1497, %v1496
    %v1510 = vpack.c.b16 %v1499, %v1498
    %v1511 = vpack.c.b16 %v1501, %v1500
    %v1512 = vpack.c.b16 %v1503, %v1502
    %v1513 = vpack.c.b16 %v1505, %v1504
    %1522 = vmatprep.subr.bf16.mxu0 0
    %1523 = vmatpush1.bf16.msra.mxu0 %v1513
    %1524 = vmatprep.subr.bf16.mxu0 0
    %1525 = vmatpush1.bf16.msra.mxu0 %v1512
    %1526 = vmatprep.subr.bf16.mxu0 0
    %1527 = vmatpush1.bf16.msra.mxu0 %v1511
    %1528 = vmatprep.subr.bf16.mxu0 0
    %1529 = vmatpush1.bf16.msra.mxu0 %v1510
    %1530 = vmatprep.subr.bf16.mxu0 0
    %1531 = vmatpush1.bf16.msra.mxu0 %v1509
    %1532 = vmatprep.subr.bf16.mxu0 0
    %1533 = vmatpush1.bf16.msra.mxu0 %v1508
    %1534 = vmatprep.subr.bf16.mxu0 0
    %1535 = vmatpush1.bf16.msra.mxu0 %v1507
    %1536 = vmatprep.subr.bf16.mxu0 0
    %1537 = vmatpush1.bf16.msra.mxu0 %v1506
    %1538 = vmatprep.subr.bf16.mxu0 0
    %1539 = vmatpush2.bf16.msra.mxu0 0
    %1540 = vmatprep.subr.bf16.mxu0 0
    %1541 = vmatpush2.bf16.msra.mxu0 0
    %1542 = vmatprep.subr.bf16.mxu0 0
    %1543 = vmatpush2.bf16.msra.mxu0 0
    %1544 = vmatprep.subr.bf16.mxu0 0
    %1545 = vmatpush2.bf16.msra.mxu0 0
    %1546 = vmatprep.subr.bf16.mxu0 0
    %1547 = vmatpush2.bf16.msra.mxu0 0
    %1548 = vmatprep.subr.bf16.mxu0 0
    %1549 = vmatpush2.bf16.msra.mxu0 0
    %1550 = vmatprep.subr.bf16.mxu0 0
    %1551 = vmatpush2.bf16.msra.mxu0 0
    %1552 = vmatprep.subr.bf16.mxu0 0
    %1553 = vmatpush2.bf16.msra.mxu0 0
    %1554 = vmatprep.mubr.bf16.mxu0 0
    %1555 = vmatmul.mubr.bf16.gmra.mxu0 %v1450
    %v1556 = vpop.f32.mrf.mxu0
    %v1557 = vadd.f32 %v1472, %v1556
    %v1558 = vpop.f32.mrf.mxu0
    %v1559 = vpop.f32.mrf.mxu0
    %v1560 = vadd.f32 %v1472, %v1559
    %v1561 = vpop.f32.mrf.mxu0
    %1562 = vdwg.mxu0
    %v1563 = vadd.f32 %v1322, %v1557
    %v1564 = vadd.f32 %v1323, %v1560
    %v1565 = vld [vmem:[%s31] sm:$0x1]
    %v1566 = vld [vmem:[%s33] sm:$0x1]
    %v1567 = vsel %vm224, %v1563, 0.0
    %1568 = vadd.xlane.f32.xlu0 %v1567
    %v1569 = vpop.xlane.xlu0 %1568
    %v1570 = vsel %vm224, %v1564, 0.0
    %1571 = vadd.xlane.f32.xlu0 %v1570
    %v1572 = vpop.xlane.xlu0 %1571
    %v1573 = vmul.f32 %v1569, %v231
    %v1574 = vmul.f32 %v1572, %v231
    %v1575 = vmul.f32 %v1563, %v1563
    %v1576 = vmul.f32 %v1564, %v1564
    %v1577 = vsel %vm224, %v1575, 0.0
    %1578 = vadd.xlane.f32.xlu0 %v1577
    %v1579 = vpop.xlane.xlu0 %1578
    %v1580 = vsel %vm224, %v1576, 0.0
    %1581 = vadd.xlane.f32.xlu0 %v1580
    %v1582 = vpop.xlane.xlu0 %1581
    %v1583 = vmul.f32 %v1579, %v231
    %v1584 = vmul.f32 %v1582, %v231
    %v1585 = vmul.f32 %v1573, %v1573
    %v1586 = vmul.f32 %v1574, %v1574
    %v1587 = vsub.f32 %v1583, %v1585
    %v1588 = vsub.f32 %v1584, %v1586
    %v1589 = vsub.f32 %v1563, %v1573
    %v1590 = vsub.f32 %v1564, %v1574
    %v1591 = vadd.f32 %v1587, 1e-05
    %v1592 = vadd.f32 %v1588, 1e-05
    %v1593 = vrsqrt.pop %v1591
    %v1594 = vrsqrt.pop %v1592
    %v1595 = vmul.f32 %v1589, %v1593
    %v1596 = vmul.f32 %v1590, %v1594
    %v1598 = vlaneseq
    %v1599 = vshrl.u32 %v1598, 7
    %v1600 = vsub.s32 0, %v1599
    %v1601 = vrot.slane %v1565, %v1600
    %v1603 = vmul.f32 %v1595, %v1601
    %v1604 = vmul.f32 %v1596, %v1601
    %v1606 = vlaneseq
    %v1607 = vshrl.u32 %v1606, 7
    %v1608 = vsub.s32 0, %v1607
    %v1609 = vrot.slane %v1566, %v1608
    %v1611 = vadd.f32 %v1603, %v1609
    %v1612 = vadd.f32 %v1604, %v1609
    %v1613 = vpack.c.bf16 %v1612, %v1611
    %v1614 = vld [vmem:[%s35] sm:$0xf]
    %v1615 = vld [vmem:[%s35 + $0x4] sm:$0xf]
    %v1616 = vld [vmem:[%s35 + $0x8] sm:$0xf]
    %v1617 = vld [vmem:[%s35 + $0xc] sm:$0xf]
    %v1618 = vld [vmem:[%s37] sm:$0x1]
    %v1620 = vlaneseq
    %v1621 = vshrl.u32 %v1620, 7
    %v1622 = vsub.s32 0, %v1621
    %v1623 = vrot.slane %v1618, %v1622
    %v1629 = vunpack.c.l.b16 %v1614
    %v1630 = vunpack.c.l.b16 %v1615
    %v1631 = vunpack.c.l.b16 %v1616
    %v1632 = vunpack.c.l.b16 %v1617
    %v1633 = vpack.c.b16 %v1630, %v1629
    %v1634 = vpack.c.b16 %v1632, %v1631
    %v1638 = vsel %vm224, %v1613, 0
    %1640 = vmatprep.subr.bf16.mxu0 0
    %1641 = vmatpush1.bf16.msra.mxu0 0
    %1642 = vmatprep.subr.bf16.mxu0 0
    %1643 = vmatpush1.bf16.msra.mxu0 0
    %1644 = vmatprep.subr.bf16.mxu0 0
    %1645 = vmatpush1.bf16.msra.mxu0 0
    %1646 = vmatprep.subr.bf16.mxu0 0
    %1647 = vmatpush1.bf16.msra.mxu0 0
    %1648 = vmatprep.subr.bf16.mxu0 0
    %1649 = vmatpush1.bf16.msra.mxu0 0
    %1650 = vmatprep.subr.bf16.mxu0 0
    %1651 = vmatpush1.bf16.msra.mxu0 0
    %1652 = vmatprep.subr.bf16.mxu0 0
    %1653 = vmatpush1.bf16.msra.mxu0 %v1634
    %1654 = vmatprep.subr.bf16.mxu0 0
    %1655 = vmatpush1.bf16.msra.mxu0 %v1633
    %1656 = vmatprep.subr.bf16.mxu0 0
    %1657 = vmatpush2.bf16.msra.mxu0 0
    %1658 = vmatprep.subr.bf16.mxu0 0
    %1659 = vmatpush2.bf16.msra.mxu0 0
    %1660 = vmatprep.subr.bf16.mxu0 0
    %1661 = vmatpush2.bf16.msra.mxu0 0
    %1662 = vmatprep.subr.bf16.mxu0 0
    %1663 = vmatpush2.bf16.msra.mxu0 0
    %1664 = vmatprep.subr.bf16.mxu0 0
    %1665 = vmatpush2.bf16.msra.mxu0 0
    %1666 = vmatprep.subr.bf16.mxu0 0
    %1667 = vmatpush2.bf16.msra.mxu0 0
    %1668 = vmatprep.subr.bf16.mxu0 0
    %1669 = vmatpush2.bf16.msra.mxu0 0
    %1670 = vmatprep.subr.bf16.mxu0 0
    %1671 = vmatpush2.bf16.msra.mxu0 0
    %1672 = vmatprep.mubr.bf16.mxu0 0
    %1673 = vmatmul.mubr.bf16.gmra.mxu0 %v1638
    %v1674 = vpop.f32.mrf.mxu0
    %v1675 = vadd.f32 %v1623, %v1674
    %v1676 = vpop.f32.mrf.mxu0
    %v1677 = vpop.f32.mrf.mxu0
    %v1678 = vadd.f32 %v1623, %v1677
    %v1679 = vpop.f32.mrf.mxu0
    %1680 = vdwg.mxu0
    %v1681 = vld [vmem:[%s39] sm:$0xf]
    %v1682 = vld [vmem:[%s39 + $0x4] sm:$0xf]
    %v1683 = vld [vmem:[%s39 + $0x8] sm:$0xf]
    %v1684 = vld [vmem:[%s39 + $0xc] sm:$0xf]
    %v1685 = vld [vmem:[%s41] sm:$0x1]
    %v1687 = vlaneseq
    %v1688 = vshrl.u32 %v1687, 7
    %v1689 = vsub.s32 0, %v1688
    %v1690 = vrot.slane %v1685, %v1689
    %v1696 = vunpack.c.l.b16 %v1681
    %v1697 = vunpack.c.l.b16 %v1682
    %v1698 = vunpack.c.l.b16 %v1683
    %v1699 = vunpack.c.l.b16 %v1684
    %v1700 = vpack.c.b16 %v1697, %v1696
    %v1701 = vpack.c.b16 %v1699, %v1698
    %1704 = vmatprep.subr.bf16.mxu0 0
    %1705 = vmatpush1.bf16.msra.mxu0 0
    %1706 = vmatprep.subr.bf16.mxu0 0
    %1707 = vmatpush1.bf16.msra.mxu0 0
    %1708 = vmatprep.subr.bf16.mxu0 0
    %1709 = vmatpush1.bf16.msra.mxu0 0
    %1710 = vmatprep.subr.bf16.mxu0 0
    %1711 = vmatpush1.bf16.msra.mxu0 0
    %1712 = vmatprep.subr.bf16.mxu0 0
    %1713 = vmatpush1.bf16.msra.mxu0 0
    %1714 = vmatprep.subr.bf16.mxu0 0
    %1715 = vmatpush1.bf16.msra.mxu0 0
    %1716 = vmatprep.subr.bf16.mxu0 0
    %1717 = vmatpush1.bf16.msra.mxu0 %v1701
    %1718 = vmatprep.subr.bf16.mxu0 0
    %1719 = vmatpush1.bf16.msra.mxu0 %v1700
    %1720 = vmatprep.subr.bf16.mxu0 0
    %1721 = vmatpush2.bf16.msra.mxu0 0
    %1722 = vmatprep.subr.bf16.mxu0 0
    %1723 = vmatpush2.bf16.msra.mxu0 0
    %1724 = vmatprep.subr.bf16.mxu0 0
    %1725 = vmatpush2.bf16.msra.mxu0 0
    %1726 = vmatprep.subr.bf16.mxu0 0
    %1727 = vmatpush2.bf16.msra.mxu0 0
    %1728 = vmatprep.subr.bf16.mxu0 0
    %1729 = vmatpush2.bf16.msra.mxu0 0
    %1730 = vmatprep.subr.bf16.mxu0 0
    %1731 = vmatpush2.bf16.msra.mxu0 0
    %1732 = vmatprep.subr.bf16.mxu0 0
    %1733 = vmatpush2.bf16.msra.mxu0 0
    %1734 = vmatprep.subr.bf16.mxu0 0
    %1735 = vmatpush2.bf16.msra.mxu0 0
    %1736 = vmatprep.mubr.bf16.mxu0 0
    %1737 = vmatmul.mubr.bf16.gmra.mxu0 %v1638
    %v1738 = vpop.f32.mrf.mxu0
    %v1739 = vadd.f32 %v1690, %v1738
    %v1740 = vpop.f32.mrf.mxu0
    %v1741 = vpop.f32.mrf.mxu0
    %v1742 = vadd.f32 %v1690, %v1741
    %v1743 = vpop.f32.mrf.mxu0
    %1744 = vdwg.mxu0
    %v1745 = vld [vmem:[%s43] sm:$0xf]
    %v1746 = vld [vmem:[%s43 + $0x4] sm:$0xf]
    %v1747 = vld [vmem:[%s43 + $0x8] sm:$0xf]
    %v1748 = vld [vmem:[%s43 + $0xc] sm:$0xf]
    %v1749 = vld [vmem:[%s45] sm:$0x1]
    %v1751 = vlaneseq
    %v1752 = vshrl.u32 %v1751, 7
    %v1753 = vsub.s32 0, %v1752
    %v1754 = vrot.slane %v1749, %v1753
    %v1760 = vunpack.c.l.b16 %v1745
    %v1761 = vunpack.c.l.b16 %v1746
    %v1762 = vunpack.c.l.b16 %v1747
    %v1763 = vunpack.c.l.b16 %v1748
    %v1764 = vpack.c.b16 %v1761, %v1760
    %v1765 = vpack.c.b16 %v1763, %v1762
    %1768 = vmatprep.subr.bf16.mxu0 0
    %1769 = vmatpush1.bf16.msra.mxu0 0
    %1770 = vmatprep.subr.bf16.mxu0 0
    %1771 = vmatpush1.bf16.msra.mxu0 0
    %1772 = vmatprep.subr.bf16.mxu0 0
    %1773 = vmatpush1.bf16.msra.mxu0 0
    %1774 = vmatprep.subr.bf16.mxu0 0
    %1775 = vmatpush1.bf16.msra.mxu0 0
    %1776 = vmatprep.subr.bf16.mxu0 0
    %1777 = vmatpush1.bf16.msra.mxu0 0
    %1778 = vmatprep.subr.bf16.mxu0 0
    %1779 = vmatpush1.bf16.msra.mxu0 0
    %1780 = vmatprep.subr.bf16.mxu0 0
    %1781 = vmatpush1.bf16.msra.mxu0 %v1765
    %1782 = vmatprep.subr.bf16.mxu0 0
    %1783 = vmatpush1.bf16.msra.mxu0 %v1764
    %1784 = vmatprep.subr.bf16.mxu0 0
    %1785 = vmatpush2.bf16.msra.mxu0 0
    %1786 = vmatprep.subr.bf16.mxu0 0
    %1787 = vmatpush2.bf16.msra.mxu0 0
    %1788 = vmatprep.subr.bf16.mxu0 0
    %1789 = vmatpush2.bf16.msra.mxu0 0
    %1790 = vmatprep.subr.bf16.mxu0 0
    %1791 = vmatpush2.bf16.msra.mxu0 0
    %1792 = vmatprep.subr.bf16.mxu0 0
    %1793 = vmatpush2.bf16.msra.mxu0 0
    %1794 = vmatprep.subr.bf16.mxu0 0
    %1795 = vmatpush2.bf16.msra.mxu0 0
    %1796 = vmatprep.subr.bf16.mxu0 0
    %1797 = vmatpush2.bf16.msra.mxu0 0
    %1798 = vmatprep.subr.bf16.mxu0 0
    %1799 = vmatpush2.bf16.msra.mxu0 0
    %1800 = vmatprep.mubr.bf16.mxu0 0
    %1801 = vmatmul.mubr.bf16.gmra.mxu0 %v1638
    %v1802 = vpop.f32.mrf.mxu0
    %v1803 = vadd.f32 %v1754, %v1802
    %v1804 = vpop.f32.mrf.mxu0
    %v1805 = vpop.f32.mrf.mxu0
    %v1806 = vadd.f32 %v1754, %v1805
    %v1807 = vpop.f32.mrf.mxu0
    %1808 = vdwg.mxu0
    %v1809 = vpack.c.bf16 %v1739, %v1739
    %v1810 = vpack.c.bf16 %v1742, %v1742
    %v1811 = vmul.f32 %v1675, %v200
    %v1812 = vmul.f32 %v1678, %v200
    %v1813 = vpack.c.bf16 %v1811, %v1811
    %v1814 = vpack.c.bf16 %v1812, %v1812
    %v1816 = vsel %vm224, %v1813, 0
    %v1819 = vsel %vm224, %v1809, 0
    %1821 = vmatprep.subr.bf16.mxu0 0
    %1822 = vmatpush1.bf16.xpose.msra.mxu0 0
    %1823 = vmatprep.subr.bf16.mxu0 0
    %1824 = vmatpush1.bf16.xpose.msra.mxu0 0
    %1825 = vmatprep.subr.bf16.mxu0 0
    %1826 = vmatpush1.bf16.xpose.msra.mxu0 0
    %1827 = vmatprep.subr.bf16.mxu0 0
    %1828 = vmatpush1.bf16.xpose.msra.mxu0 0
    %1829 = vmatprep.subr.bf16.mxu0 0
    %1830 = vmatpush1.bf16.xpose.msra.mxu0 0
    %1831 = vmatprep.subr.bf16.mxu0 0
    %1832 = vmatpush1.bf16.xpose.msra.mxu0 0
    %1833 = vmatprep.subr.bf16.mxu0 0
    %1834 = vmatpush1.bf16.xpose.msra.mxu0 0
    %1835 = vmatprep.subr.bf16.mxu0 0
    %1836 = vmatpush1.bf16.xpose.msra.mxu0 %v1819
    %1837 = vmatprep.subr.bf16.mxu0 0
    %1838 = vmatpush2.bf16.xpose.msra.mxu0 0
    %1839 = vmatprep.subr.bf16.mxu0 0
    %1840 = vmatpush2.bf16.xpose.msra.mxu0 0
    %1841 = vmatprep.subr.bf16.mxu0 0
    %1842 = vmatpush2.bf16.xpose.msra.mxu0 0
    %1843 = vmatprep.subr.bf16.mxu0 0
    %1844 = vmatpush2.bf16.xpose.msra.mxu0 0
    %1845 = vmatprep.subr.bf16.mxu0 0
    %1846 = vmatpush2.bf16.xpose.msra.mxu0 0
    %1847 = vmatprep.subr.bf16.mxu0 0
    %1848 = vmatpush2.bf16.xpose.msra.mxu0 0
    %1849 = vmatprep.subr.bf16.mxu0 0
    %1850 = vmatpush2.bf16.xpose.msra.mxu0 0
    %1851 = vmatprep.subr.bf16.mxu0 0
    %1852 = vmatpush2.bf16.xpose.msra.mxu0 0
    %1853 = vmatprep.mubr.bf16.mxu0 0
    %1854 = vmatmul.mubr.bf16.gmra.mxu0 %v1816
    %v1855 = vpop.f32.mrf.mxu0
    %v1856 = vadd.f32 %v219, %v1855
    %v1857 = vpop.f32.mrf.mxu0
    %v1858 = vpop.f32.mrf.mxu0
    %v1859 = vpop.f32.mrf.mxu0
    %1860 = vdwg.mxu0
    %v1862 = vsel %vm224, %v1814, 0
    %v1865 = vsel %vm224, %v1810, 0
    %1867 = vmatprep.subr.bf16.mxu0 0
    %1868 = vmatpush1.bf16.xpose.msra.mxu0 0
    %1869 = vmatprep.subr.bf16.mxu0 0
    %1870 = vmatpush1.bf16.xpose.msra.mxu0 0
    %1871 = vmatprep.subr.bf16.mxu0 0
    %1872 = vmatpush1.bf16.xpose.msra.mxu0 0
    %1873 = vmatprep.subr.bf16.mxu0 0
    %1874 = vmatpush1.bf16.xpose.msra.mxu0 0
    %1875 = vmatprep.subr.bf16.mxu0 0
    %1876 = vmatpush1.bf16.xpose.msra.mxu0 0
    %1877 = vmatprep.subr.bf16.mxu0 0
    %1878 = vmatpush1.bf16.xpose.msra.mxu0 0
    %1879 = vmatprep.subr.bf16.mxu0 0
    %1880 = vmatpush1.bf16.xpose.msra.mxu0 0
    %1881 = vmatprep.subr.bf16.mxu0 0
    %1882 = vmatpush1.bf16.xpose.msra.mxu0 %v1865
    %1883 = vmatprep.subr.bf16.mxu0 0
    %1884 = vmatpush2.bf16.xpose.msra.mxu0 0
    %1885 = vmatprep.subr.bf16.mxu0 0
    %1886 = vmatpush2.bf16.xpose.msra.mxu0 0
    %1887 = vmatprep.subr.bf16.mxu0 0
    %1888 = vmatpush2.bf16.xpose.msra.mxu0 0
    %1889 = vmatprep.subr.bf16.mxu0 0
    %1890 = vmatpush2.bf16.xpose.msra.mxu0 0
    %1891 = vmatprep.subr.bf16.mxu0 0
    %1892 = vmatpush2.bf16.xpose.msra.mxu0 0
    %1893 = vmatprep.subr.bf16.mxu0 0
    %1894 = vmatpush2.bf16.xpose.msra.mxu0 0
    %1895 = vmatprep.subr.bf16.mxu0 0
    %1896 = vmatpush2.bf16.xpose.msra.mxu0 0
    %1897 = vmatprep.subr.bf16.mxu0 0
    %1898 = vmatpush2.bf16.xpose.msra.mxu0 0
    %1899 = vmatprep.mubr.bf16.mxu0 0
    %1900 = vmatmul.mubr.bf16.gmra.mxu0 %v1862
    %v1901 = vpop.f32.mrf.mxu0
    %v1902 = vadd.f32 %v219, %v1901
    %v1903 = vpop.f32.mrf.mxu0
    %v1904 = vpop.f32.mrf.mxu0
    %v1905 = vpop.f32.mrf.mxu0
    %1906 = vdwg.mxu0
    %v1907 = vsel %vm566, %v1856, -inf
    %1908 = vmax.xlane.f32.xlu0 %v1907
    %v1909 = vpop.xlane.xlu0 %1908
    %v1910 = vsel %vm566, %v1902, -inf
    %1911 = vmax.xlane.f32.xlu0 %v1910
    %v1912 = vpop.xlane.xlu0 %1911
    %v1913 = vsub.f32 %v1856, %v1909
    %v1914 = vsub.f32 %v1902, %v1912
    %v1915 = vmul.f32 %v1913, 1.442695
    %v1916 = vpow.pop %v1915
    %v1917 = vmul.f32 %v1914, 1.442695
    %v1918 = vpow.pop %v1917
    %v1919 = vsel %vm566, %v1916, 0.0
    %1920 = vadd.xlane.f32.xlu0 %v1919
    %v1921 = vpop.xlane.xlu0 %1920
    %v1922 = vsel %vm566, %v1918, 0.0
    %1923 = vadd.xlane.f32.xlu0 %v1922
    %v1924 = vpop.xlane.xlu0 %1923
    %v1925 = vrcp.pop %v1921
    %v1926 = vrcp.pop %v1924
    %v1927 = vmul.f32 %v1916, %v1925
    %v1928 = vmul.f32 %v1918, %v1926
    %v1929 = vmul.f32 %v1803, %v200
    %v1930 = vmul.f32 %v1806, %v200
    %v1931 = vpack.c.bf16 %v1929, %v1929
    %v1932 = vpack.c.bf16 %v1930, %v1930
    %v1933 = vpack.c.bf16 %v1927, %v1927
    %v1934 = vpack.c.bf16 %v1928, %v1928
    %v1935 = vmul.f32 %v1675, %v205
    %v1936 = vmul.f32 %v1678, %v205
    %v1937 = vpack.c.bf16 %v1935, %v1935
    %v1938 = vpack.c.bf16 %v1936, %v1936
    %v1940 = vsel %vm224, %v1937, 0
    %1942 = vmatprep.subr.bf16.mxu0 0
    %1943 = vmatpush1.bf16.xpose.msra.mxu0 0
    %1944 = vmatprep.subr.bf16.mxu0 0
    %1945 = vmatpush1.bf16.xpose.msra.mxu0 0
    %1946 = vmatprep.subr.bf16.mxu0 0
    %1947 = vmatpush1.bf16.xpose.msra.mxu0 0
    %1948 = vmatprep.subr.bf16.mxu0 0
    %1949 = vmatpush1.bf16.xpose.msra.mxu0 0
    %1950 = vmatprep.subr.bf16.mxu0 0
    %1951 = vmatpush1.bf16.xpose.msra.mxu0 0
    %1952 = vmatprep.subr.bf16.mxu0 0
    %1953 = vmatpush1.bf16.xpose.msra.mxu0 0
    %1954 = vmatprep.subr.bf16.mxu0 0
    %1955 = vmatpush1.bf16.xpose.msra.mxu0 0
    %1956 = vmatprep.subr.bf16.mxu0 0
    %1957 = vmatpush1.bf16.xpose.msra.mxu0 %v1819
    %1958 = vmatprep.subr.bf16.mxu0 0
    %1959 = vmatpush2.bf16.xpose.msra.mxu0 0
    %1960 = vmatprep.subr.bf16.mxu0 0
    %1961 = vmatpush2.bf16.xpose.msra.mxu0 0
    %1962 = vmatprep.subr.bf16.mxu0 0
    %1963 = vmatpush2.bf16.xpose.msra.mxu0 0
    %1964 = vmatprep.subr.bf16.mxu0 0
    %1965 = vmatpush2.bf16.xpose.msra.mxu0 0
    %1966 = vmatprep.subr.bf16.mxu0 0
    %1967 = vmatpush2.bf16.xpose.msra.mxu0 0
    %1968 = vmatprep.subr.bf16.mxu0 0
    %1969 = vmatpush2.bf16.xpose.msra.mxu0 0
    %1970 = vmatprep.subr.bf16.mxu0 0
    %1971 = vmatpush2.bf16.xpose.msra.mxu0 0
    %1972 = vmatprep.subr.bf16.mxu0 0
    %1973 = vmatpush2.bf16.xpose.msra.mxu0 0
    %1974 = vmatprep.mubr.bf16.mxu0 0
    %1975 = vmatmul.mubr.bf16.gmra.mxu0 %v1940
    %v1976 = vpop.f32.mrf.mxu0
    %v1977 = vadd.f32 %v219, %v1976
    %v1978 = vpop.f32.mrf.mxu0
    %v1979 = vpop.f32.mrf.mxu0
    %v1980 = vpop.f32.mrf.mxu0
    %1981 = vdwg.mxu0
    %v1983 = vsel %vm224, %v1938, 0
    %1985 = vmatprep.subr.bf16.mxu0 0
    %1986 = vmatpush1.bf16.xpose.msra.mxu0 0
    %1987 = vmatprep.subr.bf16.mxu0 0
    %1988 = vmatpush1.bf16.xpose.msra.mxu0 0
    %1989 = vmatprep.subr.bf16.mxu0 0
    %1990 = vmatpush1.bf16.xpose.msra.mxu0 0
    %1991 = vmatprep.subr.bf16.mxu0 0
    %1992 = vmatpush1.bf16.xpose.msra.mxu0 0
    %1993 = vmatprep.subr.bf16.mxu0 0
    %1994 = vmatpush1.bf16.xpose.msra.mxu0 0
    %1995 = vmatprep.subr.bf16.mxu0 0
    %1996 = vmatpush1.bf16.xpose.msra.mxu0 0
    %1997 = vmatprep.subr.bf16.mxu0 0
    %1998 = vmatpush1.bf16.xpose.msra.mxu0 0
    %1999 = vmatprep.subr.bf16.mxu0 0
    %2000 = vmatpush1.bf16.xpose.msra.mxu0 %v1865
    %2001 = vmatprep.subr.bf16.mxu0 0
    %2002 = vmatpush2.bf16.xpose.msra.mxu0 0
    %2003 = vmatprep.subr.bf16.mxu0 0
    %2004 = vmatpush2.bf16.xpose.msra.mxu0 0
    %2005 = vmatprep.subr.bf16.mxu0 0
    %2006 = vmatpush2.bf16.xpose.msra.mxu0 0
    %2007 = vmatprep.subr.bf16.mxu0 0
    %2008 = vmatpush2.bf16.xpose.msra.mxu0 0
    %2009 = vmatprep.subr.bf16.mxu0 0
    %2010 = vmatpush2.bf16.xpose.msra.mxu0 0
    %2011 = vmatprep.subr.bf16.mxu0 0
    %2012 = vmatpush2.bf16.xpose.msra.mxu0 0
    %2013 = vmatprep.subr.bf16.mxu0 0
    %2014 = vmatpush2.bf16.xpose.msra.mxu0 0
    %2015 = vmatprep.subr.bf16.mxu0 0
    %2016 = vmatpush2.bf16.xpose.msra.mxu0 0
    %2017 = vmatprep.mubr.bf16.mxu0 0
    %2018 = vmatmul.mubr.bf16.gmra.mxu0 %v1983
    %v2019 = vpop.f32.mrf.mxu0
    %v2020 = vadd.f32 %v219, %v2019
    %v2021 = vpop.f32.mrf.mxu0
    %v2022 = vpop.f32.mrf.mxu0
    %v2023 = vpop.f32.mrf.mxu0
    %2024 = vdwg.mxu0
    %v2025 = vsel %vm566, %v1977, -inf
    %2026 = vmax.xlane.f32.xlu0 %v2025
    %v2027 = vpop.xlane.xlu0 %2026
    %v2028 = vsel %vm566, %v2020, -inf
    %2029 = vmax.xlane.f32.xlu0 %v2028
    %v2030 = vpop.xlane.xlu0 %2029
    %v2031 = vsub.f32 %v1977, %v2027
    %v2032 = vsub.f32 %v2020, %v2030
    %v2033 = vmul.f32 %v2031, 1.442695
    %v2034 = vpow.pop %v2033
    %v2035 = vmul.f32 %v2032, 1.442695
    %v2036 = vpow.pop %v2035
    %v2037 = vsel %vm566, %v2034, 0.0
    %2038 = vadd.xlane.f32.xlu0 %v2037
    %v2039 = vpop.xlane.xlu0 %2038
    %v2040 = vsel %vm566, %v2036, 0.0
    %2041 = vadd.xlane.f32.xlu0 %v2040
    %v2042 = vpop.xlane.xlu0 %2041
    %v2043 = vrcp.pop %v2039
    %v2044 = vrcp.pop %v2042
    %v2045 = vmul.f32 %v2034, %v2043
    %v2046 = vmul.f32 %v2036, %v2044
    %v2047 = vmul.f32 %v1803, %v205
    %v2048 = vmul.f32 %v1806, %v205
    %v2049 = vpack.c.bf16 %v2047, %v2047
    %v2050 = vpack.c.bf16 %v2048, %v2048
    %v2051 = vpack.c.bf16 %v2045, %v2045
    %v2052 = vpack.c.bf16 %v2046, %v2046
    %v2054 = vsel %vm566, %v2051, 0
    %v2057 = vsel %vm716, %v2049, 0
    %2059 = vmatprep.subr.bf16.mxu0 0
    %2060 = vmatpush1.bf16.msra.mxu0 0
    %2061 = vmatprep.subr.bf16.mxu0 0
    %2062 = vmatpush1.bf16.msra.mxu0 0
    %2063 = vmatprep.subr.bf16.mxu0 0
    %2064 = vmatpush1.bf16.msra.mxu0 0
    %2065 = vmatprep.subr.bf16.mxu0 0
    %2066 = vmatpush1.bf16.msra.mxu0 0
    %2067 = vmatprep.subr.bf16.mxu0 0
    %2068 = vmatpush1.bf16.msra.mxu0 0
    %2069 = vmatprep.subr.bf16.mxu0 0
    %2070 = vmatpush1.bf16.msra.mxu0 0
    %2071 = vmatprep.subr.bf16.mxu0 0
    %2072 = vmatpush1.bf16.msra.mxu0 0
    %2073 = vmatprep.subr.bf16.mxu0 0
    %2074 = vmatpush1.bf16.msra.mxu0 %v2057
    %2075 = vmatprep.subr.bf16.mxu0 0
    %2076 = vmatpush2.bf16.msra.mxu0 0
    %2077 = vmatprep.subr.bf16.mxu0 0
    %2078 = vmatpush2.bf16.msra.mxu0 0
    %2079 = vmatprep.subr.bf16.mxu0 0
    %2080 = vmatpush2.bf16.msra.mxu0 0
    %2081 = vmatprep.subr.bf16.mxu0 0
    %2082 = vmatpush2.bf16.msra.mxu0 0
    %2083 = vmatprep.subr.bf16.mxu0 0
    %2084 = vmatpush2.bf16.msra.mxu0 0
    %2085 = vmatprep.subr.bf16.mxu0 0
    %2086 = vmatpush2.bf16.msra.mxu0 0
    %2087 = vmatprep.subr.bf16.mxu0 0
    %2088 = vmatpush2.bf16.msra.mxu0 0
    %2089 = vmatprep.subr.bf16.mxu0 0
    %2090 = vmatpush2.bf16.msra.mxu0 0
    %2091 = vmatprep.mubr.bf16.mxu0 0
    %2092 = vmatmul.mubr.bf16.gmra.mxu0 %v2054
    %v2093 = vpop.f32.mrf.mxu0
    %v2094 = vadd.f32 0.0, %v2093
    %v2095 = vpop.f32.mrf.mxu0
    %v2096 = vpop.f32.mrf.mxu0
    %v2097 = vpop.f32.mrf.mxu0
    %2098 = vdwg.mxu0
    %v2100 = vsel %vm566, %v2052, 0
    %v2103 = vsel %vm716, %v2050, 0
    %2105 = vmatprep.subr.bf16.mxu0 0
    %2106 = vmatpush1.bf16.msra.mxu0 0
    %2107 = vmatprep.subr.bf16.mxu0 0
    %2108 = vmatpush1.bf16.msra.mxu0 0
    %2109 = vmatprep.subr.bf16.mxu0 0
    %2110 = vmatpush1.bf16.msra.mxu0 0
    %2111 = vmatprep.subr.bf16.mxu0 0
    %2112 = vmatpush1.bf16.msra.mxu0 0
    %2113 = vmatprep.subr.bf16.mxu0 0
    %2114 = vmatpush1.bf16.msra.mxu0 0
    %2115 = vmatprep.subr.bf16.mxu0 0
    %2116 = vmatpush1.bf16.msra.mxu0 0
    %2117 = vmatprep.subr.bf16.mxu0 0
    %2118 = vmatpush1.bf16.msra.mxu0 0
    %2119 = vmatprep.subr.bf16.mxu0 0
    %2120 = vmatpush1.bf16.msra.mxu0 %v2103
    %2121 = vmatprep.subr.bf16.mxu0 0
    %2122 = vmatpush2.bf16.msra.mxu0 0
    %2123 = vmatprep.subr.bf16.mxu0 0
    %2124 = vmatpush2.bf16.msra.mxu0 0
    %2125 = vmatprep.subr.bf16.mxu0 0
    %2126 = vmatpush2.bf16.msra.mxu0 0
    %2127 = vmatprep.subr.bf16.mxu0 0
    %2128 = vmatpush2.bf16.msra.mxu0 0
    %2129 = vmatprep.subr.bf16.mxu0 0
    %2130 = vmatpush2.bf16.msra.mxu0 0
    %2131 = vmatprep.subr.bf16.mxu0 0
    %2132 = vmatpush2.bf16.msra.mxu0 0
    %2133 = vmatprep.subr.bf16.mxu0 0
    %2134 = vmatpush2.bf16.msra.mxu0 0
    %2135 = vmatprep.subr.bf16.mxu0 0
    %2136 = vmatpush2.bf16.msra.mxu0 0
    %2137 = vmatprep.mubr.bf16.mxu0 0
    %2138 = vmatmul.mubr.bf16.gmra.mxu0 %v2100
    %v2139 = vpop.f32.mrf.mxu0
    %v2140 = vadd.f32 0.0, %v2139
    %v2141 = vpop.f32.mrf.mxu0
    %v2142 = vpop.f32.mrf.mxu0
    %v2143 = vpop.f32.mrf.mxu0
    %2144 = vdwg.mxu0
    %v2146 = vsel %vm566, %v1933, 0
    %v2149 = vsel %vm716, %v1931, 0
    %2151 = vmatprep.subr.bf16.mxu0 0
    %2152 = vmatpush1.bf16.msra.mxu0 0
    %2153 = vmatprep.subr.bf16.mxu0 0
    %2154 = vmatpush1.bf16.msra.mxu0 0
    %2155 = vmatprep.subr.bf16.mxu0 0
    %2156 = vmatpush1.bf16.msra.mxu0 0
    %2157 = vmatprep.subr.bf16.mxu0 0
    %2158 = vmatpush1.bf16.msra.mxu0 0
    %2159 = vmatprep.subr.bf16.mxu0 0
    %2160 = vmatpush1.bf16.msra.mxu0 0
    %2161 = vmatprep.subr.bf16.mxu0 0
    %2162 = vmatpush1.bf16.msra.mxu0 0
    %2163 = vmatprep.subr.bf16.mxu0 0
    %2164 = vmatpush1.bf16.msra.mxu0 0
    %2165 = vmatprep.subr.bf16.mxu0 0
    %2166 = vmatpush1.bf16.msra.mxu0 %v2149
    %2167 = vmatprep.subr.bf16.mxu0 0
    %2168 = vmatpush2.bf16.msra.mxu0 0
    %2169 = vmatprep.subr.bf16.mxu0 0
    %2170 = vmatpush2.bf16.msra.mxu0 0
    %2171 = vmatprep.subr.bf16.mxu0 0
    %2172 = vmatpush2.bf16.msra.mxu0 0
    %2173 = vmatprep.subr.bf16.mxu0 0
    %2174 = vmatpush2.bf16.msra.mxu0 0
    %2175 = vmatprep.subr.bf16.mxu0 0
    %2176 = vmatpush2.bf16.msra.mxu0 0
    %2177 = vmatprep.subr.bf16.mxu0 0
    %2178 = vmatpush2.bf16.msra.mxu0 0
    %2179 = vmatprep.subr.bf16.mxu0 0
    %2180 = vmatpush2.bf16.msra.mxu0 0
    %2181 = vmatprep.subr.bf16.mxu0 0
    %2182 = vmatpush2.bf16.msra.mxu0 0
    %2183 = vmatprep.mubr.bf16.mxu0 0
    %2184 = vmatmul.mubr.bf16.gmra.mxu0 %v2146
    %v2185 = vpop.f32.mrf.mxu0
    %v2186 = vadd.f32 %v2094, %v2185
    %v2187 = vpop.f32.mrf.mxu0
    %v2188 = vpop.f32.mrf.mxu0
    %v2189 = vpop.f32.mrf.mxu0
    %2190 = vdwg.mxu0
    %v2192 = vsel %vm566, %v1934, 0
    %v2195 = vsel %vm716, %v1932, 0
    %2197 = vmatprep.subr.bf16.mxu0 0
    %2198 = vmatpush1.bf16.msra.mxu0 0
    %2199 = vmatprep.subr.bf16.mxu0 0
    %2200 = vmatpush1.bf16.msra.mxu0 0
    %2201 = vmatprep.subr.bf16.mxu0 0
    %2202 = vmatpush1.bf16.msra.mxu0 0
    %2203 = vmatprep.subr.bf16.mxu0 0
    %2204 = vmatpush1.bf16.msra.mxu0 0
    %2205 = vmatprep.subr.bf16.mxu0 0
    %2206 = vmatpush1.bf16.msra.mxu0 0
    %2207 = vmatprep.subr.bf16.mxu0 0
    %2208 = vmatpush1.bf16.msra.mxu0 0
    %2209 = vmatprep.subr.bf16.mxu0 0
    %2210 = vmatpush1.bf16.msra.mxu0 0
    %2211 = vmatprep.subr.bf16.mxu0 0
    %2212 = vmatpush1.bf16.msra.mxu0 %v2195
    %2213 = vmatprep.subr.bf16.mxu0 0
    %2214 = vmatpush2.bf16.msra.mxu0 0
    %2215 = vmatprep.subr.bf16.mxu0 0
    %2216 = vmatpush2.bf16.msra.mxu0 0
    %2217 = vmatprep.subr.bf16.mxu0 0
    %2218 = vmatpush2.bf16.msra.mxu0 0
    %2219 = vmatprep.subr.bf16.mxu0 0
    %2220 = vmatpush2.bf16.msra.mxu0 0
    %2221 = vmatprep.subr.bf16.mxu0 0
    %2222 = vmatpush2.bf16.msra.mxu0 0
    %2223 = vmatprep.subr.bf16.mxu0 0
    %2224 = vmatpush2.bf16.msra.mxu0 0
    %2225 = vmatprep.subr.bf16.mxu0 0
    %2226 = vmatpush2.bf16.msra.mxu0 0
    %2227 = vmatprep.subr.bf16.mxu0 0
    %2228 = vmatpush2.bf16.msra.mxu0 0
    %2229 = vmatprep.mubr.bf16.mxu0 0
    %2230 = vmatmul.mubr.bf16.gmra.mxu0 %v2192
    %v2231 = vpop.f32.mrf.mxu0
    %v2232 = vadd.f32 %v2140, %v2231
    %v2233 = vpop.f32.mrf.mxu0
    %v2234 = vpop.f32.mrf.mxu0
    %v2235 = vpop.f32.mrf.mxu0
    %2236 = vdwg.mxu0
    %v2237 = vmul.f32 %v1675, %v210
    %v2238 = vmul.f32 %v1678, %v210
    %v2239 = vpack.c.bf16 %v2237, %v2237
    %v2240 = vpack.c.bf16 %v2238, %v2238
    %v2242 = vsel %vm224, %v2239, 0
    %2244 = vmatprep.subr.bf16.mxu0 0
    %2245 = vmatpush1.bf16.xpose.msra.mxu0 0
    %2246 = vmatprep.subr.bf16.mxu0 0
    %2247 = vmatpush1.bf16.xpose.msra.mxu0 0
    %2248 = vmatprep.subr.bf16.mxu0 0
    %2249 = vmatpush1.bf16.xpose.msra.mxu0 0
    %2250 = vmatprep.subr.bf16.mxu0 0
    %2251 = vmatpush1.bf16.xpose.msra.mxu0 0
    %2252 = vmatprep.subr.bf16.mxu0 0
    %2253 = vmatpush1.bf16.xpose.msra.mxu0 0
    %2254 = vmatprep.subr.bf16.mxu0 0
    %2255 = vmatpush1.bf16.xpose.msra.mxu0 0
    %2256 = vmatprep.subr.bf16.mxu0 0
    %2257 = vmatpush1.bf16.xpose.msra.mxu0 0
    %2258 = vmatprep.subr.bf16.mxu0 0
    %2259 = vmatpush1.bf16.xpose.msra.mxu0 %v1819
    %2260 = vmatprep.subr.bf16.mxu0 0
    %2261 = vmatpush2.bf16.xpose.msra.mxu0 0
    %2262 = vmatprep.subr.bf16.mxu0 0
    %2263 = vmatpush2.bf16.xpose.msra.mxu0 0
    %2264 = vmatprep.subr.bf16.mxu0 0
    %2265 = vmatpush2.bf16.xpose.msra.mxu0 0
    %2266 = vmatprep.subr.bf16.mxu0 0
    %2267 = vmatpush2.bf16.xpose.msra.mxu0 0
    %2268 = vmatprep.subr.bf16.mxu0 0
    %2269 = vmatpush2.bf16.xpose.msra.mxu0 0
    %2270 = vmatprep.subr.bf16.mxu0 0
    %2271 = vmatpush2.bf16.xpose.msra.mxu0 0
    %2272 = vmatprep.subr.bf16.mxu0 0
    %2273 = vmatpush2.bf16.xpose.msra.mxu0 0
    %2274 = vmatprep.subr.bf16.mxu0 0
    %2275 = vmatpush2.bf16.xpose.msra.mxu0 0
    %2276 = vmatprep.mubr.bf16.mxu0 0
    %2277 = vmatmul.mubr.bf16.gmra.mxu0 %v2242
    %v2278 = vpop.f32.mrf.mxu0
    %v2279 = vadd.f32 %v219, %v2278
    %v2280 = vpop.f32.mrf.mxu0
    %v2281 = vpop.f32.mrf.mxu0
    %v2282 = vpop.f32.mrf.mxu0
    %2283 = vdwg.mxu0
    %v2285 = vsel %vm224, %v2240, 0
    %2287 = vmatprep.subr.bf16.mxu0 0
    %2288 = vmatpush1.bf16.xpose.msra.mxu0 0
    %2289 = vmatprep.subr.bf16.mxu0 0
    %2290 = vmatpush1.bf16.xpose.msra.mxu0 0
    %2291 = vmatprep.subr.bf16.mxu0 0
    %2292 = vmatpush1.bf16.xpose.msra.mxu0 0
    %2293 = vmatprep.subr.bf16.mxu0 0
    %2294 = vmatpush1.bf16.xpose.msra.mxu0 0
    %2295 = vmatprep.subr.bf16.mxu0 0
    %2296 = vmatpush1.bf16.xpose.msra.mxu0 0
    %2297 = vmatprep.subr.bf16.mxu0 0
    %2298 = vmatpush1.bf16.xpose.msra.mxu0 0
    %2299 = vmatprep.subr.bf16.mxu0 0
    %2300 = vmatpush1.bf16.xpose.msra.mxu0 0
    %2301 = vmatprep.subr.bf16.mxu0 0
    %2302 = vmatpush1.bf16.xpose.msra.mxu0 %v1865
    %2303 = vmatprep.subr.bf16.mxu0 0
    %2304 = vmatpush2.bf16.xpose.msra.mxu0 0
    %2305 = vmatprep.subr.bf16.mxu0 0
    %2306 = vmatpush2.bf16.xpose.msra.mxu0 0
    %2307 = vmatprep.subr.bf16.mxu0 0
    %2308 = vmatpush2.bf16.xpose.msra.mxu0 0
    %2309 = vmatprep.subr.bf16.mxu0 0
    %2310 = vmatpush2.bf16.xpose.msra.mxu0 0
    %2311 = vmatprep.subr.bf16.mxu0 0
    %2312 = vmatpush2.bf16.xpose.msra.mxu0 0
    %2313 = vmatprep.subr.bf16.mxu0 0
    %2314 = vmatpush2.bf16.xpose.msra.mxu0 0
    %2315 = vmatprep.subr.bf16.mxu0 0
    %2316 = vmatpush2.bf16.xpose.msra.mxu0 0
    %2317 = vmatprep.subr.bf16.mxu0 0
    %2318 = vmatpush2.bf16.xpose.msra.mxu0 0
    %2319 = vmatprep.mubr.bf16.mxu0 0
    %2320 = vmatmul.mubr.bf16.gmra.mxu0 %v2285
    %v2321 = vpop.f32.mrf.mxu0
    %v2322 = vadd.f32 %v219, %v2321
    %v2323 = vpop.f32.mrf.mxu0
    %v2324 = vpop.f32.mrf.mxu0
    %v2325 = vpop.f32.mrf.mxu0
    %2326 = vdwg.mxu0
    %v2327 = vsel %vm566, %v2279, -inf
    %2328 = vmax.xlane.f32.xlu0 %v2327
    %v2329 = vpop.xlane.xlu0 %2328
    %v2330 = vsel %vm566, %v2322, -inf
    %2331 = vmax.xlane.f32.xlu0 %v2330
    %v2332 = vpop.xlane.xlu0 %2331
    %v2333 = vsub.f32 %v2279, %v2329
    %v2334 = vsub.f32 %v2322, %v2332
    %v2335 = vmul.f32 %v2333, 1.442695
    %v2336 = vpow.pop %v2335
    %v2337 = vmul.f32 %v2334, 1.442695
    %v2338 = vpow.pop %v2337
    %v2339 = vsel %vm566, %v2336, 0.0
    %2340 = vadd.xlane.f32.xlu0 %v2339
    %v2341 = vpop.xlane.xlu0 %2340
    %v2342 = vsel %vm566, %v2338, 0.0
    %2343 = vadd.xlane.f32.xlu0 %v2342
    %v2344 = vpop.xlane.xlu0 %2343
    %v2345 = vrcp.pop %v2341
    %v2346 = vrcp.pop %v2344
    %v2347 = vmul.f32 %v2336, %v2345
    %v2348 = vmul.f32 %v2338, %v2346
    %v2349 = vmul.f32 %v1803, %v210
    %v2350 = vmul.f32 %v1806, %v210
    %v2351 = vpack.c.bf16 %v2349, %v2349
    %v2352 = vpack.c.bf16 %v2350, %v2350
    %v2353 = vpack.c.bf16 %v2347, %v2347
    %v2354 = vpack.c.bf16 %v2348, %v2348
    %v2356 = vsel %vm566, %v2353, 0
    %v2359 = vsel %vm716, %v2351, 0
    %2361 = vmatprep.subr.bf16.mxu0 0
    %2362 = vmatpush1.bf16.msra.mxu0 0
    %2363 = vmatprep.subr.bf16.mxu0 0
    %2364 = vmatpush1.bf16.msra.mxu0 0
    %2365 = vmatprep.subr.bf16.mxu0 0
    %2366 = vmatpush1.bf16.msra.mxu0 0
    %2367 = vmatprep.subr.bf16.mxu0 0
    %2368 = vmatpush1.bf16.msra.mxu0 0
    %2369 = vmatprep.subr.bf16.mxu0 0
    %2370 = vmatpush1.bf16.msra.mxu0 0
    %2371 = vmatprep.subr.bf16.mxu0 0
    %2372 = vmatpush1.bf16.msra.mxu0 0
    %2373 = vmatprep.subr.bf16.mxu0 0
    %2374 = vmatpush1.bf16.msra.mxu0 0
    %2375 = vmatprep.subr.bf16.mxu0 0
    %2376 = vmatpush1.bf16.msra.mxu0 %v2359
    %2377 = vmatprep.subr.bf16.mxu0 0
    %2378 = vmatpush2.bf16.msra.mxu0 0
    %2379 = vmatprep.subr.bf16.mxu0 0
    %2380 = vmatpush2.bf16.msra.mxu0 0
    %2381 = vmatprep.subr.bf16.mxu0 0
    %2382 = vmatpush2.bf16.msra.mxu0 0
    %2383 = vmatprep.subr.bf16.mxu0 0
    %2384 = vmatpush2.bf16.msra.mxu0 0
    %2385 = vmatprep.subr.bf16.mxu0 0
    %2386 = vmatpush2.bf16.msra.mxu0 0
    %2387 = vmatprep.subr.bf16.mxu0 0
    %2388 = vmatpush2.bf16.msra.mxu0 0
    %2389 = vmatprep.subr.bf16.mxu0 0
    %2390 = vmatpush2.bf16.msra.mxu0 0
    %2391 = vmatprep.subr.bf16.mxu0 0
    %2392 = vmatpush2.bf16.msra.mxu0 0
    %2393 = vmatprep.mubr.bf16.mxu0 0
    %2394 = vmatmul.mubr.bf16.gmra.mxu0 %v2356
    %v2395 = vpop.f32.mrf.mxu0
    %v2396 = vadd.f32 0.0, %v2395
    %v2397 = vpop.f32.mrf.mxu0
    %v2398 = vpop.f32.mrf.mxu0
    %v2399 = vpop.f32.mrf.mxu0
    %2400 = vdwg.mxu0
    %v2402 = vsel %vm566, %v2354, 0
    %v2405 = vsel %vm716, %v2352, 0
    %2407 = vmatprep.subr.bf16.mxu0 0
    %2408 = vmatpush1.bf16.msra.mxu0 0
    %2409 = vmatprep.subr.bf16.mxu0 0
    %2410 = vmatpush1.bf16.msra.mxu0 0
    %2411 = vmatprep.subr.bf16.mxu0 0
    %2412 = vmatpush1.bf16.msra.mxu0 0
    %2413 = vmatprep.subr.bf16.mxu0 0
    %2414 = vmatpush1.bf16.msra.mxu0 0
    %2415 = vmatprep.subr.bf16.mxu0 0
    %2416 = vmatpush1.bf16.msra.mxu0 0
    %2417 = vmatprep.subr.bf16.mxu0 0
    %2418 = vmatpush1.bf16.msra.mxu0 0
    %2419 = vmatprep.subr.bf16.mxu0 0
    %2420 = vmatpush1.bf16.msra.mxu0 0
    %2421 = vmatprep.subr.bf16.mxu0 0
    %2422 = vmatpush1.bf16.msra.mxu0 %v2405
    %2423 = vmatprep.subr.bf16.mxu0 0
    %2424 = vmatpush2.bf16.msra.mxu0 0
    %2425 = vmatprep.subr.bf16.mxu0 0
    %2426 = vmatpush2.bf16.msra.mxu0 0
    %2427 = vmatprep.subr.bf16.mxu0 0
    %2428 = vmatpush2.bf16.msra.mxu0 0
    %2429 = vmatprep.subr.bf16.mxu0 0
    %2430 = vmatpush2.bf16.msra.mxu0 0
    %2431 = vmatprep.subr.bf16.mxu0 0
    %2432 = vmatpush2.bf16.msra.mxu0 0
    %2433 = vmatprep.subr.bf16.mxu0 0
    %2434 = vmatpush2.bf16.msra.mxu0 0
    %2435 = vmatprep.subr.bf16.mxu0 0
    %2436 = vmatpush2.bf16.msra.mxu0 0
    %2437 = vmatprep.subr.bf16.mxu0 0
    %2438 = vmatpush2.bf16.msra.mxu0 0
    %2439 = vmatprep.mubr.bf16.mxu0 0
    %2440 = vmatmul.mubr.bf16.gmra.mxu0 %v2402
    %v2441 = vpop.f32.mrf.mxu0
    %v2442 = vadd.f32 0.0, %v2441
    %v2443 = vpop.f32.mrf.mxu0
    %v2444 = vpop.f32.mrf.mxu0
    %v2445 = vpop.f32.mrf.mxu0
    %2446 = vdwg.mxu0
    %v2447 = vadd.f32 %v2186, %v2396
    %v2448 = vadd.f32 %v2232, %v2442
    %v2449 = vmul.f32 %v1675, %v215
    %v2450 = vmul.f32 %v1678, %v215
    %v2451 = vpack.c.bf16 %v2449, %v2449
    %v2452 = vpack.c.bf16 %v2450, %v2450
    %v2454 = vsel %vm224, %v2451, 0
    %2456 = vmatprep.subr.bf16.mxu0 0
    %2457 = vmatpush1.bf16.xpose.msra.mxu0 0
    %2458 = vmatprep.subr.bf16.mxu0 0
    %2459 = vmatpush1.bf16.xpose.msra.mxu0 0
    %2460 = vmatprep.subr.bf16.mxu0 0
    %2461 = vmatpush1.bf16.xpose.msra.mxu0 0
    %2462 = vmatprep.subr.bf16.mxu0 0
    %2463 = vmatpush1.bf16.xpose.msra.mxu0 0
    %2464 = vmatprep.subr.bf16.mxu0 0
    %2465 = vmatpush1.bf16.xpose.msra.mxu0 0
    %2466 = vmatprep.subr.bf16.mxu0 0
    %2467 = vmatpush1.bf16.xpose.msra.mxu0 0
    %2468 = vmatprep.subr.bf16.mxu0 0
    %2469 = vmatpush1.bf16.xpose.msra.mxu0 0
    %2470 = vmatprep.subr.bf16.mxu0 0
    %2471 = vmatpush1.bf16.xpose.msra.mxu0 %v1819
    %2472 = vmatprep.subr.bf16.mxu0 0
    %2473 = vmatpush2.bf16.xpose.msra.mxu0 0
    %2474 = vmatprep.subr.bf16.mxu0 0
    %2475 = vmatpush2.bf16.xpose.msra.mxu0 0
    %2476 = vmatprep.subr.bf16.mxu0 0
    %2477 = vmatpush2.bf16.xpose.msra.mxu0 0
    %2478 = vmatprep.subr.bf16.mxu0 0
    %2479 = vmatpush2.bf16.xpose.msra.mxu0 0
    %2480 = vmatprep.subr.bf16.mxu0 0
    %2481 = vmatpush2.bf16.xpose.msra.mxu0 0
    %2482 = vmatprep.subr.bf16.mxu0 0
    %2483 = vmatpush2.bf16.xpose.msra.mxu0 0
    %2484 = vmatprep.subr.bf16.mxu0 0
    %2485 = vmatpush2.bf16.xpose.msra.mxu0 0
    %2486 = vmatprep.subr.bf16.mxu0 0
    %2487 = vmatpush2.bf16.xpose.msra.mxu0 0
    %2488 = vmatprep.mubr.bf16.mxu0 0
    %2489 = vmatmul.mubr.bf16.gmra.mxu0 %v2454
    %v2490 = vpop.f32.mrf.mxu0
    %v2491 = vadd.f32 %v219, %v2490
    %v2492 = vpop.f32.mrf.mxu0
    %v2493 = vpop.f32.mrf.mxu0
    %v2494 = vpop.f32.mrf.mxu0
    %2495 = vdwg.mxu0
    %v2497 = vsel %vm224, %v2452, 0
    %2499 = vmatprep.subr.bf16.mxu0 0
    %2500 = vmatpush1.bf16.xpose.msra.mxu0 0
    %2501 = vmatprep.subr.bf16.mxu0 0
    %2502 = vmatpush1.bf16.xpose.msra.mxu0 0
    %2503 = vmatprep.subr.bf16.mxu0 0
    %2504 = vmatpush1.bf16.xpose.msra.mxu0 0
    %2505 = vmatprep.subr.bf16.mxu0 0
    %2506 = vmatpush1.bf16.xpose.msra.mxu0 0
    %2507 = vmatprep.subr.bf16.mxu0 0
    %2508 = vmatpush1.bf16.xpose.msra.mxu0 0
    %2509 = vmatprep.subr.bf16.mxu0 0
    %2510 = vmatpush1.bf16.xpose.msra.mxu0 0
    %2511 = vmatprep.subr.bf16.mxu0 0
    %2512 = vmatpush1.bf16.xpose.msra.mxu0 0
    %2513 = vmatprep.subr.bf16.mxu0 0
    %2514 = vmatpush1.bf16.xpose.msra.mxu0 %v1865
    %2515 = vmatprep.subr.bf16.mxu0 0
    %2516 = vmatpush2.bf16.xpose.msra.mxu0 0
    %2517 = vmatprep.subr.bf16.mxu0 0
    %2518 = vmatpush2.bf16.xpose.msra.mxu0 0
    %2519 = vmatprep.subr.bf16.mxu0 0
    %2520 = vmatpush2.bf16.xpose.msra.mxu0 0
    %2521 = vmatprep.subr.bf16.mxu0 0
    %2522 = vmatpush2.bf16.xpose.msra.mxu0 0
    %2523 = vmatprep.subr.bf16.mxu0 0
    %2524 = vmatpush2.bf16.xpose.msra.mxu0 0
    %2525 = vmatprep.subr.bf16.mxu0 0
    %2526 = vmatpush2.bf16.xpose.msra.mxu0 0
    %2527 = vmatprep.subr.bf16.mxu0 0
    %2528 = vmatpush2.bf16.xpose.msra.mxu0 0
    %2529 = vmatprep.subr.bf16.mxu0 0
    %2530 = vmatpush2.bf16.xpose.msra.mxu0 0
    %2531 = vmatprep.mubr.bf16.mxu0 0
    %2532 = vmatmul.mubr.bf16.gmra.mxu0 %v2497
    %v2533 = vpop.f32.mrf.mxu0
    %v2534 = vadd.f32 %v219, %v2533
    %v2535 = vpop.f32.mrf.mxu0
    %v2536 = vpop.f32.mrf.mxu0
    %v2537 = vpop.f32.mrf.mxu0
    %2538 = vdwg.mxu0
    %v2539 = vsel %vm566, %v2491, -inf
    %2540 = vmax.xlane.f32.xlu0 %v2539
    %v2541 = vpop.xlane.xlu0 %2540
    %v2542 = vsel %vm566, %v2534, -inf
    %2543 = vmax.xlane.f32.xlu0 %v2542
    %v2544 = vpop.xlane.xlu0 %2543
    %v2545 = vsub.f32 %v2491, %v2541
    %v2546 = vsub.f32 %v2534, %v2544
    %v2547 = vmul.f32 %v2545, 1.442695
    %v2548 = vpow.pop %v2547
    %v2549 = vmul.f32 %v2546, 1.442695
    %v2550 = vpow.pop %v2549
    %v2551 = vsel %vm566, %v2548, 0.0
    %2552 = vadd.xlane.f32.xlu0 %v2551
    %v2553 = vpop.xlane.xlu0 %2552
    %v2554 = vsel %vm566, %v2550, 0.0
    %2555 = vadd.xlane.f32.xlu0 %v2554
    %v2556 = vpop.xlane.xlu0 %2555
    %v2557 = vrcp.pop %v2553
    %v2558 = vrcp.pop %v2556
    %v2559 = vmul.f32 %v2548, %v2557
    %v2560 = vmul.f32 %v2550, %v2558
    %v2561 = vmul.f32 %v1803, %v215
    %v2562 = vmul.f32 %v1806, %v215
    %v2563 = vpack.c.bf16 %v2561, %v2561
    %v2564 = vpack.c.bf16 %v2562, %v2562
    %v2565 = vpack.c.bf16 %v2559, %v2559
    %v2566 = vpack.c.bf16 %v2560, %v2560
    %v2568 = vsel %vm566, %v2565, 0
    %v2571 = vsel %vm716, %v2563, 0
    %2573 = vmatprep.subr.bf16.mxu0 0
    %2574 = vmatpush1.bf16.msra.mxu0 0
    %2575 = vmatprep.subr.bf16.mxu0 0
    %2576 = vmatpush1.bf16.msra.mxu0 0
    %2577 = vmatprep.subr.bf16.mxu0 0
    %2578 = vmatpush1.bf16.msra.mxu0 0
    %2579 = vmatprep.subr.bf16.mxu0 0
    %2580 = vmatpush1.bf16.msra.mxu0 0
    %2581 = vmatprep.subr.bf16.mxu0 0
    %2582 = vmatpush1.bf16.msra.mxu0 0
    %2583 = vmatprep.subr.bf16.mxu0 0
    %2584 = vmatpush1.bf16.msra.mxu0 0
    %2585 = vmatprep.subr.bf16.mxu0 0
    %2586 = vmatpush1.bf16.msra.mxu0 0
    %2587 = vmatprep.subr.bf16.mxu0 0
    %2588 = vmatpush1.bf16.msra.mxu0 %v2571
    %2589 = vmatprep.subr.bf16.mxu0 0
    %2590 = vmatpush2.bf16.msra.mxu0 0
    %2591 = vmatprep.subr.bf16.mxu0 0
    %2592 = vmatpush2.bf16.msra.mxu0 0
    %2593 = vmatprep.subr.bf16.mxu0 0
    %2594 = vmatpush2.bf16.msra.mxu0 0
    %2595 = vmatprep.subr.bf16.mxu0 0
    %2596 = vmatpush2.bf16.msra.mxu0 0
    %2597 = vmatprep.subr.bf16.mxu0 0
    %2598 = vmatpush2.bf16.msra.mxu0 0
    %2599 = vmatprep.subr.bf16.mxu0 0
    %2600 = vmatpush2.bf16.msra.mxu0 0
    %2601 = vmatprep.subr.bf16.mxu0 0
    %2602 = vmatpush2.bf16.msra.mxu0 0
    %2603 = vmatprep.subr.bf16.mxu0 0
    %2604 = vmatpush2.bf16.msra.mxu0 0
    %2605 = vmatprep.mubr.bf16.mxu0 0
    %2606 = vmatmul.mubr.bf16.gmra.mxu0 %v2568
    %v2607 = vpop.f32.mrf.mxu0
    %v2608 = vadd.f32 0.0, %v2607
    %v2609 = vpop.f32.mrf.mxu0
    %v2610 = vpop.f32.mrf.mxu0
    %v2611 = vpop.f32.mrf.mxu0
    %2612 = vdwg.mxu0
    %v2614 = vsel %vm566, %v2566, 0
    %v2617 = vsel %vm716, %v2564, 0
    %2619 = vmatprep.subr.bf16.mxu0 0
    %2620 = vmatpush1.bf16.msra.mxu0 0
    %2621 = vmatprep.subr.bf16.mxu0 0
    %2622 = vmatpush1.bf16.msra.mxu0 0
    %2623 = vmatprep.subr.bf16.mxu0 0
    %2624 = vmatpush1.bf16.msra.mxu0 0
    %2625 = vmatprep.subr.bf16.mxu0 0
    %2626 = vmatpush1.bf16.msra.mxu0 0
    %2627 = vmatprep.subr.bf16.mxu0 0
    %2628 = vmatpush1.bf16.msra.mxu0 0
    %2629 = vmatprep.subr.bf16.mxu0 0
    %2630 = vmatpush1.bf16.msra.mxu0 0
    %2631 = vmatprep.subr.bf16.mxu0 0
    %2632 = vmatpush1.bf16.msra.mxu0 0
    %2633 = vmatprep.subr.bf16.mxu0 0
    %2634 = vmatpush1.bf16.msra.mxu0 %v2617
    %2635 = vmatprep.subr.bf16.mxu0 0
    %2636 = vmatpush2.bf16.msra.mxu0 0
    %2637 = vmatprep.subr.bf16.mxu0 0
    %2638 = vmatpush2.bf16.msra.mxu0 0
    %2639 = vmatprep.subr.bf16.mxu0 0
    %2640 = vmatpush2.bf16.msra.mxu0 0
    %2641 = vmatprep.subr.bf16.mxu0 0
    %2642 = vmatpush2.bf16.msra.mxu0 0
    %2643 = vmatprep.subr.bf16.mxu0 0
    %2644 = vmatpush2.bf16.msra.mxu0 0
    %2645 = vmatprep.subr.bf16.mxu0 0
    %2646 = vmatpush2.bf16.msra.mxu0 0
    %2647 = vmatprep.subr.bf16.mxu0 0
    %2648 = vmatpush2.bf16.msra.mxu0 0
    %2649 = vmatprep.subr.bf16.mxu0 0
    %2650 = vmatpush2.bf16.msra.mxu0 0
    %2651 = vmatprep.mubr.bf16.mxu0 0
    %2652 = vmatmul.mubr.bf16.gmra.mxu0 %v2614
    %v2653 = vpop.f32.mrf.mxu0
    %v2654 = vadd.f32 0.0, %v2653
    %v2655 = vpop.f32.mrf.mxu0
    %v2656 = vpop.f32.mrf.mxu0
    %v2657 = vpop.f32.mrf.mxu0
    %2658 = vdwg.mxu0
    %v2659 = vadd.f32 %v2447, %v2608
    %v2660 = vadd.f32 %v2448, %v2654
    %v2661 = vadd.f32 %v1563, %v2659
    %v2662 = vadd.f32 %v1564, %v2660
    %v2663 = vld [vmem:[%s47] sm:$0x1]
    %v2664 = vld [vmem:[%s49] sm:$0x1]
    %v2665 = vsel %vm224, %v2661, 0.0
    %2666 = vadd.xlane.f32.xlu0 %v2665
    %v2667 = vpop.xlane.xlu0 %2666
    %v2668 = vsel %vm224, %v2662, 0.0
    %2669 = vadd.xlane.f32.xlu0 %v2668
    %v2670 = vpop.xlane.xlu0 %2669
    %v2671 = vmul.f32 %v2667, %v231
    %v2672 = vmul.f32 %v2670, %v231
    %v2673 = vmul.f32 %v2661, %v2661
    %v2674 = vmul.f32 %v2662, %v2662
    %v2675 = vsel %vm224, %v2673, 0.0
    %2676 = vadd.xlane.f32.xlu0 %v2675
    %v2677 = vpop.xlane.xlu0 %2676
    %v2678 = vsel %vm224, %v2674, 0.0
    %2679 = vadd.xlane.f32.xlu0 %v2678
    %v2680 = vpop.xlane.xlu0 %2679
    %v2681 = vmul.f32 %v2677, %v231
    %v2682 = vmul.f32 %v2680, %v231
    %v2683 = vmul.f32 %v2671, %v2671
    %v2684 = vmul.f32 %v2672, %v2672
    %v2685 = vsub.f32 %v2681, %v2683
    %v2686 = vsub.f32 %v2682, %v2684
    %v2687 = vsub.f32 %v2661, %v2671
    %v2688 = vsub.f32 %v2662, %v2672
    %v2689 = vadd.f32 %v2685, 1e-05
    %v2690 = vadd.f32 %v2686, 1e-05
    %v2691 = vrsqrt.pop %v2689
    %v2692 = vrsqrt.pop %v2690
    %v2693 = vmul.f32 %v2687, %v2691
    %v2694 = vmul.f32 %v2688, %v2692
    %v2696 = vlaneseq
    %v2697 = vshrl.u32 %v2696, 7
    %v2698 = vsub.s32 0, %v2697
    %v2699 = vrot.slane %v2663, %v2698
    %v2701 = vmul.f32 %v2693, %v2699
    %v2702 = vmul.f32 %v2694, %v2699
    %v2704 = vlaneseq
    %v2705 = vshrl.u32 %v2704, 7
    %v2706 = vsub.s32 0, %v2705
    %v2707 = vrot.slane %v2664, %v2706
    %v2709 = vadd.f32 %v2701, %v2707
    %v2710 = vadd.f32 %v2702, %v2707
    %v2711 = vpack.c.bf16 %v2710, %v2709
    %v2712 = vld [vmem:[%s51] sm:$0xf]
    %v2713 = vld [vmem:[%s51 + $0x4] sm:$0xf]
    %v2714 = vld [vmem:[%s51 + $0x8] sm:$0xf]
    %v2715 = vld [vmem:[%s51 + $0xc] sm:$0xf]
    %v2716 = vld [vmem:[%s53] sm:$0x1]
    %v2718 = vlaneseq
    %v2719 = vshrl.u32 %v2718, 7
    %v2720 = vsub.s32 0, %v2719
    %v2721 = vrot.slane %v2716, %v2720
    %v2727 = vunpack.c.l.b16 %v2712
    %v2728 = vunpack.c.l.b16 %v2713
    %v2729 = vunpack.c.l.b16 %v2714
    %v2730 = vunpack.c.l.b16 %v2715
    %v2731 = vpack.c.b16 %v2728, %v2727
    %v2732 = vpack.c.b16 %v2730, %v2729
    %v2736 = vsel %vm224, %v2711, 0
    %2738 = vmatprep.subr.bf16.mxu0 0
    %2739 = vmatpush1.bf16.msra.mxu0 0
    %2740 = vmatprep.subr.bf16.mxu0 0
    %2741 = vmatpush1.bf16.msra.mxu0 0
    %2742 = vmatprep.subr.bf16.mxu0 0
    %2743 = vmatpush1.bf16.msra.mxu0 0
    %2744 = vmatprep.subr.bf16.mxu0 0
    %2745 = vmatpush1.bf16.msra.mxu0 0
    %2746 = vmatprep.subr.bf16.mxu0 0
    %2747 = vmatpush1.bf16.msra.mxu0 0
    %2748 = vmatprep.subr.bf16.mxu0 0
    %2749 = vmatpush1.bf16.msra.mxu0 0
    %2750 = vmatprep.subr.bf16.mxu0 0
    %2751 = vmatpush1.bf16.msra.mxu0 %v2732
    %2752 = vmatprep.subr.bf16.mxu0 0
    %2753 = vmatpush1.bf16.msra.mxu0 %v2731
    %2754 = vmatprep.subr.bf16.mxu0 0
    %2755 = vmatpush2.bf16.msra.mxu0 0
    %2756 = vmatprep.subr.bf16.mxu0 0
    %2757 = vmatpush2.bf16.msra.mxu0 0
    %2758 = vmatprep.subr.bf16.mxu0 0
    %2759 = vmatpush2.bf16.msra.mxu0 0
    %2760 = vmatprep.subr.bf16.mxu0 0
    %2761 = vmatpush2.bf16.msra.mxu0 0
    %2762 = vmatprep.subr.bf16.mxu0 0
    %2763 = vmatpush2.bf16.msra.mxu0 0
    %2764 = vmatprep.subr.bf16.mxu0 0
    %2765 = vmatpush2.bf16.msra.mxu0 0
    %2766 = vmatprep.subr.bf16.mxu0 0
    %2767 = vmatpush2.bf16.msra.mxu0 0
    %2768 = vmatprep.subr.bf16.mxu0 0
    %2769 = vmatpush2.bf16.msra.mxu0 0
    %2770 = vmatprep.mubr.bf16.mxu0 0
    %2771 = vmatmul.mubr.bf16.gmra.mxu0 %v2736
    %v2772 = vpop.f32.mrf.mxu0
    %v2773 = vadd.f32 %v2721, %v2772
    %v2774 = vpop.f32.mrf.mxu0
    %v2775 = vpop.f32.mrf.mxu0
    %v2776 = vadd.f32 %v2721, %v2775
    %v2777 = vpop.f32.mrf.mxu0
    %2778 = vdwg.mxu0
    %v2779 = vmul.f32 %v2773, 0.5
    %v2780 = vmul.f32 %v2776, 0.5
    %v2781 = vmul.f32 %v2773, 0.70710677
    %v2782 = vmul.f32 %v2776, 0.70710677
    %v2783 = verf.f32.pop %v2781
    %v2784 = verf.f32.pop %v2782
    %v2785 = vadd.f32 %v2783, 1.0
    %v2786 = vadd.f32 %v2784, 1.0
    %v2787 = vmul.f32 %v2779, %v2785
    %v2788 = vmul.f32 %v2780, %v2786
    %v2789 = vpack.c.bf16 %v2788, %v2787
    %v2790 = vld [vmem:[%s55] sm:$0xf]
    %v2791 = vld [vmem:[%s55 + $0x4] sm:$0xf]
    %v2792 = vld [vmem:[%s55 + $0x8] sm:$0xf]
    %v2793 = vld [vmem:[%s55 + $0xc] sm:$0xf]
    %v2794 = vld [vmem:[%s55 + $0x10] sm:$0xf]
    %v2795 = vld [vmem:[%s55 + $0x14] sm:$0xf]
    %v2796 = vld [vmem:[%s55 + $0x18] sm:$0xf]
    %v2797 = vld [vmem:[%s55 + $0x1c] sm:$0xf]
    %v2798 = vld [vmem:[%s55 + $0x20] sm:$0xf]
    %v2799 = vld [vmem:[%s55 + $0x24] sm:$0xf]
    %v2800 = vld [vmem:[%s55 + $0x28] sm:$0xf]
    %v2801 = vld [vmem:[%s55 + $0x2c] sm:$0xf]
    %v2802 = vld [vmem:[%s55 + $0x30] sm:$0xf]
    %v2803 = vld [vmem:[%s55 + $0x34] sm:$0xf]
    %v2804 = vld [vmem:[%s55 + $0x38] sm:$0xf]
    %v2805 = vld [vmem:[%s55 + $0x3c] sm:$0xf]
    %v2806 = vld [vmem:[%s57] sm:$0x1]
    %v2808 = vlaneseq
    %v2809 = vshrl.u32 %v2808, 7
    %v2810 = vsub.s32 0, %v2809
    %v2811 = vrot.slane %v2806, %v2810
    %v2829 = vunpack.c.l.b16 %v2790
    %v2830 = vunpack.c.l.b16 %v2791
    %v2831 = vunpack.c.l.b16 %v2792
    %v2832 = vunpack.c.l.b16 %v2793
    %v2833 = vunpack.c.l.b16 %v2794
    %v2834 = vunpack.c.l.b16 %v2795
    %v2835 = vunpack.c.l.b16 %v2796
    %v2836 = vunpack.c.l.b16 %v2797
    %v2837 = vunpack.c.l.b16 %v2798
    %v2838 = vunpack.c.l.b16 %v2799
    %v2839 = vunpack.c.l.b16 %v2800
    %v2840 = vunpack.c.l.b16 %v2801
    %v2841 = vunpack.c.l.b16 %v2802
    %v2842 = vunpack.c.l.b16 %v2803
    %v2843 = vunpack.c.l.b16 %v2804
    %v2844 = vunpack.c.l.b16 %v2805
    %v2845 = vpack.c.b16 %v2830, %v2829
    %v2846 = vpack.c.b16 %v2832, %v2831
    %v2847 = vpack.c.b16 %v2834, %v2833
    %v2848 = vpack.c.b16 %v2836, %v2835
    %v2849 = vpack.c.b16 %v2838, %v2837
    %v2850 = vpack.c.b16 %v2840, %v2839
    %v2851 = vpack.c.b16 %v2842, %v2841
    %v2852 = vpack.c.b16 %v2844, %v2843
    %2861 = vmatprep.subr.bf16.mxu0 0
    %2862 = vmatpush1.bf16.msra.mxu0 %v2852
    %2863 = vmatprep.subr.bf16.mxu0 0
    %2864 = vmatpush1.bf16.msra.mxu0 %v2851
    %2865 = vmatprep.subr.bf16.mxu0 0
    %2866 = vmatpush1.bf16.msra.mxu0 %v2850
    %2867 = vmatprep.subr.bf16.mxu0 0
    %2868 = vmatpush1.bf16.msra.mxu0 %v2849
    %2869 = vmatprep.subr.bf16.mxu0 0
    %2870 = vmatpush1.bf16.msra.mxu0 %v2848
    %2871 = vmatprep.subr.bf16.mxu0 0
    %2872 = vmatpush1.bf16.msra.mxu0 %v2847
    %2873 = vmatprep.subr.bf16.mxu0 0
    %2874 = vmatpush1.bf16.msra.mxu0 %v2846
    %2875 = vmatprep.subr.bf16.mxu0 0
    %2876 = vmatpush1.bf16.msra.mxu0 %v2845
    %2877 = vmatprep.subr.bf16.mxu0 0
    %2878 = vmatpush2.bf16.msra.mxu0 0
    %2879 = vmatprep.subr.bf16.mxu0 0
    %2880 = vmatpush2.bf16.msra.mxu0 0
    %2881 = vmatprep.subr.bf16.mxu0 0
    %2882 = vmatpush2.bf16.msra.mxu0 0
    %2883 = vmatprep.subr.bf16.mxu0 0
    %2884 = vmatpush2.bf16.msra.mxu0 0
    %2885 = vmatprep.subr.bf16.mxu0 0
    %2886 = vmatpush2.bf16.msra.mxu0 0
    %2887 = vmatprep.subr.bf16.mxu0 0
    %2888 = vmatpush2.bf16.msra.mxu0 0
    %2889 = vmatprep.subr.bf16.mxu0 0
    %2890 = vmatpush2.bf16.msra.mxu0 0
    %2891 = vmatprep.subr.bf16.mxu0 0
    %2892 = vmatpush2.bf16.msra.mxu0 0
    %2893 = vmatprep.mubr.bf16.mxu0 0
    %2894 = vmatmul.mubr.bf16.gmra.mxu0 %v2789
    %v2895 = vpop.f32.mrf.mxu0
    %v2896 = vadd.f32 %v2811, %v2895
    %v2897 = vpop.f32.mrf.mxu0
    %v2898 = vpop.f32.mrf.mxu0
    %v2899 = vadd.f32 %v2811, %v2898
    %v2900 = vpop.f32.mrf.mxu0
    %2901 = vdwg.mxu0
    %v2902 = vadd.f32 %v2661, %v2896
    %v2903 = vadd.f32 %v2662, %v2899
    %v2904 = vpack.c.bf16 %v2903, %v2902
    %v2905 = vld [vmem:[%s59] sm:$0xf]
    %v2906 = vld [vmem:[%s59 + $0x4] sm:$0xf]
    %v2907 = vld [vmem:[%s59 + $0x8] sm:$0xf]
    %v2908 = vld [vmem:[%s59 + $0xc] sm:$0xf]
    %v2913 = vunpack.c.l.b16 %v2905
    %v2914 = vunpack.c.l.b16 %v2906
    %v2915 = vunpack.c.l.b16 %v2907
    %v2916 = vunpack.c.l.b16 %v2908
    %v2917 = vpack.c.b16 %v2914, %v2913
    %v2918 = vpack.c.b16 %v2916, %v2915
    %v2922 = vsel %vm224, %v2904, 0
    %2924 = vmatprep.subr.bf16.mxu0 0
    %2925 = vmatpush1.bf16.msra.mxu0 0
    %2926 = vmatprep.subr.bf16.mxu0 0
    %2927 = vmatpush1.bf16.msra.mxu0 0
    %2928 = vmatprep.subr.bf16.mxu0 0
    %2929 = vmatpush1.bf16.msra.mxu0 0
    %2930 = vmatprep.subr.bf16.mxu0 0
    %2931 = vmatpush1.bf16.msra.mxu0 0
    %2932 = vmatprep.subr.bf16.mxu0 0
    %2933 = vmatpush1.bf16.msra.mxu0 0
    %2934 = vmatprep.subr.bf16.mxu0 0
    %2935 = vmatpush1.bf16.msra.mxu0 0
    %2936 = vmatprep.subr.bf16.mxu0 0
    %2937 = vmatpush1.bf16.msra.mxu0 %v2918
    %2938 = vmatprep.subr.bf16.mxu0 0
    %2939 = vmatpush1.bf16.msra.mxu0 %v2917
    %2940 = vmatprep.subr.bf16.mxu0 0
    %2941 = vmatpush2.bf16.msra.mxu0 0
    %2942 = vmatprep.subr.bf16.mxu0 0
    %2943 = vmatpush2.bf16.msra.mxu0 0
    %2944 = vmatprep.subr.bf16.mxu0 0
    %2945 = vmatpush2.bf16.msra.mxu0 0
    %2946 = vmatprep.subr.bf16.mxu0 0
    %2947 = vmatpush2.bf16.msra.mxu0 0
    %2948 = vmatprep.subr.bf16.mxu0 0
    %2949 = vmatpush2.bf16.msra.mxu0 0
    %2950 = vmatprep.subr.bf16.mxu0 0
    %2951 = vmatpush2.bf16.msra.mxu0 0
    %2952 = vmatprep.subr.bf16.mxu0 0
    %2953 = vmatpush2.bf16.msra.mxu0 0
    %2954 = vmatprep.subr.bf16.mxu0 0
    %2955 = vmatpush2.bf16.msra.mxu0 0
    %2956 = vmatprep.mubr.bf16.mxu0 0
    %2957 = vmatmul.mubr.bf16.gmra.mxu0 %v2922
    %v2958 = vpop.f32.mrf.mxu0
    %v2959 = vadd.f32 0.0, %v2958
    %v2960 = vpop.f32.mrf.mxu0
    %v2961 = vpop.f32.mrf.mxu0
    %v2962 = vadd.f32 0.0, %v2961
    %v2963 = vpop.f32.mrf.mxu0
    %2964 = vdwg.mxu0
    %2965 = vst [vmem:[#allocation11] sm:$0xff] %v2959
    %2966 = vst [vmem:[#allocation11 + $0x8] sm:$0xff] %v2962
    %v2967 = vld [vmem:[%s61] sm:$0xff]
    %v2968 = vld [vmem:[%s61 + $0x8] sm:$0xff]
    %2969 = vmax.xlane.f32.xlu0 %v2959
    %v2970 = vpop.xlane.xlu0 %2969
    %2971 = vmax.xlane.f32.xlu0 %v2962
    %v2972 = vpop.xlane.xlu0 %2971
    %v2973 = vsub.f32 %v2959, %v2970
    %v2974 = vsub.f32 %v2962, %v2972
    %v2975 = vmul.f32 %v2973, 1.442695
    %v2976 = vpow.pop %v2975
    %v2977 = vmul.f32 %v2974, 1.442695
    %v2978 = vpow.pop %v2977
    %2979 = vadd.xlane.f32.xlu0 %v2976
    %v2980 = vpop.xlane.xlu0 %2979
    %2981 = vadd.xlane.f32.xlu0 %v2978
    %v2982 = vpop.xlane.xlu0 %2981
    %v2983 = vlog2.pop %v2980
    %v2984 = vmul.f32 %v2983, 0.6931472
    %v2985 = vlog2.pop %v2982
    %v2986 = vmul.f32 %v2985, 0.6931472
    %v2987 = vadd.f32 %v2984, %v2970
    %v2988 = vadd.f32 %v2986, %v2972
    %2989 = vset.pattern.permute.xlu0 0
    %2990 = vperm.xlu0 %2989, %v2967
    %v2991 = vpop.permute.xlu0 %2990
    %2992 = vset.pattern.permute.xlu0 0
    %2993 = vperm.xlu0 %2992, %v2968
    %v2994 = vpop.permute.xlu0 %2993
    %vm2995 = vcmp.eq.s32.totalorder %v195, %v2991
    %vm2996 = vcmp.eq.s32.totalorder %v195, %v2994
    %v2997 = vsel %vm2995, 1, 0
    %v2998 = vsel %vm2996, 1, 0
    %v2999 = vcvt.s32.f32 %v2997
    %v3000 = vcvt.s32.f32 %v2998
    %v3001 = vmul.f32 %v2959, %v2999
    %v3002 = vmul.f32 %v2962, %v3000
    %3003 = vadd.xlane.f32.xlu0 %v3001
    %v3004 = vpop.xlane.xlu0 %3003
    %3005 = vadd.xlane.f32.xlu0 %v3002
    %v3006 = vpop.xlane.xlu0 %3005
    %v3007 = vsub.f32 %v2987, %v3004
    %v3008 = vsub.f32 %v2988, %v3006
    %vm3009 = vcmask 7168
    %v3010 = vsel %vm3009, %v3007, 0.0
    %v3011 = vsel %vm3009, %v3008, 0.0
    %v3012 = vadd.f32 %v3010, %v3011
    %3013 = vadd.xlane.f32.xlu0 %v3012
    %v3014 = vpop.xlane.xlu0 %3013
    %v3015 = vrot.slane %v3014, 4
    %v3016 = vadd.f32 %v3014, %v3015
    %v3017 = vrot.slane %v3016, 2
    %v3018 = vadd.f32 %v3016, %v3017
    %v3019 = vrot.slane %v3018, 1
    %v3020 = vadd.f32 %v3018, %v3019
    %s3021 = vtos %v3020
    %v3022 = vrcp.pop 16.0
    %s3023 = vtos %v3022
    %s3024 = smul.f32 %s3021, %s3023
    %v3025 = vstv %s3024
    %vm3026 = vcmask 0
    %3027 = vst.msk [vmem:[#allocation12] sm:$0x1] %vm3026, %v3025
    // Predicated region
    $region146: #{tpu_custom_call.1} parent=1 // pred_check
      _
    $region147: #{tpu_custom_call.1} parent=1 // pred_check_branch
      %3029 = sbr.rel (0) target = $region149
    $region148: #{tpu_custom_call.1} parent=1 // pred_region
      %s3031 = ssub.s32 256, 256
      %3032 = vsyncadd [#allocation4], %s3031
      %s3033 = sshll.u32 [#allocation11], 4
      %s3034 = int_to_ptr.vmem [resolvable:$true] %s3033
      %3039 = dma.vmem_to_hbm [thread:$0]  %s3034, 256, %s63, [#allocation4], 128, 128, 8
    $region149: #{tpu_custom_call.1} parent=1 // pred_fallthru
      _
    // Predicated region
    $region150: #{tpu_custom_call.1} parent=1 // pred_check
      _
    $region151: #{tpu_custom_call.1} parent=1 // pred_check_branch
      %3041 = sbr.rel (0) target = $region153
    $region152: #{tpu_custom_call.1} parent=1 // pred_region
      %s3043 = ssub.s32 16, 16
      %3044 = vsyncadd [#allocation13], %s3043
      %s3046 = sshll.u32 [#allocation12], 4
      %s3047 = int_to_ptr.vmem [resolvable:$true] %s3046
      %3049 = dma.vmem_to_hbm [thread:$0]  %s3047, 16, %s65, [#allocation13]
    $region153: #{tpu_custom_call.1} parent=1 // pred_fallthru
      _
    // Predicated region
    $region154: #{tpu_custom_call.1} parent=1 // pred_check
      _
    $region155: #{tpu_custom_call.1} parent=1 // pred_check_branch
      %3051 = sbr.rel (0) target = $region157
    $region156: #{tpu_custom_call.1} parent=1 // pred_region
      %3052 = dma.done [#allocation4], 256
    $region157: #{tpu_custom_call.1} parent=1 // pred_fallthru
      _
    // Predicated region
    $region158: #{tpu_custom_call.1} parent=1 // pred_check
      _
    $region159: #{tpu_custom_call.1} parent=1 // pred_check_branch
      %3054 = sbr.rel (0) target = $region161
    $region160: #{tpu_custom_call.1} parent=1 // pred_region
      %3055 = dma.done [#allocation13], 16
    $region161: #{tpu_custom_call.1} parent=1 // pred_fallthru
      _
    %3056 = vsyncpa [#allocation3], 1
    %3057 = vsyncpa [#allocation6], 1
    %3058 = vsyncpa [#allocation9], 1
    %3059 = vsyncpa [#allocation4], 1
    %3060 = vsyncpa [#allocation13], 1

</llo_original>
